<compile_context>
chip_gen: v7x
topology: tpu7x:2x2x1
jax: 0.10.0
libtpu: 0.0.40
codegen_flags: <defaults>
</compile_context>

<pallas_src>
import functools

import numpy as np
import jax
import jax.numpy as jnp
from jax.experimental import pallas as pl
from jax.experimental.pallas import tpu as pltpu


# ----------------------------------------------------------------------------
# Fused kernel: one batch tile (B samples) per grid step, whole net in VMEM.
# ----------------------------------------------------------------------------
def _lenet_kernel(lhs1_ref, r1_ref, b1_ref, r2_ref, b2_ref,
                  fw1_ref, fb1_ref, fw2_ref, fb2_ref, fw3_ref, fb3_ref,
                  out_ref):
    f32, bf16 = jnp.float32, jnp.bfloat16
    br = lhs1_ref.shape[0]          # B * 32 (32 row-slots per sample)
    b = br // 32                    # samples in this tile

    # ---- conv1 as ONE banded matmul -----------------------------------------
    # lhs1 row (s, y): image rows y..y+4 flattened as (kh, w, cin) -> 480 cols.
    # r1 col (bb, j, c): conv1 output at x = 2*j + bb, channel c.
    o1 = jnp.dot(lhs1_ref[...], r1_ref[...],
                 preferred_element_type=f32)               # (br, 168)
    ox = jnp.maximum(o1[:, :84], o1[:, 84:168])            # max over x-phase
    oxp = jnp.concatenate([ox, jnp.zeros((8, 84), f32)], axis=0)
    oy = jnp.maximum(ox, oxp[1:br + 1])                    # max over y-phase
    p1 = jnp.maximum(oy + b1_ref[...], 0.0).astype(bf16)   # pooled1 (br, 84)
    # pooled1[s, i, j, c] == p1[s*32 + 2*i, j*6 + c]       (i in [0, 14))

    # ---- conv2: LHS = 5 row-shifted copies of pooled1, ONE banded matmul ----
    p1p = jnp.concatenate([p1, jnp.zeros((8, 84), bf16)], axis=0)
    lhs2 = jnp.concatenate(
        [p1p[2 * kh:2 * kh + br, :] for kh in range(5)], axis=-1)   # (br, 420)
    o2 = jnp.dot(lhs2, r2_ref[...], preferred_element_type=f32)     # (br, 160)
    ox2 = jnp.maximum(o2[:, :80], o2[:, 80:160])           # max over x-phase
    ox2p = jnp.concatenate([ox2, jnp.zeros((8, 80), f32)], axis=0)
    oy2 = jnp.maximum(ox2, ox2p[2:br + 2])                 # max over y-phase
    p2 = jnp.maximum(oy2 + b2_ref[...], 0.0).astype(bf16)  # (br, 80)
    # pooled2[s, i2, j2, co] == p2[s*32 + 4*i2, j2*16 + co]  (i2 in [0, 5))

    # ---- flatten + fc1: pick the 5 pooled rows/sample via 0/1 matmuls -------
    rows = jax.lax.broadcasted_iota(jnp.int32, (b, br), 0)   # sample index
    cols = jax.lax.broadcasted_iota(jnp.int32, (b, br), 1)   # p2 row index
    h1 = fb1_ref[...]                                        # (1, 120)
    for i2 in range(5):
        sel = (cols == rows * 32 + 4 * i2).astype(bf16)      # (b, br) 0/1
        li = jnp.dot(sel, p2, preferred_element_type=f32)    # exact row pick
        h1 = h1 + jnp.dot(li.astype(bf16),
                          fw1_ref[i2 * 80:(i2 + 1) * 80, :],
                          preferred_element_type=f32)
    h1 = jnp.maximum(h1, 0.0)                                # (b, 120)

    # ---- fc2 -> ReLU -> fc3 (padded to 128 output lanes) --------------------
    h2 = jnp.maximum(jnp.dot(h1.astype(bf16), fw2_ref[...],
                             preferred_element_type=f32) + fb2_ref[...], 0.0)
    h3 = (jnp.dot(h2.astype(bf16), fw3_ref[...], preferred_element_type=f32)
          + fb3_ref[...])                                    # (b, 128)
    out_ref[...] = h3


# ----------------------------------------------------------------------------
# Wrapper-side layout plumbing.
# ----------------------------------------------------------------------------
def _choose_block(n):
    """Batch tile size: multiple of 8, capped at 32 (safe for v7x VMEM)."""
    return int(min(32, -(-n // 8) * 8))


def _build_lhs1(x, block_b):
    """(N, 3, 32, 32) -> row-im2col (G*B*32, 480) bf16; row (s, y) holds image
    rows y..y+4 flattened as (kh, w, cin)."""
    n = x.shape[0]
    g = -(-n // block_b)
    n_pad = g * block_b
    xr = jnp.transpose(x, (0, 2, 3, 1)).reshape(n, 32, 96)     # col = w*3 + cin
    xr = jnp.pad(xr, ((0, n_pad - n), (0, 4), (0, 0)))         # (n_pad, 36, 96)
    lhs = jnp.concatenate([xr[:, kh:kh + 32, :] for kh in range(5)], axis=-1)
    return lhs.reshape(g * block_b * 32, 480).astype(jnp.bfloat16), g, n_pad


def prepare_params(params):
    """One-time (host-side) conversion of PyTorch-layout params."""
    f32 = np.float32
    w1 = np.asarray(params["conv1_w"], f32)                    # (6, 3, 5, 5)
    w2 = np.asarray(params["conv2_w"], f32)                    # (16, 6, 5, 5)

    # conv1 banded weight: row = kh*96 + w*3 + cin, col = bb*84 + j*6 + cout.
    r1 = np.zeros((480, 168), f32)
    for kh in range(5):
        for kw in range(5):
            for j in range(14):
                for bb in range(2):
                    w = 2 * j + bb + kw
                    r1[kh * 96 + w * 3:kh * 96 + w * 3 + 3,
                       bb * 84 + j * 6:bb * 84 + j * 6 + 6] = w1[:, :, kh, kw].T

    # conv2 banded weight: row = kh*84 + jcol*6 + cin, col = bb*80 + j2*16 + co.
    r2 = np.zeros((420, 160), f32)
    for kh in range(5):
        for kw in range(5):
            for j2 in range(5):
                for bb in range(2):
                    jc = 2 * j2 + bb + kw
                    r2[kh * 84 + jc * 6:kh * 84 + jc * 6 + 6,
                       bb * 80 + j2 * 16:bb * 80 + j2 * 16 + 16] = \
                        w2[:, :, kh, kw].T

    b1row = np.tile(np.asarray(params["conv1_b"], f32), 14)[None]   # (1, 84)
    b2row = np.tile(np.asarray(params["conv2_b"], f32), 5)[None]    # (1, 80)

    # fc1 rows reordered to our feature order i2*80 + j2*16 + co.
    fw1 = np.asarray(params["fc1_w"], f32).reshape(120, 16, 5, 5)
    fw1 = fw1.transpose(2, 3, 1, 0).reshape(400, 120)
    fw2 = np.asarray(params["fc2_w"], f32).T                        # (120, 84)
    fw3 = np.zeros((84, 128), f32)
    fw3[:, :2] = np.asarray(params["fc3_w"], f32).T
    fb3 = np.zeros((1, 128), f32)
    fb3[0, :2] = np.asarray(params["fc3_b"], f32)

    bf16 = jnp.bfloat16
    return {
        "r1": jnp.asarray(r1, bf16), "b1": jnp.asarray(b1row),
        "r2": jnp.asarray(r2, bf16), "b2": jnp.asarray(b2row),
        "fw1": jnp.asarray(fw1, bf16),
        "fb1": jnp.asarray(params["fc1_b"], jnp.float32).reshape(1, 120),
        "fw2": jnp.asarray(fw2, bf16),
        "fb2": jnp.asarray(params["fc2_b"], jnp.float32).reshape(1, 84),
        "fw3": jnp.asarray(fw3, bf16), "fb3": jnp.asarray(fb3),
    }


@functools.partial(jax.jit, static_argnums=(2,))
def _forward_impl(kp, x, block_b):
    n = x.shape[0]
    lhs1, g, n_pad = _build_lhs1(x, block_b)
    br = block_b * 32
    const = lambda i: (0, 0)

    flops = 2 * n_pad * 32 * (480 * 168 + 420 * 160) \
        + 2 * n_pad * (400 * 120 + 120 * 84 + 84 * 128)
    bytes_acc = lhs1.size * 2 + n_pad * 128 * 4 \
        + (480 * 168 + 420 * 160 + 400 * 120 + 120 * 84 + 84 * 128) * 2

    out = pl.pallas_call(
        _lenet_kernel,
        out_shape=jax.ShapeDtypeStruct((n_pad, 128), jnp.float32),
        grid=(g,),
        in_specs=[
            pl.BlockSpec((br, 480), lambda i: (i, 0)),   # conv1 row-im2col
            pl.BlockSpec((480, 168), const),             # conv1 banded weight
            pl.BlockSpec((1, 84), const),                # conv1 bias (tiled)
            pl.BlockSpec((420, 160), const),             # conv2 banded weight
            pl.BlockSpec((1, 80), const),                # conv2 bias (tiled)
            pl.BlockSpec((400, 120), const),             # fc1 weight
            pl.BlockSpec((1, 120), const),               # fc1 bias
            pl.BlockSpec((120, 84), const),              # fc2 weight
            pl.BlockSpec((1, 84), const),                # fc2 bias
            pl.BlockSpec((84, 128), const),              # fc3 weight (padded)
            pl.BlockSpec((1, 128), const),               # fc3 bias (padded)
        ],
        out_specs=pl.BlockSpec((block_b, 128), lambda i: (i, 0)),
        compiler_params=pltpu.CompilerParams(
            dimension_semantics=("parallel",)),
        cost_estimate=pl.CostEstimate(
            flops=flops, transcendentals=0, bytes_accessed=bytes_acc),
    )(lhs1, kp["r1"], kp["b1"], kp["r2"], kp["b2"],
      kp["fw1"], kp["fb1"], kp["fw2"], kp["fb2"], kp["fw3"], kp["fb3"])
    return out[:n, :2]                                   # (N, 2)


def net_forward(kparams, x):
    assert x.shape[1:] == (3, 32, 32), "Net expects (N, 3, 32, 32) input"
    return _forward_impl(kparams, x, _choose_block(x.shape[0]))


# ----------------------------------------------------------------------------
# Parameters (deterministic Kaiming-uniform-style init, PyTorch default bounds)
# ----------------------------------------------------------------------------
def init_params(key):
    def ku(k, shape, fan_in):
        bound = 1.0 / float(fan_in) ** 0.5
        return jax.random.uniform(k, shape, jnp.float32, -bound, bound)

    ks = jax.random.split(key, 10)
    return {
        "conv1_w": ku(ks[0], (6, 3, 5, 5), 3 * 25),
        "conv1_b": ku(ks[1], (6,), 3 * 25),
        "conv2_w": ku(ks[2], (16, 6, 5, 5), 6 * 25),
        "conv2_b": ku(ks[3], (16,), 6 * 25),
        "fc1_w":   ku(ks[4], (120, 400), 400),
        "fc1_b":   ku(ks[5], (120,), 400),
        "fc2_w":   ku(ks[6], (84, 120), 120),
        "fc2_b":   ku(ks[7], (84,), 120),
        "fc3_w":   ku(ks[8], (2, 84), 84),
        "fc3_b":   ku(ks[9], (2,), 84),
    }


# Pure-JAX reference (XLA ops, f32) for a numerical sanity check.
def net_reference(params, x):
    dn = ("NCHW", "OIHW", "NCHW")
    hi = jax.lax.Precision.HIGHEST
    y = jax.lax.conv_general_dilated(x, params["conv1_w"], (1, 1), "VALID",
                                     dimension_numbers=dn, precision=hi)
    y = jnp.maximum(y + params["conv1_b"][None, :, None, None], 0.0)
    y = jax.lax.reduce_window(y, -jnp.inf, jax.lax.max,
                              (1, 1, 2, 2), (1, 1, 2, 2), "VALID")
    y = jax.lax.conv_general_dilated(y, params["conv2_w"], (1, 1), "VALID",
                                     dimension_numbers=dn, precision=hi)
    y = jnp.maximum(y + params["conv2_b"][None, :, None, None], 0.0)
    y = jax.lax.reduce_window(y, -jnp.inf, jax.lax.max,
                              (1, 1, 2, 2), (1, 1, 2, 2), "VALID")
    y = y.reshape(x.shape[0], -1)
    y = jnp.maximum(jnp.dot(y, params["fc1_w"].T, precision=hi)
                    + params["fc1_b"], 0.0)
    y = jnp.maximum(jnp.dot(y, params["fc2_w"].T, precision=hi)
                    + params["fc2_b"], 0.0)
    return jnp.dot(y, params["fc3_w"].T, precision=hi) + params["fc3_b"]


if __name__ == "__main__":
    key = jax.random.PRNGKey(0)
    k_params, k_x = jax.random.split(key)
    params = init_params(k_params)
    kparams = prepare_params(params)          # one-time weight layout prep
    # Input spatial size must be 32 so the flatten yields 16*5*5 = 400 features.
    x = jax.random.normal(k_x, (2, 3, 32, 32), dtype=jnp.float32)

    out = net_forward(kparams, x)
    jax.block_until_ready(out)
    assert out.shape == (2, 2) and out.dtype == jnp.float32

    ref = net_reference(params, x)
    err = float(jnp.max(jnp.abs(out - ref)))
    # Tolerance covers the bf16 MXU inputs (f32 accumulation).
    assert err < 5e-2, f"kernel/reference mismatch: max abs err {err}"
    print("KERNEL_OK")
</pallas_src>

<mosaic_0001>
module attributes {stable_mosaic.version = 11 : i64} {
  func.func @_lenet_kernel(%arg0: i32, %arg1: memref<256x480xbf16, #tpu.memory_space<vmem>>, %arg2: memref<480x168xbf16, #tpu.memory_space<vmem>>, %arg3: memref<1x84xf32, #tpu.memory_space<vmem>>, %arg4: memref<420x160xbf16, #tpu.memory_space<vmem>>, %arg5: memref<1x80xf32, #tpu.memory_space<vmem>>, %arg6: memref<400x120xbf16, #tpu.memory_space<vmem>>, %arg7: memref<1x120xf32, #tpu.memory_space<vmem>>, %arg8: memref<120x84xbf16, #tpu.memory_space<vmem>>, %arg9: memref<1x84xf32, #tpu.memory_space<vmem>>, %arg10: memref<84x128xbf16, #tpu.memory_space<vmem>>, %arg11: memref<1x128xf32, #tpu.memory_space<vmem>>, %arg12: memref<8x128xf32, #tpu.memory_space<vmem>>) attributes {dimension_semantics = [#tpu.dimension_semantics<parallel>], iteration_bounds = array<i64: 1>, scalar_prefetch = 0 : i64, scratch_operands = 0 : i64, tpu.core_type = #tpu.core_type<tc>, window_params = [{transform_indices = @transform_0, window_bounds = array<i64: 256, 480>}, {pipeline_mode = #tpu.pipeline_mode<synchronous>, transform_indices = @transform_1, window_bounds = array<i64: 480, 168>}, {pipeline_mode = #tpu.pipeline_mode<synchronous>, transform_indices = @transform_2, window_bounds = array<i64: 1, 84>}, {pipeline_mode = #tpu.pipeline_mode<synchronous>, transform_indices = @transform_3, window_bounds = array<i64: 420, 160>}, {pipeline_mode = #tpu.pipeline_mode<synchronous>, transform_indices = @transform_4, window_bounds = array<i64: 1, 80>}, {pipeline_mode = #tpu.pipeline_mode<synchronous>, transform_indices = @transform_5, window_bounds = array<i64: 400, 120>}, {pipeline_mode = #tpu.pipeline_mode<synchronous>, transform_indices = @transform_6, window_bounds = array<i64: 1, 120>}, {pipeline_mode = #tpu.pipeline_mode<synchronous>, transform_indices = @transform_7, window_bounds = array<i64: 120, 84>}, {pipeline_mode = #tpu.pipeline_mode<synchronous>, transform_indices = @transform_8, window_bounds = array<i64: 1, 84>}, {pipeline_mode = #tpu.pipeline_mode<synchronous>, transform_indices = @transform_9, window_bounds = array<i64: 84, 128>}, {pipeline_mode = #tpu.pipeline_mode<synchronous>, transform_indices = @transform_10, window_bounds = array<i64: 1, 128>}, {transform_indices = @transform_11, window_bounds = array<i64: 8, 128>}]} {
    %c0 = arith.constant 0 : index
    %c0_0 = arith.constant 0 : index
    %0 = vector.load %arg1[%c0, %c0_0] : memref<256x480xbf16, #tpu.memory_space<vmem>>, vector<256x480xbf16>
    %c0_1 = arith.constant 0 : index
    %c0_2 = arith.constant 0 : index
    %1 = vector.load %arg2[%c0_1, %c0_2] : memref<480x168xbf16, #tpu.memory_space<vmem>>, vector<480x168xbf16>
    %cst = arith.constant dense<0.000000e+00> : vector<256x168xf32>
    %2 = tpu.matmul %0, %1, %cst {dimension_numbers = #tpu.dot_dimension_numbers<[1], [0], [0], [1], [0, 0, 1, 1], [], []>} : vector<256x480xbf16>, vector<480x168xbf16>, vector<256x168xf32> -> vector<256x168xf32>
    %3 = vector.extract_strided_slice %2 {offsets = [0, 0], sizes = [256, 84], strides = [1, 1]} : vector<256x168xf32> to vector<256x84xf32>
    %4 = vector.extract_strided_slice %2 {offsets = [0, 84], sizes = [256, 84], strides = [1, 1]} : vector<256x168xf32> to vector<256x84xf32>
    %5 = arith.maximumf %3, %4 : vector<256x84xf32>
    %cst_3 = arith.constant 0.000000e+00 : f32
    %6 = vector.broadcast %cst_3 : f32 to vector<8x84xf32>
    %7 = tpu.concatenate %5, %6 in 0 : vector<256x84xf32>, vector<8x84xf32> -> vector<264x84xf32>
    %8 = vector.extract_strided_slice %7 {offsets = [1, 0], sizes = [256, 84], strides = [1, 1]} : vector<264x84xf32> to vector<256x84xf32>
    %9 = arith.maximumf %5, %8 : vector<256x84xf32>
    %c0_4 = arith.constant 0 : index
    %c0_5 = arith.constant 0 : index
    %10 = vector.load %arg3[%c0_4, %c0_5] : memref<1x84xf32, #tpu.memory_space<vmem>>, vector<1x84xf32>
    %11 = vector.broadcast %10 : vector<1x84xf32> to vector<256x84xf32>
    %12 = arith.addf %9, %11 : vector<256x84xf32>
    %cst_6 = arith.constant 0.000000e+00 : f32
    %13 = vector.broadcast %cst_6 : f32 to vector<256x84xf32>
    %14 = arith.maximumf %12, %13 : vector<256x84xf32>
    %15 = arith.truncf %14 : vector<256x84xf32> to vector<256x84xbf16>
    %cst_7 = arith.constant 0.000000e+00 : bf16
    %16 = vector.broadcast %cst_7 : bf16 to vector<8x84xbf16>
    %17 = tpu.concatenate %15, %16 in 0 : vector<256x84xbf16>, vector<8x84xbf16> -> vector<264x84xbf16>
    %18 = vector.extract_strided_slice %17 {offsets = [0, 0], sizes = [256, 84], strides = [1, 1]} : vector<264x84xbf16> to vector<256x84xbf16>
    %19 = vector.extract_strided_slice %17 {offsets = [2, 0], sizes = [256, 84], strides = [1, 1]} : vector<264x84xbf16> to vector<256x84xbf16>
    %20 = vector.extract_strided_slice %17 {offsets = [4, 0], sizes = [256, 84], strides = [1, 1]} : vector<264x84xbf16> to vector<256x84xbf16>
    %21 = vector.extract_strided_slice %17 {offsets = [6, 0], sizes = [256, 84], strides = [1, 1]} : vector<264x84xbf16> to vector<256x84xbf16>
    %22 = vector.extract_strided_slice %17 {offsets = [8, 0], sizes = [256, 84], strides = [1, 1]} : vector<264x84xbf16> to vector<256x84xbf16>
    %23 = tpu.concatenate %18, %19, %20, %21, %22 in 1 : vector<256x84xbf16>, vector<256x84xbf16>, vector<256x84xbf16>, vector<256x84xbf16>, vector<256x84xbf16> -> vector<256x420xbf16>
    %c0_8 = arith.constant 0 : index
    %c0_9 = arith.constant 0 : index
    %24 = vector.load %arg4[%c0_8, %c0_9] : memref<420x160xbf16, #tpu.memory_space<vmem>>, vector<420x160xbf16>
    %cst_10 = arith.constant dense<0.000000e+00> : vector<256x160xf32>
    %25 = tpu.matmul %23, %24, %cst_10 {dimension_numbers = #tpu.dot_dimension_numbers<[1], [0], [0], [1], [0, 0, 1, 1], [], []>} : vector<256x420xbf16>, vector<420x160xbf16>, vector<256x160xf32> -> vector<256x160xf32>
    %26 = vector.extract_strided_slice %25 {offsets = [0, 0], sizes = [256, 80], strides = [1, 1]} : vector<256x160xf32> to vector<256x80xf32>
    %27 = vector.extract_strided_slice %25 {offsets = [0, 80], sizes = [256, 80], strides = [1, 1]} : vector<256x160xf32> to vector<256x80xf32>
    %28 = arith.maximumf %26, %27 : vector<256x80xf32>
    %cst_11 = arith.constant 0.000000e+00 : f32
    %29 = vector.broadcast %cst_11 : f32 to vector<8x80xf32>
    %30 = tpu.concatenate %28, %29 in 0 : vector<256x80xf32>, vector<8x80xf32> -> vector<264x80xf32>
    %31 = vector.extract_strided_slice %30 {offsets = [2, 0], sizes = [256, 80], strides = [1, 1]} : vector<264x80xf32> to vector<256x80xf32>
    %32 = arith.maximumf %28, %31 : vector<256x80xf32>
    %c0_12 = arith.constant 0 : index
    %c0_13 = arith.constant 0 : index
    %33 = vector.load %arg5[%c0_12, %c0_13] : memref<1x80xf32, #tpu.memory_space<vmem>>, vector<1x80xf32>
    %34 = vector.broadcast %33 : vector<1x80xf32> to vector<256x80xf32>
    %35 = arith.addf %32, %34 : vector<256x80xf32>
    %cst_14 = arith.constant 0.000000e+00 : f32
    %36 = vector.broadcast %cst_14 : f32 to vector<256x80xf32>
    %37 = arith.maximumf %35, %36 : vector<256x80xf32>
    %38 = arith.truncf %37 : vector<256x80xf32> to vector<256x80xbf16>
    %39 = tpu.iota {dimensions = array<i32: 0>} : vector<8x256xi32>
    %40 = tpu.iota {dimensions = array<i32: 1>} : vector<8x256xi32>
    %c0_15 = arith.constant 0 : index
    %c0_16 = arith.constant 0 : index
    %41 = vector.load %arg7[%c0_15, %c0_16] : memref<1x120xf32, #tpu.memory_space<vmem>>, vector<1x120xf32>
    %c32_i32 = arith.constant 32 : i32
    %42 = vector.broadcast %c32_i32 : i32 to vector<8x256xi32>
    %43 = arith.muli %39, %42 : vector<8x256xi32>
    %c0_i32 = arith.constant 0 : i32
    %44 = vector.broadcast %c0_i32 : i32 to vector<8x256xi32>
    %45 = arith.addi %43, %44 : vector<8x256xi32>
    %46 = arith.cmpi eq, %40, %45 : vector<8x256xi32>
    %47 = arith.extui %46 : vector<8x256xi1> to vector<8x256xi32>
    %48 = arith.sitofp %47 : vector<8x256xi32> to vector<8x256xf32>
    %49 = arith.truncf %48 : vector<8x256xf32> to vector<8x256xbf16>
    %cst_17 = arith.constant dense<0.000000e+00> : vector<8x80xf32>
    %50 = tpu.matmul %49, %38, %cst_17 {dimension_numbers = #tpu.dot_dimension_numbers<[1], [0], [0], [1], [0, 0, 1, 1], [], []>} : vector<8x256xbf16>, vector<256x80xbf16>, vector<8x80xf32> -> vector<8x80xf32>
    %51 = arith.truncf %50 : vector<8x80xf32> to vector<8x80xbf16>
    %c0_18 = arith.constant 0 : index
    %c0_19 = arith.constant 0 : index
    %52 = vector.load %arg6[%c0_18, %c0_19] : memref<400x120xbf16, #tpu.memory_space<vmem>>, vector<80x120xbf16>
    %cst_20 = arith.constant dense<0.000000e+00> : vector<8x120xf32>
    %53 = tpu.matmul %51, %52, %cst_20 {dimension_numbers = #tpu.dot_dimension_numbers<[1], [0], [0], [1], [0, 0, 1, 1], [], []>} : vector<8x80xbf16>, vector<80x120xbf16>, vector<8x120xf32> -> vector<8x120xf32>
    %54 = vector.broadcast %41 : vector<1x120xf32> to vector<8x120xf32>
    %55 = arith.addf %54, %53 : vector<8x120xf32>
    %c32_i32_21 = arith.constant 32 : i32
    %56 = vector.broadcast %c32_i32_21 : i32 to vector<8x256xi32>
    %57 = arith.muli %39, %56 : vector<8x256xi32>
    %c4_i32 = arith.constant 4 : i32
    %58 = vector.broadcast %c4_i32 : i32 to vector<8x256xi32>
    %59 = arith.addi %57, %58 : vector<8x256xi32>
    %60 = arith.cmpi eq, %40, %59 : vector<8x256xi32>
    %61 = arith.extui %60 : vector<8x256xi1> to vector<8x256xi32>
    %62 = arith.sitofp %61 : vector<8x256xi32> to vector<8x256xf32>
    %63 = arith.truncf %62 : vector<8x256xf32> to vector<8x256xbf16>
    %cst_22 = arith.constant dense<0.000000e+00> : vector<8x80xf32>
    %64 = tpu.matmul %63, %38, %cst_22 {dimension_numbers = #tpu.dot_dimension_numbers<[1], [0], [0], [1], [0, 0, 1, 1], [], []>} : vector<8x256xbf16>, vector<256x80xbf16>, vector<8x80xf32> -> vector<8x80xf32>
    %65 = arith.truncf %64 : vector<8x80xf32> to vector<8x80xbf16>
    %c80 = arith.constant 80 : index
    %c0_23 = arith.constant 0 : index
    %66 = vector.load %arg6[%c80, %c0_23] : memref<400x120xbf16, #tpu.memory_space<vmem>>, vector<80x120xbf16>
    %cst_24 = arith.constant dense<0.000000e+00> : vector<8x120xf32>
    %67 = tpu.matmul %65, %66, %cst_24 {dimension_numbers = #tpu.dot_dimension_numbers<[1], [0], [0], [1], [0, 0, 1, 1], [], []>} : vector<8x80xbf16>, vector<80x120xbf16>, vector<8x120xf32> -> vector<8x120xf32>
    %68 = arith.addf %55, %67 : vector<8x120xf32>
    %c32_i32_25 = arith.constant 32 : i32
    %69 = vector.broadcast %c32_i32_25 : i32 to vector<8x256xi32>
    %70 = arith.muli %39, %69 : vector<8x256xi32>
    %c8_i32 = arith.constant 8 : i32
    %71 = vector.broadcast %c8_i32 : i32 to vector<8x256xi32>
    %72 = arith.addi %70, %71 : vector<8x256xi32>
    %73 = arith.cmpi eq, %40, %72 : vector<8x256xi32>
    %74 = arith.extui %73 : vector<8x256xi1> to vector<8x256xi32>
    %75 = arith.sitofp %74 : vector<8x256xi32> to vector<8x256xf32>
    %76 = arith.truncf %75 : vector<8x256xf32> to vector<8x256xbf16>
    %cst_26 = arith.constant dense<0.000000e+00> : vector<8x80xf32>
    %77 = tpu.matmul %76, %38, %cst_26 {dimension_numbers = #tpu.dot_dimension_numbers<[1], [0], [0], [1], [0, 0, 1, 1], [], []>} : vector<8x256xbf16>, vector<256x80xbf16>, vector<8x80xf32> -> vector<8x80xf32>
    %78 = arith.truncf %77 : vector<8x80xf32> to vector<8x80xbf16>
    %c160 = arith.constant 160 : index
    %c0_27 = arith.constant 0 : index
    %79 = vector.load %arg6[%c160, %c0_27] : memref<400x120xbf16, #tpu.memory_space<vmem>>, vector<80x120xbf16>
    %cst_28 = arith.constant dense<0.000000e+00> : vector<8x120xf32>
    %80 = tpu.matmul %78, %79, %cst_28 {dimension_numbers = #tpu.dot_dimension_numbers<[1], [0], [0], [1], [0, 0, 1, 1], [], []>} : vector<8x80xbf16>, vector<80x120xbf16>, vector<8x120xf32> -> vector<8x120xf32>
    %81 = arith.addf %68, %80 : vector<8x120xf32>
    %c32_i32_29 = arith.constant 32 : i32
    %82 = vector.broadcast %c32_i32_29 : i32 to vector<8x256xi32>
    %83 = arith.muli %39, %82 : vector<8x256xi32>
    %c12_i32 = arith.constant 12 : i32
    %84 = vector.broadcast %c12_i32 : i32 to vector<8x256xi32>
    %85 = arith.addi %83, %84 : vector<8x256xi32>
    %86 = arith.cmpi eq, %40, %85 : vector<8x256xi32>
    %87 = arith.extui %86 : vector<8x256xi1> to vector<8x256xi32>
    %88 = arith.sitofp %87 : vector<8x256xi32> to vector<8x256xf32>
    %89 = arith.truncf %88 : vector<8x256xf32> to vector<8x256xbf16>
    %cst_30 = arith.constant dense<0.000000e+00> : vector<8x80xf32>
    %90 = tpu.matmul %89, %38, %cst_30 {dimension_numbers = #tpu.dot_dimension_numbers<[1], [0], [0], [1], [0, 0, 1, 1], [], []>} : vector<8x256xbf16>, vector<256x80xbf16>, vector<8x80xf32> -> vector<8x80xf32>
    %91 = arith.truncf %90 : vector<8x80xf32> to vector<8x80xbf16>
    %c240 = arith.constant 240 : index
    %c0_31 = arith.constant 0 : index
    %92 = vector.load %arg6[%c240, %c0_31] : memref<400x120xbf16, #tpu.memory_space<vmem>>, vector<80x120xbf16>
    %cst_32 = arith.constant dense<0.000000e+00> : vector<8x120xf32>
    %93 = tpu.matmul %91, %92, %cst_32 {dimension_numbers = #tpu.dot_dimension_numbers<[1], [0], [0], [1], [0, 0, 1, 1], [], []>} : vector<8x80xbf16>, vector<80x120xbf16>, vector<8x120xf32> -> vector<8x120xf32>
    %94 = arith.addf %81, %93 : vector<8x120xf32>
    %c32_i32_33 = arith.constant 32 : i32
    %95 = vector.broadcast %c32_i32_33 : i32 to vector<8x256xi32>
    %96 = arith.muli %39, %95 : vector<8x256xi32>
    %c16_i32 = arith.constant 16 : i32
    %97 = vector.broadcast %c16_i32 : i32 to vector<8x256xi32>
    %98 = arith.addi %96, %97 : vector<8x256xi32>
    %99 = arith.cmpi eq, %40, %98 : vector<8x256xi32>
    %100 = arith.extui %99 : vector<8x256xi1> to vector<8x256xi32>
    %101 = arith.sitofp %100 : vector<8x256xi32> to vector<8x256xf32>
    %102 = arith.truncf %101 : vector<8x256xf32> to vector<8x256xbf16>
    %cst_34 = arith.constant dense<0.000000e+00> : vector<8x80xf32>
    %103 = tpu.matmul %102, %38, %cst_34 {dimension_numbers = #tpu.dot_dimension_numbers<[1], [0], [0], [1], [0, 0, 1, 1], [], []>} : vector<8x256xbf16>, vector<256x80xbf16>, vector<8x80xf32> -> vector<8x80xf32>
    %104 = arith.truncf %103 : vector<8x80xf32> to vector<8x80xbf16>
    %c320 = arith.constant 320 : index
    %c0_35 = arith.constant 0 : index
    %105 = vector.load %arg6[%c320, %c0_35] : memref<400x120xbf16, #tpu.memory_space<vmem>>, vector<80x120xbf16>
    %cst_36 = arith.constant dense<0.000000e+00> : vector<8x120xf32>
    %106 = tpu.matmul %104, %105, %cst_36 {dimension_numbers = #tpu.dot_dimension_numbers<[1], [0], [0], [1], [0, 0, 1, 1], [], []>} : vector<8x80xbf16>, vector<80x120xbf16>, vector<8x120xf32> -> vector<8x120xf32>
    %107 = arith.addf %94, %106 : vector<8x120xf32>
    %cst_37 = arith.constant 0.000000e+00 : f32
    %108 = vector.broadcast %cst_37 : f32 to vector<8x120xf32>
    %109 = arith.maximumf %107, %108 : vector<8x120xf32>
    %110 = arith.truncf %109 : vector<8x120xf32> to vector<8x120xbf16>
    %c0_38 = arith.constant 0 : index
    %c0_39 = arith.constant 0 : index
    %111 = vector.load %arg8[%c0_38, %c0_39] : memref<120x84xbf16, #tpu.memory_space<vmem>>, vector<120x84xbf16>
    %cst_40 = arith.constant dense<0.000000e+00> : vector<8x84xf32>
    %112 = tpu.matmul %110, %111, %cst_40 {dimension_numbers = #tpu.dot_dimension_numbers<[1], [0], [0], [1], [0, 0, 1, 1], [], []>} : vector<8x120xbf16>, vector<120x84xbf16>, vector<8x84xf32> -> vector<8x84xf32>
    %c0_41 = arith.constant 0 : index
    %c0_42 = arith.constant 0 : index
    %113 = vector.load %arg9[%c0_41, %c0_42] : memref<1x84xf32, #tpu.memory_space<vmem>>, vector<1x84xf32>
    %114 = vector.broadcast %113 : vector<1x84xf32> to vector<8x84xf32>
    %115 = arith.addf %112, %114 : vector<8x84xf32>
    %cst_43 = arith.constant 0.000000e+00 : f32
    %116 = vector.broadcast %cst_43 : f32 to vector<8x84xf32>
    %117 = arith.maximumf %115, %116 : vector<8x84xf32>
    %118 = arith.truncf %117 : vector<8x84xf32> to vector<8x84xbf16>
    %c0_44 = arith.constant 0 : index
    %c0_45 = arith.constant 0 : index
    %119 = vector.load %arg10[%c0_44, %c0_45] : memref<84x128xbf16, #tpu.memory_space<vmem>>, vector<84x128xbf16>
    %cst_46 = arith.constant dense<0.000000e+00> : vector<8x128xf32>
    %120 = tpu.matmul %118, %119, %cst_46 {dimension_numbers = #tpu.dot_dimension_numbers<[1], [0], [0], [1], [0, 0, 1, 1], [], []>} : vector<8x84xbf16>, vector<84x128xbf16>, vector<8x128xf32> -> vector<8x128xf32>
    %c0_47 = arith.constant 0 : index
    %c0_48 = arith.constant 0 : index
    %121 = vector.load %arg11[%c0_47, %c0_48] : memref<1x128xf32, #tpu.memory_space<vmem>>, vector<1x128xf32>
    %122 = vector.broadcast %121 : vector<1x128xf32> to vector<8x128xf32>
    %123 = arith.addf %120, %122 : vector<8x128xf32>
    %c0_49 = arith.constant 0 : index
    %c0_50 = arith.constant 0 : index
    %124 = vector.load %arg12[%c0_49, %c0_50] : memref<8x128xf32, #tpu.memory_space<vmem>>, vector<8x128xf32>
    tpu.vector_store %arg12[%c0_49, %c0_50], %123 {strides = array<i32>} : memref<8x128xf32, #tpu.memory_space<vmem>>, vector<8x128xf32>,
    return
  }
  func.func @transform_0(%arg0: i32) -> (i32, i32) {
    %c0_i32 = arith.constant 0 : i32
    %c0_i32_0 = arith.constant 0 : i32
    return %arg0, %c0_i32 : i32, i32
  }
  func.func @transform_1(%arg0: i32) -> (i32, i32) {
    %c0_i32 = arith.constant 0 : i32
    %c0_i32_0 = arith.constant 0 : i32
    %c0_i32_1 = arith.constant 0 : i32
    return %c0_i32, %c0_i32_0 : i32, i32
  }
  func.func @transform_2(%arg0: i32) -> (i32, i32) {
    %c0_i32 = arith.constant 0 : i32
    %c0_i32_0 = arith.constant 0 : i32
    %c0_i32_1 = arith.constant 0 : i32
    return %c0_i32, %c0_i32_0 : i32, i32
  }
  func.func @transform_3(%arg0: i32) -> (i32, i32) {
    %c0_i32 = arith.constant 0 : i32
    %c0_i32_0 = arith.constant 0 : i32
    %c0_i32_1 = arith.constant 0 : i32
    return %c0_i32, %c0_i32_0 : i32, i32
  }
  func.func @transform_4(%arg0: i32) -> (i32, i32) {
    %c0_i32 = arith.constant 0 : i32
    %c0_i32_0 = arith.constant 0 : i32
    %c0_i32_1 = arith.constant 0 : i32
    return %c0_i32, %c0_i32_0 : i32, i32
  }
  func.func @transform_5(%arg0: i32) -> (i32, i32) {
    %c0_i32 = arith.constant 0 : i32
    %c0_i32_0 = arith.constant 0 : i32
    %c0_i32_1 = arith.constant 0 : i32
    return %c0_i32, %c0_i32_0 : i32, i32
  }
  func.func @transform_6(%arg0: i32) -> (i32, i32) {
    %c0_i32 = arith.constant 0 : i32
    %c0_i32_0 = arith.constant 0 : i32
    %c0_i32_1 = arith.constant 0 : i32
    return %c0_i32, %c0_i32_0 : i32, i32
  }
  func.func @transform_7(%arg0: i32) -> (i32, i32) {
    %c0_i32 = arith.constant 0 : i32
    %c0_i32_0 = arith.constant 0 : i32
    %c0_i32_1 = arith.constant 0 : i32
    return %c0_i32, %c0_i32_0 : i32, i32
  }
  func.func @transform_8(%arg0: i32) -> (i32, i32) {
    %c0_i32 = arith.constant 0 : i32
    %c0_i32_0 = arith.constant 0 : i32
    %c0_i32_1 = arith.constant 0 : i32
    return %c0_i32, %c0_i32_0 : i32, i32
  }
  func.func @transform_9(%arg0: i32) -> (i32, i32) {
    %c0_i32 = arith.constant 0 : i32
    %c0_i32_0 = arith.constant 0 : i32
    %c0_i32_1 = arith.constant 0 : i32
    return %c0_i32, %c0_i32_0 : i32, i32
  }
  func.func @transform_10(%arg0: i32) -> (i32, i32) {
    %c0_i32 = arith.constant 0 : i32
    %c0_i32_0 = arith.constant 0 : i32
    %c0_i32_1 = arith.constant 0 : i32
    return %c0_i32, %c0_i32_0 : i32, i32
  }
  func.func @transform_11(%arg0: i32) -> (i32, i32) {
    %c0_i32 = arith.constant 0 : i32
    %c0_i32_0 = arith.constant 0 : i32
    return %arg0, %c0_i32 : i32, i32
  }
}

</mosaic_0001>

<llo_original>
// kernel: _forward_impl.1
$region0: #{_forward_impl.1}
  #allocation0 [shape = 'u32[]', space=smem, size = 0x4, offset = 0x4, fixed_abs, tag = 'smem constant byte address 0x4 - core index']
  #allocation1 [shape = 'u32[144,128]{1,0:T(1,128)}', space=vmem, size = 0x12000, scoped, tag = 'internal scratch']
  %s0 = inlined_call_operand.vmem [shape: bf16[256,480], index: 0, kind: input, shape index: {}]
  %s1 = inlined_call_operand.vmem [shape: bf16[480,168], index: 1, kind: input, shape index: {}]
  %s2 = inlined_call_operand.vmem [shape: f32[1,84], index: 2, kind: input, shape index: {}]
  %s3 = inlined_call_operand.vmem [shape: bf16[420,160], index: 3, kind: input, shape index: {}]
  %s4 = inlined_call_operand.vmem [shape: f32[1,80], index: 4, kind: input, shape index: {}]
  %s5 = inlined_call_operand.vmem [shape: bf16[400,120], index: 5, kind: input, shape index: {}]
  %s6 = inlined_call_operand.vmem [shape: f32[1,120], index: 6, kind: input, shape index: {}]
  %s7 = inlined_call_operand.vmem [shape: bf16[120,84], index: 7, kind: input, shape index: {}]
  %s8 = inlined_call_operand.vmem [shape: f32[1,84], index: 8, kind: input, shape index: {}]
  %s9 = inlined_call_operand.vmem [shape: bf16[84,128], index: 9, kind: input, shape index: {}]
  %s10 = inlined_call_operand.vmem [shape: f32[1,128], index: 10, kind: input, shape index: {}]
  %s11 = inlined_call_operand.vmem [shape: f32[8,128], index: 11, kind: output, shape index: {}]
  %s12 = sld [smem:[#allocation0]]
  $region54: #{_forward_impl.1} parent=0
    _
  %s14 = ssub.s32 1, %s12
  %s15 = scalar_select 0, %s14, %s12
  // Predicated region
  $region2: #{_forward_impl.1} parent=0 // pred_check
    _
  $region3: #{_forward_impl.1} parent=0 // pred_check_branch
    %17 = sbr.rel (0) target = $region5
  $region4: #{_forward_impl.1} parent=0 // pred_region
    _
  $region5: #{_forward_impl.1} parent=0 // pred_fallthru
    _
  // Predicated region
  $region6: #{_forward_impl.1} parent=0 // pred_check
    _
  $region7: #{_forward_impl.1} parent=0 // pred_check_branch
    %19 = sbr.rel (0) target = $region9
  $region8: #{_forward_impl.1} parent=0 // pred_region
    _
  $region9: #{_forward_impl.1} parent=0 // pred_fallthru
    _
  // Predicated region
  $region10: #{_forward_impl.1} parent=0 // pred_check
    _
  $region11: #{_forward_impl.1} parent=0 // pred_check_branch
    %21 = sbr.rel (0) target = $region13
  $region12: #{_forward_impl.1} parent=0 // pred_region
    _
  $region13: #{_forward_impl.1} parent=0 // pred_fallthru
    _
  // Predicated region
  $region14: #{_forward_impl.1} parent=0 // pred_check
    _
  $region15: #{_forward_impl.1} parent=0 // pred_check_branch
    %23 = sbr.rel (0) target = $region17
  $region16: #{_forward_impl.1} parent=0 // pred_region
    _
  $region17: #{_forward_impl.1} parent=0 // pred_fallthru
    _
  // Predicated region
  $region18: #{_forward_impl.1} parent=0 // pred_check
    _
  $region19: #{_forward_impl.1} parent=0 // pred_check_branch
    %25 = sbr.rel (0) target = $region21
  $region20: #{_forward_impl.1} parent=0 // pred_region
    _
  $region21: #{_forward_impl.1} parent=0 // pred_fallthru
    _
  // Predicated region
  $region22: #{_forward_impl.1} parent=0 // pred_check
    _
  $region23: #{_forward_impl.1} parent=0 // pred_check_branch
    %27 = sbr.rel (0) target = $region25
  $region24: #{_forward_impl.1} parent=0 // pred_region
    _
  $region25: #{_forward_impl.1} parent=0 // pred_fallthru
    _
  // Predicated region
  $region26: #{_forward_impl.1} parent=0 // pred_check
    _
  $region27: #{_forward_impl.1} parent=0 // pred_check_branch
    %29 = sbr.rel (0) target = $region29
  $region28: #{_forward_impl.1} parent=0 // pred_region
    _
  $region29: #{_forward_impl.1} parent=0 // pred_fallthru
    _
  // Predicated region
  $region30: #{_forward_impl.1} parent=0 // pred_check
    _
  $region31: #{_forward_impl.1} parent=0 // pred_check_branch
    %31 = sbr.rel (0) target = $region33
  $region32: #{_forward_impl.1} parent=0 // pred_region
    _
  $region33: #{_forward_impl.1} parent=0 // pred_fallthru
    _
  // Predicated region
  $region34: #{_forward_impl.1} parent=0 // pred_check
    _
  $region35: #{_forward_impl.1} parent=0 // pred_check_branch
    %33 = sbr.rel (0) target = $region37
  $region36: #{_forward_impl.1} parent=0 // pred_region
    _
  $region37: #{_forward_impl.1} parent=0 // pred_fallthru
    _
  // Predicated region
  $region38: #{_forward_impl.1} parent=0 // pred_check
    _
  $region39: #{_forward_impl.1} parent=0 // pred_check_branch
    %35 = sbr.rel (0) target = $region41
  $region40: #{_forward_impl.1} parent=0 // pred_region
    _
  $region41: #{_forward_impl.1} parent=0 // pred_fallthru
    _
  // Predicated region
  $region42: #{_forward_impl.1} parent=0 // pred_check
    _
  $region43: #{_forward_impl.1} parent=0 // pred_check_branch
    %37 = sbr.rel (0) target = $region45
  $region44: #{_forward_impl.1} parent=0 // pred_region
    _
  $region45: #{_forward_impl.1} parent=0 // pred_fallthru
    _
  %v39 = vld [vmem:[%s0] sm:$0xff]
  %v40 = vld [vmem:[%s0 + $0x8] sm:$0xff]
  %v41 = vld [vmem:[%s0 + $0x10] sm:$0xff]
  %v42 = vld [vmem:[%s0 + $0x18] sm:$0xff]
  %v43 = vld [vmem:[%s0 + $0x20] sm:$0xff]
  %v44 = vld [vmem:[%s0 + $0x28] sm:$0xff]
  %v45 = vld [vmem:[%s0 + $0x30] sm:$0xff]
  %v46 = vld [vmem:[%s0 + $0x38] sm:$0xff]
  %v47 = vld [vmem:[%s0 + $0x40] sm:$0xff]
  %v48 = vld [vmem:[%s0 + $0x48] sm:$0xff]
  %v49 = vld [vmem:[%s0 + $0x50] sm:$0xff]
  %v50 = vld [vmem:[%s0 + $0x58] sm:$0xff]
  %v51 = vld [vmem:[%s0 + $0x60] sm:$0xff]
  %v52 = vld [vmem:[%s0 + $0x68] sm:$0xff]
  %v53 = vld [vmem:[%s0 + $0x70] sm:$0xff]
  %v54 = vld [vmem:[%s0 + $0x78] sm:$0xff]
  %v55 = vld [vmem:[%s0 + $0x80] sm:$0xff]
  %v56 = vld [vmem:[%s0 + $0x88] sm:$0xff]
  %v57 = vld [vmem:[%s0 + $0x90] sm:$0xff]
  %v58 = vld [vmem:[%s0 + $0x98] sm:$0xff]
  %v59 = vld [vmem:[%s0 + $0xa0] sm:$0xff]
  %v60 = vld [vmem:[%s0 + $0xa8] sm:$0xff]
  %v61 = vld [vmem:[%s0 + $0xb0] sm:$0xff]
  %v62 = vld [vmem:[%s0 + $0xb8] sm:$0xff]
  %v63 = vld [vmem:[%s0 + $0xc0] sm:$0xff]
  %v64 = vld [vmem:[%s0 + $0xc8] sm:$0xff]
  %v65 = vld [vmem:[%s0 + $0xd0] sm:$0xff]
  %v66 = vld [vmem:[%s0 + $0xd8] sm:$0xff]
  %v67 = vld [vmem:[%s0 + $0xe0] sm:$0xff]
  %v68 = vld [vmem:[%s0 + $0xe8] sm:$0xff]
  %v69 = vld [vmem:[%s0 + $0xf0] sm:$0xff]
  %v70 = vld [vmem:[%s0 + $0xf8] sm:$0xff]
  %v71 = vld [vmem:[%s0 + $0x100] sm:$0xff]
  %v72 = vld [vmem:[%s0 + $0x108] sm:$0xff]
  %v73 = vld [vmem:[%s0 + $0x110] sm:$0xff]
  %v74 = vld [vmem:[%s0 + $0x118] sm:$0xff]
  %v75 = vld [vmem:[%s0 + $0x120] sm:$0xff]
  %v76 = vld [vmem:[%s0 + $0x128] sm:$0xff]
  %v77 = vld [vmem:[%s0 + $0x130] sm:$0xff]
  %v78 = vld [vmem:[%s0 + $0x138] sm:$0xff]
  %v79 = vld [vmem:[%s0 + $0x140] sm:$0xff]
  %v80 = vld [vmem:[%s0 + $0x148] sm:$0xff]
  %v81 = vld [vmem:[%s0 + $0x150] sm:$0xff]
  %v82 = vld [vmem:[%s0 + $0x158] sm:$0xff]
  %v83 = vld [vmem:[%s0 + $0x160] sm:$0xff]
  %v84 = vld [vmem:[%s0 + $0x168] sm:$0xff]
  %v85 = vld [vmem:[%s0 + $0x170] sm:$0xff]
  %v86 = vld [vmem:[%s0 + $0x178] sm:$0xff]
  %v87 = vld [vmem:[%s0 + $0x180] sm:$0xff]
  %v88 = vld [vmem:[%s0 + $0x188] sm:$0xff]
  %v89 = vld [vmem:[%s0 + $0x190] sm:$0xff]
  %v90 = vld [vmem:[%s0 + $0x198] sm:$0xff]
  %v91 = vld [vmem:[%s0 + $0x1a0] sm:$0xff]
  %v92 = vld [vmem:[%s0 + $0x1a8] sm:$0xff]
  %v93 = vld [vmem:[%s0 + $0x1b0] sm:$0xff]
  %v94 = vld [vmem:[%s0 + $0x1b8] sm:$0xff]
  %v95 = vld [vmem:[%s0 + $0x1c0] sm:$0xff]
  %v96 = vld [vmem:[%s0 + $0x1c8] sm:$0xff]
  %v97 = vld [vmem:[%s0 + $0x1d0] sm:$0xff]
  %v98 = vld [vmem:[%s0 + $0x1d8] sm:$0xff]
  %v99 = vld [vmem:[%s0 + $0x1e0] sm:$0xff]
  %v100 = vld [vmem:[%s0 + $0x1e8] sm:$0xff]
  %v101 = vld [vmem:[%s0 + $0x1f0] sm:$0xff]
  %v102 = vld [vmem:[%s0 + $0x1f8] sm:$0xff]
  %v103 = vld [vmem:[%s1] sm:$0xff]
  %v104 = vld [vmem:[%s1 + $0x8] sm:$0xff]
  %v105 = vld [vmem:[%s1 + $0x10] sm:$0xff]
  %v106 = vld [vmem:[%s1 + $0x18] sm:$0xff]
  %v107 = vld [vmem:[%s1 + $0x20] sm:$0xff]
  %v108 = vld [vmem:[%s1 + $0x28] sm:$0xff]
  %v109 = vld [vmem:[%s1 + $0x30] sm:$0xff]
  %v110 = vld [vmem:[%s1 + $0x38] sm:$0xff]
  %v111 = vld [vmem:[%s1 + $0x40] sm:$0xff]
  %v112 = vld [vmem:[%s1 + $0x48] sm:$0xff]
  %v113 = vld [vmem:[%s1 + $0x50] sm:$0xff]
  %v114 = vld [vmem:[%s1 + $0x58] sm:$0xff]
  %v115 = vld [vmem:[%s1 + $0x60] sm:$0xff]
  %v116 = vld [vmem:[%s1 + $0x68] sm:$0xff]
  %v117 = vld [vmem:[%s1 + $0x70] sm:$0xff]
  %v118 = vld [vmem:[%s1 + $0x78] sm:$0xff]
  %v119 = vld [vmem:[%s1 + $0x80] sm:$0xff]
  %v120 = vld [vmem:[%s1 + $0x88] sm:$0xff]
  %v121 = vld [vmem:[%s1 + $0x90] sm:$0xff]
  %v122 = vld [vmem:[%s1 + $0x98] sm:$0xff]
  %v123 = vld [vmem:[%s1 + $0xa0] sm:$0xff]
  %v124 = vld [vmem:[%s1 + $0xa8] sm:$0xff]
  %v125 = vld [vmem:[%s1 + $0xb0] sm:$0xff]
  %v126 = vld [vmem:[%s1 + $0xb8] sm:$0xff]
  %v127 = vld [vmem:[%s1 + $0xc0] sm:$0xff]
  %v128 = vld [vmem:[%s1 + $0xc8] sm:$0xff]
  %v129 = vld [vmem:[%s1 + $0xd0] sm:$0xff]
  %v130 = vld [vmem:[%s1 + $0xd8] sm:$0xff]
  %v131 = vld [vmem:[%s1 + $0xe0] sm:$0xff]
  %v132 = vld [vmem:[%s1 + $0xe8] sm:$0xff]
  %v133 = vld [vmem:[%s1 + $0xf0] sm:$0xff]
  %v134 = vld [vmem:[%s1 + $0xf8] sm:$0xff]
  %v135 = vld [vmem:[%s1 + $0x100] sm:$0xff]
  %v136 = vld [vmem:[%s1 + $0x108] sm:$0xff]
  %v137 = vld [vmem:[%s1 + $0x110] sm:$0xff]
  %v138 = vld [vmem:[%s1 + $0x118] sm:$0xff]
  %v139 = vld [vmem:[%s1 + $0x120] sm:$0xff]
  %v140 = vld [vmem:[%s1 + $0x128] sm:$0xff]
  %v141 = vld [vmem:[%s1 + $0x130] sm:$0xff]
  %v142 = vld [vmem:[%s1 + $0x138] sm:$0xff]
  %v143 = vld [vmem:[%s1 + $0x140] sm:$0xff]
  %v144 = vld [vmem:[%s1 + $0x148] sm:$0xff]
  %v145 = vld [vmem:[%s1 + $0x150] sm:$0xff]
  %v146 = vld [vmem:[%s1 + $0x158] sm:$0xff]
  %v147 = vld [vmem:[%s1 + $0x160] sm:$0xff]
  %v148 = vld [vmem:[%s1 + $0x168] sm:$0xff]
  %v149 = vld [vmem:[%s1 + $0x170] sm:$0xff]
  %v150 = vld [vmem:[%s1 + $0x178] sm:$0xff]
  %v151 = vld [vmem:[%s1 + $0x180] sm:$0xff]
  %v152 = vld [vmem:[%s1 + $0x188] sm:$0xff]
  %v153 = vld [vmem:[%s1 + $0x190] sm:$0xff]
  %v154 = vld [vmem:[%s1 + $0x198] sm:$0xff]
  %v155 = vld [vmem:[%s1 + $0x1a0] sm:$0xff]
  %v156 = vld [vmem:[%s1 + $0x1a8] sm:$0xff]
  %v157 = vld [vmem:[%s1 + $0x1b0] sm:$0xff]
  %v158 = vld [vmem:[%s1 + $0x1b8] sm:$0xff]
  %v159 = vld [vmem:[%s1 + $0x1c0] sm:$0xff]
  %v160 = vld [vmem:[%s1 + $0x1c8] sm:$0xff]
  %v161 = vld [vmem:[%s1 + $0x1d0] sm:$0xff]
  %v162 = vld [vmem:[%s1 + $0x1d8] sm:$0xff]
  %v227 = vunpack.c.l.b16 %v39
  %v228 = vunpack.c.h.b16 %v39
  %v229 = vunpack.c.l.b16 %v40
  %v230 = vunpack.c.h.b16 %v40
  %v231 = vunpack.c.l.b16 %v41
  %v232 = vunpack.c.h.b16 %v41
  %v233 = vunpack.c.l.b16 %v42
  %v234 = vunpack.c.h.b16 %v42
  %v235 = vunpack.c.l.b16 %v43
  %v236 = vunpack.c.h.b16 %v43
  %v237 = vunpack.c.l.b16 %v44
  %v238 = vunpack.c.h.b16 %v44
  %v239 = vunpack.c.l.b16 %v45
  %v240 = vunpack.c.h.b16 %v45
  %v241 = vunpack.c.l.b16 %v46
  %v242 = vunpack.c.h.b16 %v46
  %v243 = vunpack.c.l.b16 %v47
  %v244 = vunpack.c.h.b16 %v47
  %v245 = vunpack.c.l.b16 %v48
  %v246 = vunpack.c.h.b16 %v48
  %v247 = vunpack.c.l.b16 %v49
  %v248 = vunpack.c.h.b16 %v49
  %v249 = vunpack.c.l.b16 %v50
  %v250 = vunpack.c.h.b16 %v50
  %v251 = vunpack.c.l.b16 %v51
  %v252 = vunpack.c.h.b16 %v51
  %v253 = vunpack.c.l.b16 %v52
  %v254 = vunpack.c.h.b16 %v52
  %v255 = vunpack.c.l.b16 %v53
  %v256 = vunpack.c.h.b16 %v53
  %v257 = vunpack.c.l.b16 %v54
  %v258 = vunpack.c.h.b16 %v54
  %v259 = vunpack.c.l.b16 %v55
  %v260 = vunpack.c.h.b16 %v55
  %v261 = vunpack.c.l.b16 %v56
  %v262 = vunpack.c.h.b16 %v56
  %v263 = vunpack.c.l.b16 %v57
  %v264 = vunpack.c.h.b16 %v57
  %v265 = vunpack.c.l.b16 %v58
  %v266 = vunpack.c.h.b16 %v58
  %v267 = vunpack.c.l.b16 %v59
  %v268 = vunpack.c.h.b16 %v59
  %v269 = vunpack.c.l.b16 %v60
  %v270 = vunpack.c.h.b16 %v60
  %v271 = vunpack.c.l.b16 %v61
  %v272 = vunpack.c.h.b16 %v61
  %v273 = vunpack.c.l.b16 %v62
  %v274 = vunpack.c.h.b16 %v62
  %v275 = vunpack.c.l.b16 %v63
  %v276 = vunpack.c.h.b16 %v63
  %v277 = vunpack.c.l.b16 %v64
  %v278 = vunpack.c.h.b16 %v64
  %v279 = vunpack.c.l.b16 %v65
  %v280 = vunpack.c.h.b16 %v65
  %v281 = vunpack.c.l.b16 %v66
  %v282 = vunpack.c.h.b16 %v66
  %v283 = vunpack.c.l.b16 %v67
  %v284 = vunpack.c.h.b16 %v67
  %v285 = vunpack.c.l.b16 %v68
  %v286 = vunpack.c.h.b16 %v68
  %v287 = vunpack.c.l.b16 %v69
  %v288 = vunpack.c.h.b16 %v69
  %v289 = vunpack.c.l.b16 %v70
  %v290 = vunpack.c.h.b16 %v70
  %v291 = vunpack.c.l.b16 %v71
  %v292 = vunpack.c.h.b16 %v71
  %v293 = vunpack.c.l.b16 %v72
  %v294 = vunpack.c.h.b16 %v72
  %v295 = vunpack.c.l.b16 %v73
  %v296 = vunpack.c.h.b16 %v73
  %v297 = vunpack.c.l.b16 %v74
  %v298 = vunpack.c.h.b16 %v74
  %v299 = vunpack.c.l.b16 %v75
  %v300 = vunpack.c.h.b16 %v75
  %v301 = vunpack.c.l.b16 %v76
  %v302 = vunpack.c.h.b16 %v76
  %v303 = vunpack.c.l.b16 %v77
  %v304 = vunpack.c.h.b16 %v77
  %v305 = vunpack.c.l.b16 %v78
  %v306 = vunpack.c.h.b16 %v78
  %v307 = vunpack.c.l.b16 %v79
  %v308 = vunpack.c.h.b16 %v79
  %v309 = vunpack.c.l.b16 %v80
  %v310 = vunpack.c.h.b16 %v80
  %v311 = vunpack.c.l.b16 %v81
  %v312 = vunpack.c.h.b16 %v81
  %v313 = vunpack.c.l.b16 %v82
  %v314 = vunpack.c.h.b16 %v82
  %v315 = vunpack.c.l.b16 %v83
  %v316 = vunpack.c.h.b16 %v83
  %v317 = vunpack.c.l.b16 %v84
  %v318 = vunpack.c.h.b16 %v84
  %v319 = vunpack.c.l.b16 %v85
  %v320 = vunpack.c.h.b16 %v85
  %v321 = vunpack.c.l.b16 %v86
  %v322 = vunpack.c.h.b16 %v86
  %v323 = vunpack.c.l.b16 %v87
  %v324 = vunpack.c.h.b16 %v87
  %v325 = vunpack.c.l.b16 %v88
  %v326 = vunpack.c.h.b16 %v88
  %v327 = vunpack.c.l.b16 %v89
  %v328 = vunpack.c.h.b16 %v89
  %v329 = vunpack.c.l.b16 %v90
  %v330 = vunpack.c.h.b16 %v90
  %v331 = vunpack.c.l.b16 %v91
  %v332 = vunpack.c.h.b16 %v91
  %v333 = vunpack.c.l.b16 %v92
  %v334 = vunpack.c.h.b16 %v92
  %v335 = vunpack.c.l.b16 %v93
  %v336 = vunpack.c.h.b16 %v93
  %v337 = vunpack.c.l.b16 %v94
  %v338 = vunpack.c.h.b16 %v94
  %v339 = vunpack.c.l.b16 %v95
  %v340 = vunpack.c.h.b16 %v95
  %v341 = vunpack.c.l.b16 %v96
  %v342 = vunpack.c.h.b16 %v96
  %v343 = vunpack.c.l.b16 %v97
  %v344 = vunpack.c.h.b16 %v97
  %v345 = vunpack.c.l.b16 %v98
  %v346 = vunpack.c.h.b16 %v98
  %v347 = vunpack.c.l.b16 %v99
  %v348 = vunpack.c.h.b16 %v99
  %v349 = vunpack.c.l.b16 %v100
  %v350 = vunpack.c.h.b16 %v100
  %v351 = vunpack.c.l.b16 %v101
  %v352 = vunpack.c.h.b16 %v101
  %v353 = vunpack.c.l.b16 %v102
  %v354 = vunpack.c.h.b16 %v102
  %v355 = vpack.c.b16 %v231, %v227
  %v356 = vpack.c.b16 %v232, %v228
  %v357 = vpack.c.b16 %v233, %v229
  %v358 = vpack.c.b16 %v234, %v230
  %v359 = vpack.c.b16 %v239, %v235
  %v360 = vpack.c.b16 %v240, %v236
  %v361 = vpack.c.b16 %v241, %v237
  %v362 = vpack.c.b16 %v242, %v238
  %v363 = vpack.c.b16 %v247, %v243
  %v364 = vpack.c.b16 %v248, %v244
  %v365 = vpack.c.b16 %v249, %v245
  %v366 = vpack.c.b16 %v250, %v246
  %v367 = vpack.c.b16 %v255, %v251
  %v368 = vpack.c.b16 %v256, %v252
  %v369 = vpack.c.b16 %v257, %v253
  %v370 = vpack.c.b16 %v258, %v254
  %v371 = vpack.c.b16 %v263, %v259
  %v372 = vpack.c.b16 %v264, %v260
  %v373 = vpack.c.b16 %v265, %v261
  %v374 = vpack.c.b16 %v266, %v262
  %v375 = vpack.c.b16 %v271, %v267
  %v376 = vpack.c.b16 %v272, %v268
  %v377 = vpack.c.b16 %v273, %v269
  %v378 = vpack.c.b16 %v274, %v270
  %v379 = vpack.c.b16 %v279, %v275
  %v380 = vpack.c.b16 %v280, %v276
  %v381 = vpack.c.b16 %v281, %v277
  %v382 = vpack.c.b16 %v282, %v278
  %v383 = vpack.c.b16 %v287, %v283
  %v384 = vpack.c.b16 %v288, %v284
  %v385 = vpack.c.b16 %v289, %v285
  %v386 = vpack.c.b16 %v290, %v286
  %v387 = vpack.c.b16 %v295, %v291
  %v388 = vpack.c.b16 %v296, %v292
  %v389 = vpack.c.b16 %v297, %v293
  %v390 = vpack.c.b16 %v298, %v294
  %v391 = vpack.c.b16 %v303, %v299
  %v392 = vpack.c.b16 %v304, %v300
  %v393 = vpack.c.b16 %v305, %v301
  %v394 = vpack.c.b16 %v306, %v302
  %v395 = vpack.c.b16 %v311, %v307
  %v396 = vpack.c.b16 %v312, %v308
  %v397 = vpack.c.b16 %v313, %v309
  %v398 = vpack.c.b16 %v314, %v310
  %v399 = vpack.c.b16 %v319, %v315
  %v400 = vpack.c.b16 %v320, %v316
  %v401 = vpack.c.b16 %v321, %v317
  %v402 = vpack.c.b16 %v322, %v318
  %v403 = vpack.c.b16 %v327, %v323
  %v404 = vpack.c.b16 %v328, %v324
  %v405 = vpack.c.b16 %v329, %v325
  %v406 = vpack.c.b16 %v330, %v326
  %v407 = vpack.c.b16 %v335, %v331
  %v408 = vpack.c.b16 %v336, %v332
  %v409 = vpack.c.b16 %v337, %v333
  %v410 = vpack.c.b16 %v338, %v334
  %v411 = vpack.c.b16 %v343, %v339
  %v412 = vpack.c.b16 %v344, %v340
  %v413 = vpack.c.b16 %v345, %v341
  %v414 = vpack.c.b16 %v346, %v342
  %v415 = vpack.c.b16 %v351, %v347
  %v416 = vpack.c.b16 %v352, %v348
  %v417 = vpack.c.b16 %v353, %v349
  %v418 = vpack.c.b16 %v354, %v350
  %v527 = vunpack.c.l.b16 %v103
  %v528 = vunpack.c.h.b16 %v103
  %v529 = vunpack.c.l.b16 %v104
  %v530 = vunpack.c.h.b16 %v104
  %v531 = vunpack.c.l.b16 %v105
  %v532 = vunpack.c.h.b16 %v105
  %v533 = vunpack.c.l.b16 %v106
  %v534 = vunpack.c.h.b16 %v106
  %v535 = vunpack.c.l.b16 %v107
  %v536 = vunpack.c.h.b16 %v107
  %v537 = vunpack.c.l.b16 %v108
  %v538 = vunpack.c.h.b16 %v108
  %v539 = vunpack.c.l.b16 %v109
  %v540 = vunpack.c.h.b16 %v109
  %v541 = vunpack.c.l.b16 %v110
  %v542 = vunpack.c.h.b16 %v110
  %v543 = vunpack.c.l.b16 %v111
  %v544 = vunpack.c.h.b16 %v111
  %v545 = vunpack.c.l.b16 %v112
  %v546 = vunpack.c.h.b16 %v112
  %v547 = vunpack.c.l.b16 %v113
  %v548 = vunpack.c.h.b16 %v113
  %v549 = vunpack.c.l.b16 %v114
  %v550 = vunpack.c.h.b16 %v114
  %v551 = vunpack.c.l.b16 %v115
  %v552 = vunpack.c.h.b16 %v115
  %v553 = vunpack.c.l.b16 %v116
  %v554 = vunpack.c.h.b16 %v116
  %v555 = vunpack.c.l.b16 %v117
  %v556 = vunpack.c.h.b16 %v117
  %v557 = vunpack.c.l.b16 %v118
  %v558 = vunpack.c.h.b16 %v118
  %v559 = vunpack.c.l.b16 %v119
  %v560 = vunpack.c.h.b16 %v119
  %v561 = vunpack.c.l.b16 %v120
  %v562 = vunpack.c.h.b16 %v120
  %v563 = vunpack.c.l.b16 %v121
  %v564 = vunpack.c.h.b16 %v121
  %v565 = vunpack.c.l.b16 %v122
  %v566 = vunpack.c.h.b16 %v122
  %v567 = vunpack.c.l.b16 %v123
  %v568 = vunpack.c.h.b16 %v123
  %v569 = vunpack.c.l.b16 %v124
  %v570 = vunpack.c.h.b16 %v124
  %v571 = vunpack.c.l.b16 %v125
  %v572 = vunpack.c.h.b16 %v125
  %v573 = vunpack.c.l.b16 %v126
  %v574 = vunpack.c.h.b16 %v126
  %v575 = vunpack.c.l.b16 %v127
  %v576 = vunpack.c.h.b16 %v127
  %v577 = vunpack.c.l.b16 %v128
  %v578 = vunpack.c.h.b16 %v128
  %v579 = vunpack.c.l.b16 %v129
  %v580 = vunpack.c.h.b16 %v129
  %v581 = vunpack.c.l.b16 %v130
  %v582 = vunpack.c.h.b16 %v130
  %v583 = vunpack.c.l.b16 %v131
  %v584 = vunpack.c.h.b16 %v131
  %v585 = vunpack.c.l.b16 %v132
  %v586 = vunpack.c.h.b16 %v132
  %v587 = vunpack.c.l.b16 %v133
  %v588 = vunpack.c.h.b16 %v133
  %v589 = vunpack.c.l.b16 %v134
  %v590 = vunpack.c.h.b16 %v134
  %v591 = vunpack.c.l.b16 %v135
  %v592 = vunpack.c.h.b16 %v135
  %v593 = vunpack.c.l.b16 %v136
  %v594 = vunpack.c.h.b16 %v136
  %v595 = vunpack.c.l.b16 %v137
  %v596 = vunpack.c.h.b16 %v137
  %v597 = vunpack.c.l.b16 %v138
  %v598 = vunpack.c.h.b16 %v138
  %v599 = vunpack.c.l.b16 %v139
  %v600 = vunpack.c.h.b16 %v139
  %v601 = vunpack.c.l.b16 %v140
  %v602 = vunpack.c.h.b16 %v140
  %v603 = vunpack.c.l.b16 %v141
  %v604 = vunpack.c.h.b16 %v141
  %v605 = vunpack.c.l.b16 %v142
  %v606 = vunpack.c.h.b16 %v142
  %v607 = vunpack.c.l.b16 %v143
  %v608 = vunpack.c.h.b16 %v143
  %v609 = vunpack.c.l.b16 %v144
  %v610 = vunpack.c.h.b16 %v144
  %v611 = vunpack.c.l.b16 %v145
  %v612 = vunpack.c.h.b16 %v145
  %v613 = vunpack.c.l.b16 %v146
  %v614 = vunpack.c.h.b16 %v146
  %v615 = vunpack.c.l.b16 %v147
  %v616 = vunpack.c.h.b16 %v147
  %v617 = vunpack.c.l.b16 %v148
  %v618 = vunpack.c.h.b16 %v148
  %v619 = vunpack.c.l.b16 %v149
  %v620 = vunpack.c.h.b16 %v149
  %v621 = vunpack.c.l.b16 %v150
  %v622 = vunpack.c.h.b16 %v150
  %v623 = vunpack.c.l.b16 %v151
  %v624 = vunpack.c.h.b16 %v151
  %v625 = vunpack.c.l.b16 %v152
  %v626 = vunpack.c.h.b16 %v152
  %v627 = vunpack.c.l.b16 %v153
  %v628 = vunpack.c.h.b16 %v153
  %v629 = vunpack.c.l.b16 %v154
  %v630 = vunpack.c.h.b16 %v154
  %v631 = vunpack.c.l.b16 %v155
  %v632 = vunpack.c.h.b16 %v155
  %v633 = vunpack.c.l.b16 %v156
  %v634 = vunpack.c.h.b16 %v156
  %v635 = vunpack.c.l.b16 %v157
  %v636 = vunpack.c.h.b16 %v157
  %v637 = vunpack.c.l.b16 %v158
  %v638 = vunpack.c.h.b16 %v158
  %v639 = vunpack.c.l.b16 %v159
  %v640 = vunpack.c.h.b16 %v159
  %v641 = vunpack.c.l.b16 %v160
  %v642 = vunpack.c.h.b16 %v160
  %v643 = vunpack.c.l.b16 %v161
  %v644 = vunpack.c.h.b16 %v161
  %v645 = vunpack.c.l.b16 %v162
  %v646 = vunpack.c.h.b16 %v162
  %v647 = vpack.c.b16 %v529, %v527
  %v648 = vpack.c.b16 %v530, %v528
  %v649 = vpack.c.b16 %v533, %v531
  %v650 = vpack.c.b16 %v534, %v532
  %v651 = vpack.c.b16 %v537, %v535
  %v652 = vpack.c.b16 %v538, %v536
  %v653 = vpack.c.b16 %v541, %v539
  %v654 = vpack.c.b16 %v542, %v540
  %v655 = vpack.c.b16 %v545, %v543
  %v656 = vpack.c.b16 %v546, %v544
  %v657 = vpack.c.b16 %v549, %v547
  %v658 = vpack.c.b16 %v550, %v548
  %v659 = vpack.c.b16 %v553, %v551
  %v660 = vpack.c.b16 %v554, %v552
  %v661 = vpack.c.b16 %v557, %v555
  %v662 = vpack.c.b16 %v558, %v556
  %v663 = vpack.c.b16 %v561, %v559
  %v664 = vpack.c.b16 %v562, %v560
  %v665 = vpack.c.b16 %v565, %v563
  %v666 = vpack.c.b16 %v566, %v564
  %v667 = vpack.c.b16 %v569, %v567
  %v668 = vpack.c.b16 %v570, %v568
  %v669 = vpack.c.b16 %v573, %v571
  %v670 = vpack.c.b16 %v574, %v572
  %v671 = vpack.c.b16 %v577, %v575
  %v672 = vpack.c.b16 %v578, %v576
  %v673 = vpack.c.b16 %v581, %v579
  %v674 = vpack.c.b16 %v582, %v580
  %v675 = vpack.c.b16 %v585, %v583
  %v676 = vpack.c.b16 %v586, %v584
  %v677 = vpack.c.b16 %v589, %v587
  %v678 = vpack.c.b16 %v590, %v588
  %v679 = vpack.c.b16 %v593, %v591
  %v680 = vpack.c.b16 %v594, %v592
  %v681 = vpack.c.b16 %v597, %v595
  %v682 = vpack.c.b16 %v598, %v596
  %v683 = vpack.c.b16 %v601, %v599
  %v684 = vpack.c.b16 %v602, %v600
  %v685 = vpack.c.b16 %v605, %v603
  %v686 = vpack.c.b16 %v606, %v604
  %v687 = vpack.c.b16 %v609, %v607
  %v688 = vpack.c.b16 %v610, %v608
  %v689 = vpack.c.b16 %v613, %v611
  %v690 = vpack.c.b16 %v614, %v612
  %v691 = vpack.c.b16 %v617, %v615
  %v692 = vpack.c.b16 %v618, %v616
  %v693 = vpack.c.b16 %v621, %v619
  %v694 = vpack.c.b16 %v622, %v620
  %v695 = vpack.c.b16 %v625, %v623
  %v696 = vpack.c.b16 %v626, %v624
  %v697 = vpack.c.b16 %v629, %v627
  %v698 = vpack.c.b16 %v630, %v628
  %v699 = vpack.c.b16 %v633, %v631
  %v700 = vpack.c.b16 %v634, %v632
  %v701 = vpack.c.b16 %v637, %v635
  %v702 = vpack.c.b16 %v638, %v636
  %v703 = vpack.c.b16 %v641, %v639
  %v704 = vpack.c.b16 %v642, %v640
  %v705 = vpack.c.b16 %v645, %v643
  %v706 = vpack.c.b16 %v646, %v644
  %vm767 = vcmask 785408
  %v769 = vsel %vm767, %v358, 0
  %v772 = vsel %vm767, %v362, 0
  %v775 = vsel %vm767, %v366, 0
  %v778 = vsel %vm767, %v370, 0
  %v781 = vsel %vm767, %v374, 0
  %v784 = vsel %vm767, %v378, 0
  %v787 = vsel %vm767, %v382, 0
  %v790 = vsel %vm767, %v386, 0
  %v793 = vsel %vm767, %v390, 0
  %v796 = vsel %vm767, %v394, 0
  %v799 = vsel %vm767, %v398, 0
  %v802 = vsel %vm767, %v402, 0
  %v805 = vsel %vm767, %v406, 0
  %v808 = vsel %vm767, %v410, 0
  %v811 = vsel %vm767, %v414, 0
  %v814 = vsel %vm767, %v418, 0
  %816 = vmatprep.subr.bf16.mxu0 %v648
  %817 = vmatpush1.bf16.msra.mxu0 %v647
  %818 = vmatprep.subr.bf16.mxu0 %v650
  %819 = vmatpush1.bf16.msra.mxu0 %v649
  %820 = vmatprep.subr.bf16.mxu0 %v652
  %821 = vmatpush1.bf16.msra.mxu0 %v651
  %822 = vmatprep.subr.bf16.mxu0 %v654
  %823 = vmatpush1.bf16.msra.mxu0 %v653
  %824 = vmatprep.subr.bf16.mxu0 %v656
  %825 = vmatpush1.bf16.msra.mxu0 %v655
  %826 = vmatprep.subr.bf16.mxu0 %v658
  %827 = vmatpush1.bf16.msra.mxu0 %v657
  %828 = vmatprep.subr.bf16.mxu0 %v660
  %829 = vmatpush1.bf16.msra.mxu0 %v659
  %830 = vmatprep.subr.bf16.mxu0 %v662
  %831 = vmatpush1.bf16.msra.mxu0 %v661
  %832 = vmatprep.subr.bf16.mxu0 %v664
  %833 = vmatpush1.bf16.msra.mxu0 %v663
  %834 = vmatprep.subr.bf16.mxu0 %v666
  %835 = vmatpush1.bf16.msra.mxu0 %v665
  %836 = vmatprep.subr.bf16.mxu0 %v668
  %837 = vmatpush1.bf16.msra.mxu0 %v667
  %838 = vmatprep.subr.bf16.mxu0 %v670
  %839 = vmatpush1.bf16.msra.mxu0 %v669
  %840 = vmatprep.subr.bf16.mxu0 %v672
  %841 = vmatpush1.bf16.msra.mxu0 %v671
  %842 = vmatprep.subr.bf16.mxu0 %v674
  %843 = vmatpush1.bf16.msra.mxu0 %v673
  %844 = vmatprep.subr.bf16.mxu0 %v676
  %845 = vmatpush1.bf16.msra.mxu0 %v675
  %846 = vmatprep.subr.bf16.mxu0 %v678
  %847 = vmatpush1.bf16.msra.mxu0 %v677
  %848 = vmatprep.mubr.bf16.mxu0 %v356
  %849 = vmatmul.mubr.bf16.gmra.mrb[0].mxu0 %v355
  %v850 = vpop.f32.mrb[0].mxu0
  %v851 = vadd.f32 0.0, %v850
  %v852 = vpop.f32.mrb[0].mxu0
  %v853 = vadd.f32 0.0, %v852
  %v854 = vpop.f32.mrb[0].mxu0
  %v855 = vadd.f32 0.0, %v854
  %v856 = vpop.f32.mrb[0].mxu0
  %v857 = vadd.f32 0.0, %v856
  %858 = vmatprep.mubr.bf16.mxu0 %v360
  %859 = vmatmul.mubr.bf16.gmra.mrb[0].mxu0 %v359
  %v860 = vpop.f32.mrb[0].mxu0
  %v861 = vadd.f32 0.0, %v860
  %v862 = vpop.f32.mrb[0].mxu0
  %v863 = vadd.f32 0.0, %v862
  %v864 = vpop.f32.mrb[0].mxu0
  %v865 = vadd.f32 0.0, %v864
  %v866 = vpop.f32.mrb[0].mxu0
  %v867 = vadd.f32 0.0, %v866
  %868 = vmatprep.mubr.bf16.mxu0 %v364
  %869 = vmatmul.mubr.bf16.gmra.mrb[0].mxu0 %v363
  %v870 = vpop.f32.mrb[0].mxu0
  %v871 = vadd.f32 0.0, %v870
  %v872 = vpop.f32.mrb[0].mxu0
  %v873 = vadd.f32 0.0, %v872
  %v874 = vpop.f32.mrb[0].mxu0
  %v875 = vadd.f32 0.0, %v874
  %v876 = vpop.f32.mrb[0].mxu0
  %v877 = vadd.f32 0.0, %v876
  %878 = vmatprep.mubr.bf16.mxu0 %v368
  %879 = vmatmul.mubr.bf16.gmra.mrb[0].mxu0 %v367
  %v880 = vpop.f32.mrb[0].mxu0
  %v881 = vadd.f32 0.0, %v880
  %v882 = vpop.f32.mrb[0].mxu0
  %v883 = vadd.f32 0.0, %v882
  %v884 = vpop.f32.mrb[0].mxu0
  %v885 = vadd.f32 0.0, %v884
  %v886 = vpop.f32.mrb[0].mxu0
  %v887 = vadd.f32 0.0, %v886
  %888 = vmatprep.mubr.bf16.mxu0 %v372
  %889 = vmatmul.mubr.bf16.gmra.mrb[0].mxu0 %v371
  %v890 = vpop.f32.mrb[0].mxu0
  %v891 = vadd.f32 0.0, %v890
  %v892 = vpop.f32.mrb[0].mxu0
  %v893 = vadd.f32 0.0, %v892
  %v894 = vpop.f32.mrb[0].mxu0
  %v895 = vadd.f32 0.0, %v894
  %v896 = vpop.f32.mrb[0].mxu0
  %v897 = vadd.f32 0.0, %v896
  %898 = vmatprep.mubr.bf16.mxu0 %v376
  %899 = vmatmul.mubr.bf16.gmra.mrb[0].mxu0 %v375
  %v900 = vpop.f32.mrb[0].mxu0
  %v901 = vadd.f32 0.0, %v900
  %v902 = vpop.f32.mrb[0].mxu0
  %v903 = vadd.f32 0.0, %v902
  %v904 = vpop.f32.mrb[0].mxu0
  %v905 = vadd.f32 0.0, %v904
  %v906 = vpop.f32.mrb[0].mxu0
  %v907 = vadd.f32 0.0, %v906
  %908 = vmatprep.mubr.bf16.mxu0 %v380
  %909 = vmatmul.mubr.bf16.gmra.mrb[0].mxu0 %v379
  %v910 = vpop.f32.mrb[0].mxu0
  %v911 = vadd.f32 0.0, %v910
  %v912 = vpop.f32.mrb[0].mxu0
  %v913 = vadd.f32 0.0, %v912
  %v914 = vpop.f32.mrb[0].mxu0
  %v915 = vadd.f32 0.0, %v914
  %v916 = vpop.f32.mrb[0].mxu0
  %v917 = vadd.f32 0.0, %v916
  %918 = vmatprep.mubr.bf16.mxu0 %v384
  %919 = vmatmul.mubr.bf16.gmra.mrb[0].mxu0 %v383
  %v920 = vpop.f32.mrb[0].mxu0
  %v921 = vadd.f32 0.0, %v920
  %v922 = vpop.f32.mrb[0].mxu0
  %v923 = vadd.f32 0.0, %v922
  %v924 = vpop.f32.mrb[0].mxu0
  %v925 = vadd.f32 0.0, %v924
  %v926 = vpop.f32.mrb[0].mxu0
  %v927 = vadd.f32 0.0, %v926
  %928 = vmatprep.mubr.bf16.mxu0 %v388
  %929 = vmatmul.mubr.bf16.gmra.mrb[0].mxu0 %v387
  %v930 = vpop.f32.mrb[0].mxu0
  %v931 = vadd.f32 0.0, %v930
  %v932 = vpop.f32.mrb[0].mxu0
  %v933 = vadd.f32 0.0, %v932
  %v934 = vpop.f32.mrb[0].mxu0
  %v935 = vadd.f32 0.0, %v934
  %v936 = vpop.f32.mrb[0].mxu0
  %v937 = vadd.f32 0.0, %v936
  %938 = vmatprep.mubr.bf16.mxu0 %v392
  %939 = vmatmul.mubr.bf16.gmra.mrb[0].mxu0 %v391
  %v940 = vpop.f32.mrb[0].mxu0
  %v941 = vadd.f32 0.0, %v940
  %v942 = vpop.f32.mrb[0].mxu0
  %v943 = vadd.f32 0.0, %v942
  %v944 = vpop.f32.mrb[0].mxu0
  %v945 = vadd.f32 0.0, %v944
  %v946 = vpop.f32.mrb[0].mxu0
  %v947 = vadd.f32 0.0, %v946
  %948 = vmatprep.mubr.bf16.mxu0 %v396
  %949 = vmatmul.mubr.bf16.gmra.mrb[0].mxu0 %v395
  %v950 = vpop.f32.mrb[0].mxu0
  %v951 = vadd.f32 0.0, %v950
  %v952 = vpop.f32.mrb[0].mxu0
  %v953 = vadd.f32 0.0, %v952
  %v954 = vpop.f32.mrb[0].mxu0
  %v955 = vadd.f32 0.0, %v954
  %v956 = vpop.f32.mrb[0].mxu0
  %v957 = vadd.f32 0.0, %v956
  %958 = vmatprep.mubr.bf16.mxu0 %v400
  %959 = vmatmul.mubr.bf16.gmra.mrb[0].mxu0 %v399
  %v960 = vpop.f32.mrb[0].mxu0
  %v961 = vadd.f32 0.0, %v960
  %v962 = vpop.f32.mrb[0].mxu0
  %v963 = vadd.f32 0.0, %v962
  %v964 = vpop.f32.mrb[0].mxu0
  %v965 = vadd.f32 0.0, %v964
  %v966 = vpop.f32.mrb[0].mxu0
  %v967 = vadd.f32 0.0, %v966
  %968 = vmatprep.mubr.bf16.mxu0 %v404
  %969 = vmatmul.mubr.bf16.gmra.mrb[0].mxu0 %v403
  %v970 = vpop.f32.mrb[0].mxu0
  %v971 = vadd.f32 0.0, %v970
  %v972 = vpop.f32.mrb[0].mxu0
  %v973 = vadd.f32 0.0, %v972
  %v974 = vpop.f32.mrb[0].mxu0
  %v975 = vadd.f32 0.0, %v974
  %v976 = vpop.f32.mrb[0].mxu0
  %v977 = vadd.f32 0.0, %v976
  %978 = vmatprep.mubr.bf16.mxu0 %v408
  %979 = vmatmul.mubr.bf16.gmra.mrb[0].mxu0 %v407
  %v980 = vpop.f32.mrb[0].mxu0
  %v981 = vadd.f32 0.0, %v980
  %v982 = vpop.f32.mrb[0].mxu0
  %v983 = vadd.f32 0.0, %v982
  %v984 = vpop.f32.mrb[0].mxu0
  %v985 = vadd.f32 0.0, %v984
  %v986 = vpop.f32.mrb[0].mxu0
  %v987 = vadd.f32 0.0, %v986
  %988 = vmatprep.mubr.bf16.mxu0 %v412
  %989 = vmatmul.mubr.bf16.gmra.mrb[0].mxu0 %v411
  %v990 = vpop.f32.mrb[0].mxu0
  %v991 = vadd.f32 0.0, %v990
  %v992 = vpop.f32.mrb[0].mxu0
  %v993 = vadd.f32 0.0, %v992
  %v994 = vpop.f32.mrb[0].mxu0
  %v995 = vadd.f32 0.0, %v994
  %v996 = vpop.f32.mrb[0].mxu0
  %v997 = vadd.f32 0.0, %v996
  %998 = vmatprep.mubr.bf16.mxu0 %v416
  %999 = vmatmul.mubr.bf16.gmra.mrb[0].mxu0 %v415
  %v1000 = vpop.f32.mrb[0].mxu0
  %v1001 = vadd.f32 0.0, %v1000
  %v1002 = vpop.f32.mrb[0].mxu0
  %v1003 = vadd.f32 0.0, %v1002
  %v1004 = vpop.f32.mrb[0].mxu0
  %v1005 = vadd.f32 0.0, %v1004
  %v1006 = vpop.f32.mrb[0].mxu0
  %v1007 = vadd.f32 0.0, %v1006
  %1008 = vdwg.mxu0
  %1009 = vmatprep.subr.bf16.mxu0 %v680
  %1010 = vmatpush1.bf16.msra.mxu0 %v679
  %1011 = vmatprep.subr.bf16.mxu0 %v682
  %1012 = vmatpush1.bf16.msra.mxu0 %v681
  %1013 = vmatprep.subr.bf16.mxu0 %v684
  %1014 = vmatpush1.bf16.msra.mxu0 %v683
  %1015 = vmatprep.subr.bf16.mxu0 %v686
  %1016 = vmatpush1.bf16.msra.mxu0 %v685
  %1017 = vmatprep.subr.bf16.mxu0 %v688
  %1018 = vmatpush1.bf16.msra.mxu0 %v687
  %1019 = vmatprep.subr.bf16.mxu0 %v690
  %1020 = vmatpush1.bf16.msra.mxu0 %v689
  %1021 = vmatprep.subr.bf16.mxu0 %v692
  %1022 = vmatpush1.bf16.msra.mxu0 %v691
  %1023 = vmatprep.subr.bf16.mxu0 %v694
  %1024 = vmatpush1.bf16.msra.mxu0 %v693
  %1025 = vmatprep.subr.bf16.mxu0 %v696
  %1026 = vmatpush1.bf16.msra.mxu0 %v695
  %1027 = vmatprep.subr.bf16.mxu0 %v698
  %1028 = vmatpush1.bf16.msra.mxu0 %v697
  %1029 = vmatprep.subr.bf16.mxu0 %v700
  %1030 = vmatpush1.bf16.msra.mxu0 %v699
  %1031 = vmatprep.subr.bf16.mxu0 %v702
  %1032 = vmatpush1.bf16.msra.mxu0 %v701
  %1033 = vmatprep.subr.bf16.mxu0 %v704
  %1034 = vmatpush1.bf16.msra.mxu0 %v703
  %1035 = vmatprep.subr.bf16.mxu0 %v706
  %1036 = vmatpush1.bf16.msra.mxu0 %v705
  %1037 = vmatprep.subr.bf16.mxu0 0
  %1038 = vmatpush1.bf16.msra.mxu0 0
  %1039 = vmatprep.subr.bf16.mxu0 0
  %1040 = vmatpush1.bf16.msra.mxu0 0
  %1041 = vmatprep.mubr.bf16.mxu0 %v769
  %1042 = vmatmul.mubr.bf16.gmra.mrb[0].mxu0 %v357
  %v1043 = vpop.f32.mrb[0].mxu0
  %v1044 = vadd.f32 %v851, %v1043
  %v1045 = vpop.f32.mrb[0].mxu0
  %v1046 = vadd.f32 %v853, %v1045
  %v1047 = vpop.f32.mrb[0].mxu0
  %v1048 = vadd.f32 %v855, %v1047
  %v1049 = vpop.f32.mrb[0].mxu0
  %v1050 = vadd.f32 %v857, %v1049
  %1051 = vmatprep.mubr.bf16.mxu0 %v772
  %1052 = vmatmul.mubr.bf16.gmra.mrb[0].mxu0 %v361
  %v1053 = vpop.f32.mrb[0].mxu0
  %v1054 = vadd.f32 %v861, %v1053
  %v1055 = vpop.f32.mrb[0].mxu0
  %v1056 = vadd.f32 %v863, %v1055
  %v1057 = vpop.f32.mrb[0].mxu0
  %v1058 = vadd.f32 %v865, %v1057
  %v1059 = vpop.f32.mrb[0].mxu0
  %v1060 = vadd.f32 %v867, %v1059
  %1061 = vmatprep.mubr.bf16.mxu0 %v775
  %1062 = vmatmul.mubr.bf16.gmra.mrb[0].mxu0 %v365
  %v1063 = vpop.f32.mrb[0].mxu0
  %v1064 = vadd.f32 %v871, %v1063
  %v1065 = vpop.f32.mrb[0].mxu0
  %v1066 = vadd.f32 %v873, %v1065
  %v1067 = vpop.f32.mrb[0].mxu0
  %v1068 = vadd.f32 %v875, %v1067
  %v1069 = vpop.f32.mrb[0].mxu0
  %v1070 = vadd.f32 %v877, %v1069
  %1071 = vmatprep.mubr.bf16.mxu0 %v778
  %1072 = vmatmul.mubr.bf16.gmra.mrb[0].mxu0 %v369
  %v1073 = vpop.f32.mrb[0].mxu0
  %v1074 = vadd.f32 %v881, %v1073
  %v1075 = vpop.f32.mrb[0].mxu0
  %v1076 = vadd.f32 %v883, %v1075
  %v1077 = vpop.f32.mrb[0].mxu0
  %v1078 = vadd.f32 %v885, %v1077
  %v1079 = vpop.f32.mrb[0].mxu0
  %v1080 = vadd.f32 %v887, %v1079
  %1081 = vmatprep.mubr.bf16.mxu0 %v781
  %1082 = vmatmul.mubr.bf16.gmra.mrb[0].mxu0 %v373
  %v1083 = vpop.f32.mrb[0].mxu0
  %v1084 = vadd.f32 %v891, %v1083
  %v1085 = vpop.f32.mrb[0].mxu0
  %v1086 = vadd.f32 %v893, %v1085
  %v1087 = vpop.f32.mrb[0].mxu0
  %v1088 = vadd.f32 %v895, %v1087
  %v1089 = vpop.f32.mrb[0].mxu0
  %v1090 = vadd.f32 %v897, %v1089
  %1091 = vmatprep.mubr.bf16.mxu0 %v784
  %1092 = vmatmul.mubr.bf16.gmra.mrb[0].mxu0 %v377
  %v1093 = vpop.f32.mrb[0].mxu0
  %v1094 = vadd.f32 %v901, %v1093
  %v1095 = vpop.f32.mrb[0].mxu0
  %v1096 = vadd.f32 %v903, %v1095
  %v1097 = vpop.f32.mrb[0].mxu0
  %v1098 = vadd.f32 %v905, %v1097
  %v1099 = vpop.f32.mrb[0].mxu0
  %v1100 = vadd.f32 %v907, %v1099
  %1101 = vmatprep.mubr.bf16.mxu0 %v787
  %1102 = vmatmul.mubr.bf16.gmra.mrb[0].mxu0 %v381
  %v1103 = vpop.f32.mrb[0].mxu0
  %v1104 = vadd.f32 %v911, %v1103
  %v1105 = vpop.f32.mrb[0].mxu0
  %v1106 = vadd.f32 %v913, %v1105
  %v1107 = vpop.f32.mrb[0].mxu0
  %v1108 = vadd.f32 %v915, %v1107
  %v1109 = vpop.f32.mrb[0].mxu0
  %v1110 = vadd.f32 %v917, %v1109
  %1111 = vmatprep.mubr.bf16.mxu0 %v790
  %1112 = vmatmul.mubr.bf16.gmra.mrb[0].mxu0 %v385
  %v1113 = vpop.f32.mrb[0].mxu0
  %v1114 = vadd.f32 %v921, %v1113
  %v1115 = vpop.f32.mrb[0].mxu0
  %v1116 = vadd.f32 %v923, %v1115
  %v1117 = vpop.f32.mrb[0].mxu0
  %v1118 = vadd.f32 %v925, %v1117
  %v1119 = vpop.f32.mrb[0].mxu0
  %v1120 = vadd.f32 %v927, %v1119
  %1121 = vmatprep.mubr.bf16.mxu0 %v793
  %1122 = vmatmul.mubr.bf16.gmra.mrb[0].mxu0 %v389
  %v1123 = vpop.f32.mrb[0].mxu0
  %v1124 = vadd.f32 %v931, %v1123
  %v1125 = vpop.f32.mrb[0].mxu0
  %v1126 = vadd.f32 %v933, %v1125
  %v1127 = vpop.f32.mrb[0].mxu0
  %v1128 = vadd.f32 %v935, %v1127
  %v1129 = vpop.f32.mrb[0].mxu0
  %v1130 = vadd.f32 %v937, %v1129
  %1131 = vmatprep.mubr.bf16.mxu0 %v796
  %1132 = vmatmul.mubr.bf16.gmra.mrb[0].mxu0 %v393
  %v1133 = vpop.f32.mrb[0].mxu0
  %v1134 = vadd.f32 %v941, %v1133
  %v1135 = vpop.f32.mrb[0].mxu0
  %v1136 = vadd.f32 %v943, %v1135
  %v1137 = vpop.f32.mrb[0].mxu0
  %v1138 = vadd.f32 %v945, %v1137
  %v1139 = vpop.f32.mrb[0].mxu0
  %v1140 = vadd.f32 %v947, %v1139
  %1141 = vmatprep.mubr.bf16.mxu0 %v799
  %1142 = vmatmul.mubr.bf16.gmra.mrb[0].mxu0 %v397
  %v1143 = vpop.f32.mrb[0].mxu0
  %v1144 = vadd.f32 %v951, %v1143
  %v1145 = vpop.f32.mrb[0].mxu0
  %v1146 = vadd.f32 %v953, %v1145
  %v1147 = vpop.f32.mrb[0].mxu0
  %v1148 = vadd.f32 %v955, %v1147
  %v1149 = vpop.f32.mrb[0].mxu0
  %v1150 = vadd.f32 %v957, %v1149
  %1151 = vmatprep.mubr.bf16.mxu0 %v802
  %1152 = vmatmul.mubr.bf16.gmra.mrb[0].mxu0 %v401
  %v1153 = vpop.f32.mrb[0].mxu0
  %v1154 = vadd.f32 %v961, %v1153
  %v1155 = vpop.f32.mrb[0].mxu0
  %v1156 = vadd.f32 %v963, %v1155
  %v1157 = vpop.f32.mrb[0].mxu0
  %v1158 = vadd.f32 %v965, %v1157
  %v1159 = vpop.f32.mrb[0].mxu0
  %v1160 = vadd.f32 %v967, %v1159
  %1161 = vmatprep.mubr.bf16.mxu0 %v805
  %1162 = vmatmul.mubr.bf16.gmra.mrb[0].mxu0 %v405
  %v1163 = vpop.f32.mrb[0].mxu0
  %v1164 = vadd.f32 %v971, %v1163
  %v1165 = vpop.f32.mrb[0].mxu0
  %v1166 = vadd.f32 %v973, %v1165
  %v1167 = vpop.f32.mrb[0].mxu0
  %v1168 = vadd.f32 %v975, %v1167
  %v1169 = vpop.f32.mrb[0].mxu0
  %v1170 = vadd.f32 %v977, %v1169
  %1171 = vmatprep.mubr.bf16.mxu0 %v808
  %1172 = vmatmul.mubr.bf16.gmra.mrb[0].mxu0 %v409
  %v1173 = vpop.f32.mrb[0].mxu0
  %v1174 = vadd.f32 %v981, %v1173
  %v1175 = vpop.f32.mrb[0].mxu0
  %v1176 = vadd.f32 %v983, %v1175
  %v1177 = vpop.f32.mrb[0].mxu0
  %v1178 = vadd.f32 %v985, %v1177
  %v1179 = vpop.f32.mrb[0].mxu0
  %v1180 = vadd.f32 %v987, %v1179
  %1181 = vmatprep.mubr.bf16.mxu0 %v811
  %1182 = vmatmul.mubr.bf16.gmra.mrb[0].mxu0 %v413
  %v1183 = vpop.f32.mrb[0].mxu0
  %v1184 = vadd.f32 %v991, %v1183
  %v1185 = vpop.f32.mrb[0].mxu0
  %v1186 = vadd.f32 %v993, %v1185
  %v1187 = vpop.f32.mrb[0].mxu0
  %v1188 = vadd.f32 %v995, %v1187
  %v1189 = vpop.f32.mrb[0].mxu0
  %v1190 = vadd.f32 %v997, %v1189
  %1191 = vmatprep.mubr.bf16.mxu0 %v814
  %1192 = vmatmul.mubr.bf16.gmra.mrb[0].mxu0 %v417
  %v1193 = vpop.f32.mrb[0].mxu0
  %v1194 = vadd.f32 %v1001, %v1193
  %v1195 = vpop.f32.mrb[0].mxu0
  %v1196 = vadd.f32 %v1003, %v1195
  %v1197 = vpop.f32.mrb[0].mxu0
  %v1198 = vadd.f32 %v1005, %v1197
  %v1199 = vpop.f32.mrb[0].mxu0
  %v1200 = vadd.f32 %v1007, %v1199
  %1201 = vdwg.mxu0
  %1266 = vrot.lane.b32.xlu0 %v1044, 44
  %v1267 = vpop.permute.xlu0 %1266
  %1268 = vrot.lane.b32.xlu0 %v1046, 44
  %v1269 = vpop.permute.xlu0 %1268
  %1270 = vrot.lane.b32.xlu0 %v1048, 44
  %v1271 = vpop.permute.xlu0 %1270
  %1272 = vrot.lane.b32.xlu0 %v1050, 44
  %v1273 = vpop.permute.xlu0 %1272
  %1274 = vrot.lane.b32.xlu0 %v1054, 44
  %v1275 = vpop.permute.xlu0 %1274
  %1276 = vrot.lane.b32.xlu0 %v1056, 44
  %v1277 = vpop.permute.xlu0 %1276
  %1278 = vrot.lane.b32.xlu0 %v1058, 44
  %v1279 = vpop.permute.xlu0 %1278
  %1280 = vrot.lane.b32.xlu0 %v1060, 44
  %v1281 = vpop.permute.xlu0 %1280
  %1282 = vrot.lane.b32.xlu0 %v1064, 44
  %v1283 = vpop.permute.xlu0 %1282
  %1284 = vrot.lane.b32.xlu0 %v1066, 44
  %v1285 = vpop.permute.xlu0 %1284
  %1286 = vrot.lane.b32.xlu0 %v1068, 44
  %v1287 = vpop.permute.xlu0 %1286
  %1288 = vrot.lane.b32.xlu0 %v1070, 44
  %v1289 = vpop.permute.xlu0 %1288
  %1290 = vrot.lane.b32.xlu0 %v1074, 44
  %v1291 = vpop.permute.xlu0 %1290
  %1292 = vrot.lane.b32.xlu0 %v1076, 44
  %v1293 = vpop.permute.xlu0 %1292
  %1294 = vrot.lane.b32.xlu0 %v1078, 44
  %v1295 = vpop.permute.xlu0 %1294
  %1296 = vrot.lane.b32.xlu0 %v1080, 44
  %v1297 = vpop.permute.xlu0 %1296
  %1298 = vrot.lane.b32.xlu0 %v1084, 44
  %v1299 = vpop.permute.xlu0 %1298
  %1300 = vrot.lane.b32.xlu0 %v1086, 44
  %v1301 = vpop.permute.xlu0 %1300
  %1302 = vrot.lane.b32.xlu0 %v1088, 44
  %v1303 = vpop.permute.xlu0 %1302
  %1304 = vrot.lane.b32.xlu0 %v1090, 44
  %v1305 = vpop.permute.xlu0 %1304
  %1306 = vrot.lane.b32.xlu0 %v1094, 44
  %v1307 = vpop.permute.xlu0 %1306
  %1308 = vrot.lane.b32.xlu0 %v1096, 44
  %v1309 = vpop.permute.xlu0 %1308
  %1310 = vrot.lane.b32.xlu0 %v1098, 44
  %v1311 = vpop.permute.xlu0 %1310
  %1312 = vrot.lane.b32.xlu0 %v1100, 44
  %v1313 = vpop.permute.xlu0 %1312
  %1314 = vrot.lane.b32.xlu0 %v1104, 44
  %v1315 = vpop.permute.xlu0 %1314
  %1316 = vrot.lane.b32.xlu0 %v1106, 44
  %v1317 = vpop.permute.xlu0 %1316
  %1318 = vrot.lane.b32.xlu0 %v1108, 44
  %v1319 = vpop.permute.xlu0 %1318
  %1320 = vrot.lane.b32.xlu0 %v1110, 44
  %v1321 = vpop.permute.xlu0 %1320
  %1322 = vrot.lane.b32.xlu0 %v1114, 44
  %v1323 = vpop.permute.xlu0 %1322
  %1324 = vrot.lane.b32.xlu0 %v1116, 44
  %v1325 = vpop.permute.xlu0 %1324
  %1326 = vrot.lane.b32.xlu0 %v1118, 44
  %v1327 = vpop.permute.xlu0 %1326
  %1328 = vrot.lane.b32.xlu0 %v1120, 44
  %v1329 = vpop.permute.xlu0 %1328
  %1330 = vrot.lane.b32.xlu0 %v1124, 44
  %v1331 = vpop.permute.xlu0 %1330
  %1332 = vrot.lane.b32.xlu0 %v1126, 44
  %v1333 = vpop.permute.xlu0 %1332
  %1334 = vrot.lane.b32.xlu0 %v1128, 44
  %v1335 = vpop.permute.xlu0 %1334
  %1336 = vrot.lane.b32.xlu0 %v1130, 44
  %v1337 = vpop.permute.xlu0 %1336
  %1338 = vrot.lane.b32.xlu0 %v1134, 44
  %v1339 = vpop.permute.xlu0 %1338
  %1340 = vrot.lane.b32.xlu0 %v1136, 44
  %v1341 = vpop.permute.xlu0 %1340
  %1342 = vrot.lane.b32.xlu0 %v1138, 44
  %v1343 = vpop.permute.xlu0 %1342
  %1344 = vrot.lane.b32.xlu0 %v1140, 44
  %v1345 = vpop.permute.xlu0 %1344
  %1346 = vrot.lane.b32.xlu0 %v1144, 44
  %v1347 = vpop.permute.xlu0 %1346
  %1348 = vrot.lane.b32.xlu0 %v1146, 44
  %v1349 = vpop.permute.xlu0 %1348
  %1350 = vrot.lane.b32.xlu0 %v1148, 44
  %v1351 = vpop.permute.xlu0 %1350
  %1352 = vrot.lane.b32.xlu0 %v1150, 44
  %v1353 = vpop.permute.xlu0 %1352
  %1354 = vrot.lane.b32.xlu0 %v1154, 44
  %v1355 = vpop.permute.xlu0 %1354
  %1356 = vrot.lane.b32.xlu0 %v1156, 44
  %v1357 = vpop.permute.xlu0 %1356
  %1358 = vrot.lane.b32.xlu0 %v1158, 44
  %v1359 = vpop.permute.xlu0 %1358
  %1360 = vrot.lane.b32.xlu0 %v1160, 44
  %v1361 = vpop.permute.xlu0 %1360
  %1362 = vrot.lane.b32.xlu0 %v1164, 44
  %v1363 = vpop.permute.xlu0 %1362
  %1364 = vrot.lane.b32.xlu0 %v1166, 44
  %v1365 = vpop.permute.xlu0 %1364
  %1366 = vrot.lane.b32.xlu0 %v1168, 44
  %v1367 = vpop.permute.xlu0 %1366
  %1368 = vrot.lane.b32.xlu0 %v1170, 44
  %v1369 = vpop.permute.xlu0 %1368
  %1370 = vrot.lane.b32.xlu0 %v1174, 44
  %v1371 = vpop.permute.xlu0 %1370
  %1372 = vrot.lane.b32.xlu0 %v1176, 44
  %v1373 = vpop.permute.xlu0 %1372
  %1374 = vrot.lane.b32.xlu0 %v1178, 44
  %v1375 = vpop.permute.xlu0 %1374
  %1376 = vrot.lane.b32.xlu0 %v1180, 44
  %v1377 = vpop.permute.xlu0 %1376
  %1378 = vrot.lane.b32.xlu0 %v1184, 44
  %v1379 = vpop.permute.xlu0 %1378
  %1380 = vrot.lane.b32.xlu0 %v1186, 44
  %v1381 = vpop.permute.xlu0 %1380
  %1382 = vrot.lane.b32.xlu0 %v1188, 44
  %v1383 = vpop.permute.xlu0 %1382
  %1384 = vrot.lane.b32.xlu0 %v1190, 44
  %v1385 = vpop.permute.xlu0 %1384
  %1386 = vrot.lane.b32.xlu0 %v1194, 44
  %v1387 = vpop.permute.xlu0 %1386
  %1388 = vrot.lane.b32.xlu0 %v1196, 44
  %v1389 = vpop.permute.xlu0 %1388
  %1390 = vrot.lane.b32.xlu0 %v1198, 44
  %v1391 = vpop.permute.xlu0 %1390
  %1392 = vrot.lane.b32.xlu0 %v1200, 44
  %v1393 = vpop.permute.xlu0 %1392
  %vm1394 = vcmask 359424
  %v1395 = vsel %vm1394, %v1267, %v1269
  %v1396 = vsel %vm1394, %v1271, %v1273
  %v1397 = vsel %vm1394, %v1275, %v1277
  %v1398 = vsel %vm1394, %v1279, %v1281
  %v1399 = vsel %vm1394, %v1283, %v1285
  %v1400 = vsel %vm1394, %v1287, %v1289
  %v1401 = vsel %vm1394, %v1291, %v1293
  %v1402 = vsel %vm1394, %v1295, %v1297
  %v1403 = vsel %vm1394, %v1299, %v1301
  %v1404 = vsel %vm1394, %v1303, %v1305
  %v1405 = vsel %vm1394, %v1307, %v1309
  %v1406 = vsel %vm1394, %v1311, %v1313
  %v1407 = vsel %vm1394, %v1315, %v1317
  %v1408 = vsel %vm1394, %v1319, %v1321
  %v1409 = vsel %vm1394, %v1323, %v1325
  %v1410 = vsel %vm1394, %v1327, %v1329
  %v1411 = vsel %vm1394, %v1331, %v1333
  %v1412 = vsel %vm1394, %v1335, %v1337
  %v1413 = vsel %vm1394, %v1339, %v1341
  %v1414 = vsel %vm1394, %v1343, %v1345
  %v1415 = vsel %vm1394, %v1347, %v1349
  %v1416 = vsel %vm1394, %v1351, %v1353
  %v1417 = vsel %vm1394, %v1355, %v1357
  %v1418 = vsel %vm1394, %v1359, %v1361
  %v1419 = vsel %vm1394, %v1363, %v1365
  %v1420 = vsel %vm1394, %v1367, %v1369
  %v1421 = vsel %vm1394, %v1371, %v1373
  %v1422 = vsel %vm1394, %v1375, %v1377
  %v1423 = vsel %vm1394, %v1379, %v1381
  %v1424 = vsel %vm1394, %v1383, %v1385
  %v1425 = vsel %vm1394, %v1387, %v1389
  %v1426 = vsel %vm1394, %v1391, %v1393
  %v1459 = vmax.f32 %v1044, %v1395
  %v1460 = vmax.f32 %v1048, %v1396
  %v1461 = vmax.f32 %v1054, %v1397
  %v1462 = vmax.f32 %v1058, %v1398
  %v1463 = vmax.f32 %v1064, %v1399
  %v1464 = vmax.f32 %v1068, %v1400
  %v1465 = vmax.f32 %v1074, %v1401
  %v1466 = vmax.f32 %v1078, %v1402
  %v1467 = vmax.f32 %v1084, %v1403
  %v1468 = vmax.f32 %v1088, %v1404
  %v1469 = vmax.f32 %v1094, %v1405
  %v1470 = vmax.f32 %v1098, %v1406
  %v1471 = vmax.f32 %v1104, %v1407
  %v1472 = vmax.f32 %v1108, %v1408
  %v1473 = vmax.f32 %v1114, %v1409
  %v1474 = vmax.f32 %v1118, %v1410
  %v1475 = vmax.f32 %v1124, %v1411
  %v1476 = vmax.f32 %v1128, %v1412
  %v1477 = vmax.f32 %v1134, %v1413
  %v1478 = vmax.f32 %v1138, %v1414
  %v1479 = vmax.f32 %v1144, %v1415
  %v1480 = vmax.f32 %v1148, %v1416
  %v1481 = vmax.f32 %v1154, %v1417
  %v1482 = vmax.f32 %v1158, %v1418
  %v1483 = vmax.f32 %v1164, %v1419
  %v1484 = vmax.f32 %v1168, %v1420
  %v1485 = vmax.f32 %v1174, %v1421
  %v1486 = vmax.f32 %v1178, %v1422
  %v1487 = vmax.f32 %v1184, %v1423
  %v1488 = vmax.f32 %v1188, %v1424
  %v1489 = vmax.f32 %v1194, %v1425
  %v1490 = vmax.f32 %v1198, %v1426
  %vm1524 = vcmask 1046528
  %v1525 = vrot.slane %v1459, 1
  %v1526 = vrot.slane %v1460, 1
  %v1527 = vsel %vm1524, %v1525, %v1526
  %v1528 = vrot.slane %v1461, 1
  %v1529 = vsel %vm1524, %v1526, %v1528
  %v1530 = vrot.slane %v1462, 1
  %v1531 = vsel %vm1524, %v1528, %v1530
  %v1532 = vrot.slane %v1463, 1
  %v1533 = vsel %vm1524, %v1530, %v1532
  %v1534 = vrot.slane %v1464, 1
  %v1535 = vsel %vm1524, %v1532, %v1534
  %v1536 = vrot.slane %v1465, 1
  %v1537 = vsel %vm1524, %v1534, %v1536
  %v1538 = vrot.slane %v1466, 1
  %v1539 = vsel %vm1524, %v1536, %v1538
  %v1540 = vrot.slane %v1467, 1
  %v1541 = vsel %vm1524, %v1538, %v1540
  %v1542 = vrot.slane %v1468, 1
  %v1543 = vsel %vm1524, %v1540, %v1542
  %v1544 = vrot.slane %v1469, 1
  %v1545 = vsel %vm1524, %v1542, %v1544
  %v1546 = vrot.slane %v1470, 1
  %v1547 = vsel %vm1524, %v1544, %v1546
  %v1548 = vrot.slane %v1471, 1
  %v1549 = vsel %vm1524, %v1546, %v1548
  %v1550 = vrot.slane %v1472, 1
  %v1551 = vsel %vm1524, %v1548, %v1550
  %v1552 = vrot.slane %v1473, 1
  %v1553 = vsel %vm1524, %v1550, %v1552
  %v1554 = vrot.slane %v1474, 1
  %v1555 = vsel %vm1524, %v1552, %v1554
  %v1556 = vrot.slane %v1475, 1
  %v1557 = vsel %vm1524, %v1554, %v1556
  %v1558 = vrot.slane %v1476, 1
  %v1559 = vsel %vm1524, %v1556, %v1558
  %v1560 = vrot.slane %v1477, 1
  %v1561 = vsel %vm1524, %v1558, %v1560
  %v1562 = vrot.slane %v1478, 1
  %v1563 = vsel %vm1524, %v1560, %v1562
  %v1564 = vrot.slane %v1479, 1
  %v1565 = vsel %vm1524, %v1562, %v1564
  %v1566 = vrot.slane %v1480, 1
  %v1567 = vsel %vm1524, %v1564, %v1566
  %v1568 = vrot.slane %v1481, 1
  %v1569 = vsel %vm1524, %v1566, %v1568
  %v1570 = vrot.slane %v1482, 1
  %v1571 = vsel %vm1524, %v1568, %v1570
  %v1572 = vrot.slane %v1483, 1
  %v1573 = vsel %vm1524, %v1570, %v1572
  %v1574 = vrot.slane %v1484, 1
  %v1575 = vsel %vm1524, %v1572, %v1574
  %v1576 = vrot.slane %v1485, 1
  %v1577 = vsel %vm1524, %v1574, %v1576
  %v1578 = vrot.slane %v1486, 1
  %v1579 = vsel %vm1524, %v1576, %v1578
  %v1580 = vrot.slane %v1487, 1
  %v1581 = vsel %vm1524, %v1578, %v1580
  %v1582 = vrot.slane %v1488, 1
  %v1583 = vsel %vm1524, %v1580, %v1582
  %v1584 = vrot.slane %v1489, 1
  %v1585 = vsel %vm1524, %v1582, %v1584
  %v1586 = vrot.slane %v1490, 1
  %v1587 = vsel %vm1524, %v1584, %v1586
  %v1588 = vrot.slane 0.0, 1
  %v1589 = vsel %vm1524, %v1586, %v1588
  %v1622 = vmax.f32 %v1459, %v1527
  %v1623 = vmax.f32 %v1460, %v1529
  %v1624 = vmax.f32 %v1461, %v1531
  %v1625 = vmax.f32 %v1462, %v1533
  %v1626 = vmax.f32 %v1463, %v1535
  %v1627 = vmax.f32 %v1464, %v1537
  %v1628 = vmax.f32 %v1465, %v1539
  %v1629 = vmax.f32 %v1466, %v1541
  %v1630 = vmax.f32 %v1467, %v1543
  %v1631 = vmax.f32 %v1468, %v1545
  %v1632 = vmax.f32 %v1469, %v1547
  %v1633 = vmax.f32 %v1470, %v1549
  %v1634 = vmax.f32 %v1471, %v1551
  %v1635 = vmax.f32 %v1472, %v1553
  %v1636 = vmax.f32 %v1473, %v1555
  %v1637 = vmax.f32 %v1474, %v1557
  %v1638 = vmax.f32 %v1475, %v1559
  %v1639 = vmax.f32 %v1476, %v1561
  %v1640 = vmax.f32 %v1477, %v1563
  %v1641 = vmax.f32 %v1478, %v1565
  %v1642 = vmax.f32 %v1479, %v1567
  %v1643 = vmax.f32 %v1480, %v1569
  %v1644 = vmax.f32 %v1481, %v1571
  %v1645 = vmax.f32 %v1482, %v1573
  %v1646 = vmax.f32 %v1483, %v1575
  %v1647 = vmax.f32 %v1484, %v1577
  %v1648 = vmax.f32 %v1485, %v1579
  %v1649 = vmax.f32 %v1486, %v1581
  %v1650 = vmax.f32 %v1487, %v1583
  %v1651 = vmax.f32 %v1488, %v1585
  %v1652 = vmax.f32 %v1489, %v1587
  %v1653 = vmax.f32 %v1490, %v1589
  %v1654 = vld [vmem:[%s2] sm:$0x1]
  %v1656 = vlaneseq
  %v1657 = vshrl.u32 %v1656, 7
  %v1658 = vsub.s32 0, %v1657
  %v1659 = vrot.slane %v1654, %v1658
  %v1661 = vadd.f32 %v1622, %v1659
  %v1662 = vadd.f32 %v1623, %v1659
  %v1663 = vadd.f32 %v1624, %v1659
  %v1664 = vadd.f32 %v1625, %v1659
  %v1665 = vadd.f32 %v1626, %v1659
  %v1666 = vadd.f32 %v1627, %v1659
  %v1667 = vadd.f32 %v1628, %v1659
  %v1668 = vadd.f32 %v1629, %v1659
  %v1669 = vadd.f32 %v1630, %v1659
  %v1670 = vadd.f32 %v1631, %v1659
  %v1671 = vadd.f32 %v1632, %v1659
  %v1672 = vadd.f32 %v1633, %v1659
  %v1673 = vadd.f32 %v1634, %v1659
  %v1674 = vadd.f32 %v1635, %v1659
  %v1675 = vadd.f32 %v1636, %v1659
  %v1676 = vadd.f32 %v1637, %v1659
  %v1677 = vadd.f32 %v1638, %v1659
  %v1678 = vadd.f32 %v1639, %v1659
  %v1679 = vadd.f32 %v1640, %v1659
  %v1680 = vadd.f32 %v1641, %v1659
  %v1681 = vadd.f32 %v1642, %v1659
  %v1682 = vadd.f32 %v1643, %v1659
  %v1683 = vadd.f32 %v1644, %v1659
  %v1684 = vadd.f32 %v1645, %v1659
  %v1685 = vadd.f32 %v1646, %v1659
  %v1686 = vadd.f32 %v1647, %v1659
  %v1687 = vadd.f32 %v1648, %v1659
  %v1688 = vadd.f32 %v1649, %v1659
  %v1689 = vadd.f32 %v1650, %v1659
  %v1690 = vadd.f32 %v1651, %v1659
  %v1691 = vadd.f32 %v1652, %v1659
  %v1692 = vadd.f32 %v1653, %v1659
  %v1693 = vmax.f32 %v1661, 0.0
  %v1694 = vmax.f32 %v1662, 0.0
  %v1695 = vmax.f32 %v1663, 0.0
  %v1696 = vmax.f32 %v1664, 0.0
  %v1697 = vmax.f32 %v1665, 0.0
  %v1698 = vmax.f32 %v1666, 0.0
  %v1699 = vmax.f32 %v1667, 0.0
  %v1700 = vmax.f32 %v1668, 0.0
  %v1701 = vmax.f32 %v1669, 0.0
  %v1702 = vmax.f32 %v1670, 0.0
  %v1703 = vmax.f32 %v1671, 0.0
  %v1704 = vmax.f32 %v1672, 0.0
  %v1705 = vmax.f32 %v1673, 0.0
  %v1706 = vmax.f32 %v1674, 0.0
  %v1707 = vmax.f32 %v1675, 0.0
  %v1708 = vmax.f32 %v1676, 0.0
  %v1709 = vmax.f32 %v1677, 0.0
  %v1710 = vmax.f32 %v1678, 0.0
  %v1711 = vmax.f32 %v1679, 0.0
  %v1712 = vmax.f32 %v1680, 0.0
  %v1713 = vmax.f32 %v1681, 0.0
  %v1714 = vmax.f32 %v1682, 0.0
  %v1715 = vmax.f32 %v1683, 0.0
  %v1716 = vmax.f32 %v1684, 0.0
  %v1717 = vmax.f32 %v1685, 0.0
  %v1718 = vmax.f32 %v1686, 0.0
  %v1719 = vmax.f32 %v1687, 0.0
  %v1720 = vmax.f32 %v1688, 0.0
  %v1721 = vmax.f32 %v1689, 0.0
  %v1722 = vmax.f32 %v1690, 0.0
  %v1723 = vmax.f32 %v1691, 0.0
  %v1724 = vmax.f32 %v1692, 0.0
  %v1725 = vpack.c.bf16 %v1694, %v1693
  %v1726 = vpack.c.bf16 %v1696, %v1695
  %v1727 = vpack.c.bf16 %v1698, %v1697
  %v1728 = vpack.c.bf16 %v1700, %v1699
  %v1729 = vpack.c.bf16 %v1702, %v1701
  %v1730 = vpack.c.bf16 %v1704, %v1703
  %v1731 = vpack.c.bf16 %v1706, %v1705
  %v1732 = vpack.c.bf16 %v1708, %v1707
  %v1733 = vpack.c.bf16 %v1710, %v1709
  %v1734 = vpack.c.bf16 %v1712, %v1711
  %v1735 = vpack.c.bf16 %v1714, %v1713
  %v1736 = vpack.c.bf16 %v1716, %v1715
  %v1737 = vpack.c.bf16 %v1718, %v1717
  %v1738 = vpack.c.bf16 %v1720, %v1719
  %v1739 = vpack.c.bf16 %v1722, %v1721
  %v1740 = vpack.c.bf16 %v1724, %v1723
  %vm1758 = vcmask 1046528
  %v1759 = vrot.slane %v1725, 1
  %v1760 = vrot.slane %v1726, 1
  %v1761 = vsel %vm1758, %v1759, %v1760
  %v1762 = vrot.slane %v1727, 1
  %v1763 = vsel %vm1758, %v1760, %v1762
  %v1764 = vrot.slane %v1728, 1
  %v1765 = vsel %vm1758, %v1762, %v1764
  %v1766 = vrot.slane %v1729, 1
  %v1767 = vsel %vm1758, %v1764, %v1766
  %v1768 = vrot.slane %v1730, 1
  %v1769 = vsel %vm1758, %v1766, %v1768
  %v1770 = vrot.slane %v1731, 1
  %v1771 = vsel %vm1758, %v1768, %v1770
  %v1772 = vrot.slane %v1732, 1
  %v1773 = vsel %vm1758, %v1770, %v1772
  %v1774 = vrot.slane %v1733, 1
  %v1775 = vsel %vm1758, %v1772, %v1774
  %v1776 = vrot.slane %v1734, 1
  %v1777 = vsel %vm1758, %v1774, %v1776
  %v1778 = vrot.slane %v1735, 1
  %v1779 = vsel %vm1758, %v1776, %v1778
  %v1780 = vrot.slane %v1736, 1
  %v1781 = vsel %vm1758, %v1778, %v1780
  %v1782 = vrot.slane %v1737, 1
  %v1783 = vsel %vm1758, %v1780, %v1782
  %v1784 = vrot.slane %v1738, 1
  %v1785 = vsel %vm1758, %v1782, %v1784
  %v1786 = vrot.slane %v1739, 1
  %v1787 = vsel %vm1758, %v1784, %v1786
  %v1788 = vrot.slane %v1740, 1
  %v1789 = vsel %vm1758, %v1786, %v1788
  %v1790 = vrot.slane 0, 1
  %v1791 = vsel %vm1758, %v1788, %v1790
  %1792 = vrot.lane.b32.xlu0 %v1761, 84
  %v1793 = vpop.permute.xlu0 %1792
  %1794 = vrot.lane.b32.xlu0 %v1763, 84
  %v1795 = vpop.permute.xlu0 %1794
  %1796 = vrot.lane.b32.xlu0 %v1765, 84
  %v1797 = vpop.permute.xlu0 %1796
  %1798 = vrot.lane.b32.xlu0 %v1767, 84
  %v1799 = vpop.permute.xlu0 %1798
  %1800 = vrot.lane.b32.xlu0 %v1769, 84
  %v1801 = vpop.permute.xlu0 %1800
  %1802 = vrot.lane.b32.xlu0 %v1771, 84
  %v1803 = vpop.permute.xlu0 %1802
  %1804 = vrot.lane.b32.xlu0 %v1773, 84
  %v1805 = vpop.permute.xlu0 %1804
  %1806 = vrot.lane.b32.xlu0 %v1775, 84
  %v1807 = vpop.permute.xlu0 %1806
  %1808 = vrot.lane.b32.xlu0 %v1777, 84
  %v1809 = vpop.permute.xlu0 %1808
  %1810 = vrot.lane.b32.xlu0 %v1779, 84
  %v1811 = vpop.permute.xlu0 %1810
  %1812 = vrot.lane.b32.xlu0 %v1781, 84
  %v1813 = vpop.permute.xlu0 %1812
  %1814 = vrot.lane.b32.xlu0 %v1783, 84
  %v1815 = vpop.permute.xlu0 %1814
  %1816 = vrot.lane.b32.xlu0 %v1785, 84
  %v1817 = vpop.permute.xlu0 %1816
  %1818 = vrot.lane.b32.xlu0 %v1787, 84
  %v1819 = vpop.permute.xlu0 %1818
  %1820 = vrot.lane.b32.xlu0 %v1789, 84
  %v1821 = vpop.permute.xlu0 %1820
  %1822 = vrot.lane.b32.xlu0 %v1791, 84
  %v1823 = vpop.permute.xlu0 %1822
  %vm1824 = vcmask 1045504
  %v1825 = vrot.slane %v1725, 2
  %v1826 = vrot.slane %v1726, 2
  %v1827 = vsel %vm1824, %v1825, %v1826
  %v1828 = vrot.slane %v1727, 2
  %v1829 = vsel %vm1824, %v1826, %v1828
  %v1830 = vrot.slane %v1728, 2
  %v1831 = vsel %vm1824, %v1828, %v1830
  %v1832 = vrot.slane %v1729, 2
  %v1833 = vsel %vm1824, %v1830, %v1832
  %v1834 = vrot.slane %v1730, 2
  %v1835 = vsel %vm1824, %v1832, %v1834
  %v1836 = vrot.slane %v1731, 2
  %v1837 = vsel %vm1824, %v1834, %v1836
  %v1838 = vrot.slane %v1732, 2
  %v1839 = vsel %vm1824, %v1836, %v1838
  %v1840 = vrot.slane %v1733, 2
  %v1841 = vsel %vm1824, %v1838, %v1840
  %v1842 = vrot.slane %v1734, 2
  %v1843 = vsel %vm1824, %v1840, %v1842
  %v1844 = vrot.slane %v1735, 2
  %v1845 = vsel %vm1824, %v1842, %v1844
  %v1846 = vrot.slane %v1736, 2
  %v1847 = vsel %vm1824, %v1844, %v1846
  %v1848 = vrot.slane %v1737, 2
  %v1849 = vsel %vm1824, %v1846, %v1848
  %v1850 = vrot.slane %v1738, 2
  %v1851 = vsel %vm1824, %v1848, %v1850
  %v1852 = vrot.slane %v1739, 2
  %v1853 = vsel %vm1824, %v1850, %v1852
  %v1854 = vrot.slane %v1740, 2
  %v1855 = vsel %vm1824, %v1852, %v1854
  %v1856 = vrot.slane 0, 2
  %v1857 = vsel %vm1824, %v1854, %v1856
  %1858 = vrot.lane.b32.xlu0 %v1827, 40
  %v1859 = vpop.permute.xlu0 %1858
  %1860 = vrot.lane.b32.xlu0 %v1829, 40
  %v1861 = vpop.permute.xlu0 %1860
  %1862 = vrot.lane.b32.xlu0 %v1831, 40
  %v1863 = vpop.permute.xlu0 %1862
  %1864 = vrot.lane.b32.xlu0 %v1833, 40
  %v1865 = vpop.permute.xlu0 %1864
  %1866 = vrot.lane.b32.xlu0 %v1835, 40
  %v1867 = vpop.permute.xlu0 %1866
  %1868 = vrot.lane.b32.xlu0 %v1837, 40
  %v1869 = vpop.permute.xlu0 %1868
  %1870 = vrot.lane.b32.xlu0 %v1839, 40
  %v1871 = vpop.permute.xlu0 %1870
  %1872 = vrot.lane.b32.xlu0 %v1841, 40
  %v1873 = vpop.permute.xlu0 %1872
  %1874 = vrot.lane.b32.xlu0 %v1843, 40
  %v1875 = vpop.permute.xlu0 %1874
  %1876 = vrot.lane.b32.xlu0 %v1845, 40
  %v1877 = vpop.permute.xlu0 %1876
  %1878 = vrot.lane.b32.xlu0 %v1847, 40
  %v1879 = vpop.permute.xlu0 %1878
  %1880 = vrot.lane.b32.xlu0 %v1849, 40
  %v1881 = vpop.permute.xlu0 %1880
  %1882 = vrot.lane.b32.xlu0 %v1851, 40
  %v1883 = vpop.permute.xlu0 %1882
  %1884 = vrot.lane.b32.xlu0 %v1853, 40
  %v1885 = vpop.permute.xlu0 %1884
  %1886 = vrot.lane.b32.xlu0 %v1855, 40
  %v1887 = vpop.permute.xlu0 %1886
  %1888 = vrot.lane.b32.xlu0 %v1857, 40
  %v1889 = vpop.permute.xlu0 %1888
  %vm1890 = vcmask 1044480
  %v1891 = vrot.slane %v1725, 3
  %v1892 = vrot.slane %v1726, 3
  %v1893 = vsel %vm1890, %v1891, %v1892
  %v1894 = vrot.slane %v1727, 3
  %v1895 = vsel %vm1890, %v1892, %v1894
  %v1896 = vrot.slane %v1728, 3
  %v1897 = vsel %vm1890, %v1894, %v1896
  %v1898 = vrot.slane %v1729, 3
  %v1899 = vsel %vm1890, %v1896, %v1898
  %v1900 = vrot.slane %v1730, 3
  %v1901 = vsel %vm1890, %v1898, %v1900
  %v1902 = vrot.slane %v1731, 3
  %v1903 = vsel %vm1890, %v1900, %v1902
  %v1904 = vrot.slane %v1732, 3
  %v1905 = vsel %vm1890, %v1902, %v1904
  %v1906 = vrot.slane %v1733, 3
  %v1907 = vsel %vm1890, %v1904, %v1906
  %v1908 = vrot.slane %v1734, 3
  %v1909 = vsel %vm1890, %v1906, %v1908
  %v1910 = vrot.slane %v1735, 3
  %v1911 = vsel %vm1890, %v1908, %v1910
  %v1912 = vrot.slane %v1736, 3
  %v1913 = vsel %vm1890, %v1910, %v1912
  %v1914 = vrot.slane %v1737, 3
  %v1915 = vsel %vm1890, %v1912, %v1914
  %v1916 = vrot.slane %v1738, 3
  %v1917 = vsel %vm1890, %v1914, %v1916
  %v1918 = vrot.slane %v1739, 3
  %v1919 = vsel %vm1890, %v1916, %v1918
  %v1920 = vrot.slane %v1740, 3
  %v1921 = vsel %vm1890, %v1918, %v1920
  %v1922 = vrot.slane 0, 3
  %v1923 = vsel %vm1890, %v1920, %v1922
  %1924 = vrot.lane.b32.xlu0 %v1893, 124
  %v1925 = vpop.permute.xlu0 %1924
  %1926 = vrot.lane.b32.xlu0 %v1895, 124
  %v1927 = vpop.permute.xlu0 %1926
  %1928 = vrot.lane.b32.xlu0 %v1897, 124
  %v1929 = vpop.permute.xlu0 %1928
  %1930 = vrot.lane.b32.xlu0 %v1899, 124
  %v1931 = vpop.permute.xlu0 %1930
  %1932 = vrot.lane.b32.xlu0 %v1901, 124
  %v1933 = vpop.permute.xlu0 %1932
  %1934 = vrot.lane.b32.xlu0 %v1903, 124
  %v1935 = vpop.permute.xlu0 %1934
  %1936 = vrot.lane.b32.xlu0 %v1905, 124
  %v1937 = vpop.permute.xlu0 %1936
  %1938 = vrot.lane.b32.xlu0 %v1907, 124
  %v1939 = vpop.permute.xlu0 %1938
  %1940 = vrot.lane.b32.xlu0 %v1909, 124
  %v1941 = vpop.permute.xlu0 %1940
  %1942 = vrot.lane.b32.xlu0 %v1911, 124
  %v1943 = vpop.permute.xlu0 %1942
  %1944 = vrot.lane.b32.xlu0 %v1913, 124
  %v1945 = vpop.permute.xlu0 %1944
  %1946 = vrot.lane.b32.xlu0 %v1915, 124
  %v1947 = vpop.permute.xlu0 %1946
  %1948 = vrot.lane.b32.xlu0 %v1917, 124
  %v1949 = vpop.permute.xlu0 %1948
  %1950 = vrot.lane.b32.xlu0 %v1919, 124
  %v1951 = vpop.permute.xlu0 %1950
  %1952 = vrot.lane.b32.xlu0 %v1921, 124
  %v1953 = vpop.permute.xlu0 %1952
  %1954 = vrot.lane.b32.xlu0 %v1923, 124
  %v1955 = vpop.permute.xlu0 %1954
  %vm1956 = vcmask 1043456
  %v1957 = vrot.slane %v1725, 4
  %v1958 = vrot.slane %v1726, 4
  %v1959 = vsel %vm1956, %v1957, %v1958
  %v1960 = vrot.slane %v1727, 4
  %v1961 = vsel %vm1956, %v1958, %v1960
  %v1962 = vrot.slane %v1728, 4
  %v1963 = vsel %vm1956, %v1960, %v1962
  %v1964 = vrot.slane %v1729, 4
  %v1965 = vsel %vm1956, %v1962, %v1964
  %v1966 = vrot.slane %v1730, 4
  %v1967 = vsel %vm1956, %v1964, %v1966
  %v1968 = vrot.slane %v1731, 4
  %v1969 = vsel %vm1956, %v1966, %v1968
  %v1970 = vrot.slane %v1732, 4
  %v1971 = vsel %vm1956, %v1968, %v1970
  %v1972 = vrot.slane %v1733, 4
  %v1973 = vsel %vm1956, %v1970, %v1972
  %v1974 = vrot.slane %v1734, 4
  %v1975 = vsel %vm1956, %v1972, %v1974
  %v1976 = vrot.slane %v1735, 4
  %v1977 = vsel %vm1956, %v1974, %v1976
  %v1978 = vrot.slane %v1736, 4
  %v1979 = vsel %vm1956, %v1976, %v1978
  %v1980 = vrot.slane %v1737, 4
  %v1981 = vsel %vm1956, %v1978, %v1980
  %v1982 = vrot.slane %v1738, 4
  %v1983 = vsel %vm1956, %v1980, %v1982
  %v1984 = vrot.slane %v1739, 4
  %v1985 = vsel %vm1956, %v1982, %v1984
  %v1986 = vrot.slane %v1740, 4
  %v1987 = vsel %vm1956, %v1984, %v1986
  %v1988 = vrot.slane 0, 4
  %v1989 = vsel %vm1956, %v1986, %v1988
  %1990 = vrot.lane.b32.xlu0 %v1959, 80
  %v1991 = vpop.permute.xlu0 %1990
  %1992 = vrot.lane.b32.xlu0 %v1961, 80
  %v1993 = vpop.permute.xlu0 %1992
  %1994 = vrot.lane.b32.xlu0 %v1963, 80
  %v1995 = vpop.permute.xlu0 %1994
  %1996 = vrot.lane.b32.xlu0 %v1965, 80
  %v1997 = vpop.permute.xlu0 %1996
  %1998 = vrot.lane.b32.xlu0 %v1967, 80
  %v1999 = vpop.permute.xlu0 %1998
  %2000 = vrot.lane.b32.xlu0 %v1969, 80
  %v2001 = vpop.permute.xlu0 %2000
  %2002 = vrot.lane.b32.xlu0 %v1971, 80
  %v2003 = vpop.permute.xlu0 %2002
  %2004 = vrot.lane.b32.xlu0 %v1973, 80
  %v2005 = vpop.permute.xlu0 %2004
  %2006 = vrot.lane.b32.xlu0 %v1975, 80
  %v2007 = vpop.permute.xlu0 %2006
  %2008 = vrot.lane.b32.xlu0 %v1977, 80
  %v2009 = vpop.permute.xlu0 %2008
  %2010 = vrot.lane.b32.xlu0 %v1979, 80
  %v2011 = vpop.permute.xlu0 %2010
  %2012 = vrot.lane.b32.xlu0 %v1981, 80
  %v2013 = vpop.permute.xlu0 %2012
  %2014 = vrot.lane.b32.xlu0 %v1983, 80
  %v2015 = vpop.permute.xlu0 %2014
  %2016 = vrot.lane.b32.xlu0 %v1985, 80
  %v2017 = vpop.permute.xlu0 %2016
  %2018 = vrot.lane.b32.xlu0 %v1987, 80
  %v2019 = vpop.permute.xlu0 %2018
  %2020 = vrot.lane.b32.xlu0 %v1989, 80
  %v2021 = vpop.permute.xlu0 %2020
  %vm2022 = vcmask 687104
  %v2025 = vsel %vm2022, %v1725, %v1793
  %v2029 = vsel %vm2022, %v1726, %v1795
  %v2033 = vsel %vm2022, %v1727, %v1797
  %v2037 = vsel %vm2022, %v1728, %v1799
  %v2041 = vsel %vm2022, %v1729, %v1801
  %v2045 = vsel %vm2022, %v1730, %v1803
  %v2049 = vsel %vm2022, %v1731, %v1805
  %v2053 = vsel %vm2022, %v1732, %v1807
  %v2057 = vsel %vm2022, %v1733, %v1809
  %v2061 = vsel %vm2022, %v1734, %v1811
  %v2065 = vsel %vm2022, %v1735, %v1813
  %v2069 = vsel %vm2022, %v1736, %v1815
  %v2073 = vsel %vm2022, %v1737, %v1817
  %v2077 = vsel %vm2022, %v1738, %v1819
  %v2081 = vsel %vm2022, %v1739, %v1821
  %v2085 = vsel %vm2022, %v1740, %v1823
  %vm2087 = vcmask 326656
  %v2089 = vsel %vm2087, %v1793, %v1859
  %v2091 = vsel %vm2087, %v1795, %v1861
  %v2093 = vsel %vm2087, %v1797, %v1863
  %v2095 = vsel %vm2087, %v1799, %v1865
  %v2097 = vsel %vm2087, %v1801, %v1867
  %v2099 = vsel %vm2087, %v1803, %v1869
  %v2101 = vsel %vm2087, %v1805, %v1871
  %v2103 = vsel %vm2087, %v1807, %v1873
  %v2105 = vsel %vm2087, %v1809, %v1875
  %v2107 = vsel %vm2087, %v1811, %v1877
  %v2109 = vsel %vm2087, %v1813, %v1879
  %v2111 = vsel %vm2087, %v1815, %v1881
  %v2113 = vsel %vm2087, %v1817, %v1883
  %v2115 = vsel %vm2087, %v1819, %v1885
  %v2117 = vsel %vm2087, %v1821, %v1887
  %v2119 = vsel %vm2087, %v1823, %v1889
  %vm2120 = vcmask 1014784
  %v2122 = vsel %vm2120, %v2089, %v1925
  %v2125 = vsel %vm2120, %v2091, %v1927
  %v2128 = vsel %vm2120, %v2093, %v1929
  %v2131 = vsel %vm2120, %v2095, %v1931
  %v2134 = vsel %vm2120, %v2097, %v1933
  %v2137 = vsel %vm2120, %v2099, %v1935
  %v2140 = vsel %vm2120, %v2101, %v1937
  %v2143 = vsel %vm2120, %v2103, %v1939
  %v2146 = vsel %vm2120, %v2105, %v1941
  %v2149 = vsel %vm2120, %v2107, %v1943
  %v2152 = vsel %vm2120, %v2109, %v1945
  %v2155 = vsel %vm2120, %v2111, %v1947
  %v2158 = vsel %vm2120, %v2113, %v1949
  %v2161 = vsel %vm2120, %v2115, %v1951
  %v2164 = vsel %vm2120, %v2117, %v1953
  %v2167 = vsel %vm2120, %v2119, %v1955
  %vm2169 = vcmask 654336
  %v2171 = vsel %vm2169, %v1925, %v1991
  %v2174 = vsel %vm2169, %v1927, %v1993
  %v2177 = vsel %vm2169, %v1929, %v1995
  %v2180 = vsel %vm2169, %v1931, %v1997
  %v2183 = vsel %vm2169, %v1933, %v1999
  %v2186 = vsel %vm2169, %v1935, %v2001
  %v2189 = vsel %vm2169, %v1937, %v2003
  %v2192 = vsel %vm2169, %v1939, %v2005
  %v2195 = vsel %vm2169, %v1941, %v2007
  %v2198 = vsel %vm2169, %v1943, %v2009
  %v2201 = vsel %vm2169, %v1945, %v2011
  %v2204 = vsel %vm2169, %v1947, %v2013
  %v2207 = vsel %vm2169, %v1949, %v2015
  %v2210 = vsel %vm2169, %v1951, %v2017
  %v2213 = vsel %vm2169, %v1953, %v2019
  %v2216 = vsel %vm2169, %v1955, %v2021
  %v2218 = vld [vmem:[%s3] sm:$0xff]
  %v2219 = vld [vmem:[%s3 + $0x8] sm:$0xff]
  %v2220 = vld [vmem:[%s3 + $0x10] sm:$0xff]
  %v2221 = vld [vmem:[%s3 + $0x18] sm:$0xff]
  %v2222 = vld [vmem:[%s3 + $0x20] sm:$0xff]
  %v2223 = vld [vmem:[%s3 + $0x28] sm:$0xff]
  %v2224 = vld [vmem:[%s3 + $0x30] sm:$0xff]
  %v2225 = vld [vmem:[%s3 + $0x38] sm:$0xff]
  %v2226 = vld [vmem:[%s3 + $0x40] sm:$0xff]
  %v2227 = vld [vmem:[%s3 + $0x48] sm:$0xff]
  %v2228 = vld [vmem:[%s3 + $0x50] sm:$0xff]
  %v2229 = vld [vmem:[%s3 + $0x58] sm:$0xff]
  %v2230 = vld [vmem:[%s3 + $0x60] sm:$0xff]
  %v2231 = vld [vmem:[%s3 + $0x68] sm:$0xff]
  %v2232 = vld [vmem:[%s3 + $0x70] sm:$0xff]
  %v2233 = vld [vmem:[%s3 + $0x78] sm:$0xff]
  %v2234 = vld [vmem:[%s3 + $0x80] sm:$0xff]
  %v2235 = vld [vmem:[%s3 + $0x88] sm:$0xff]
  %v2236 = vld [vmem:[%s3 + $0x90] sm:$0xff]
  %v2237 = vld [vmem:[%s3 + $0x98] sm:$0xff]
  %v2238 = vld [vmem:[%s3 + $0xa0] sm:$0xff]
  %v2239 = vld [vmem:[%s3 + $0xa8] sm:$0xff]
  %v2240 = vld [vmem:[%s3 + $0xb0] sm:$0xff]
  %v2241 = vld [vmem:[%s3 + $0xb8] sm:$0xff]
  %v2242 = vld [vmem:[%s3 + $0xc0] sm:$0xff]
  %v2243 = vld [vmem:[%s3 + $0xc8] sm:$0xff]
  %v2244 = vld [vmem:[%s3 + $0xd0] sm:$0xff]
  %v2245 = vld [vmem:[%s3 + $0xd8] sm:$0xff]
  %v2246 = vld [vmem:[%s3 + $0xe0] sm:$0xff]
  %v2247 = vld [vmem:[%s3 + $0xe8] sm:$0xff]
  %v2248 = vld [vmem:[%s3 + $0xf0] sm:$0xff]
  %v2249 = vld [vmem:[%s3 + $0xf8] sm:$0xff]
  %v2250 = vld [vmem:[%s3 + $0x100] sm:$0xff]
  %v2251 = vld [vmem:[%s3 + $0x108] sm:$0xff]
  %v2252 = vld [vmem:[%s3 + $0x110] sm:$0xff]
  %v2253 = vld [vmem:[%s3 + $0x118] sm:$0xff]
  %v2254 = vld [vmem:[%s3 + $0x120] sm:$0xff]
  %v2255 = vld [vmem:[%s3 + $0x128] sm:$0xff]
  %v2256 = vld [vmem:[%s3 + $0x130] sm:$0xff]
  %v2257 = vld [vmem:[%s3 + $0x138] sm:$0xff]
  %v2258 = vld [vmem:[%s3 + $0x140] sm:$0xff]
  %v2259 = vld [vmem:[%s3 + $0x148] sm:$0xff]
  %v2260 = vld [vmem:[%s3 + $0x150] sm:$0xff]
  %v2261 = vld [vmem:[%s3 + $0x158] sm:$0xff]
  %v2262 = vld [vmem:[%s3 + $0x160] sm:$0xff]
  %v2263 = vld [vmem:[%s3 + $0x168] sm:$0xff]
  %v2264 = vld [vmem:[%s3 + $0x170] sm:$0xff]
  %v2265 = vld [vmem:[%s3 + $0x178] sm:$0xff]
  %v2266 = vld [vmem:[%s3 + $0x180] sm:$0xff]
  %v2267 = vld [vmem:[%s3 + $0x188] sm:$0xff]
  %v2268 = vld [vmem:[%s3 + $0x190] sm:$0xff]
  %v2269 = vld [vmem:[%s3 + $0x198] sm:$0xff]
  %v2270 = vld [vmem:[%s3 + $0x1a0] sm:$0x33]
  %v2324 = vunpack.c.l.b16 %v2218
  %v2325 = vunpack.c.h.b16 %v2218
  %v2326 = vunpack.c.l.b16 %v2219
  %v2327 = vunpack.c.h.b16 %v2219
  %v2328 = vunpack.c.l.b16 %v2220
  %v2329 = vunpack.c.h.b16 %v2220
  %v2330 = vunpack.c.l.b16 %v2221
  %v2331 = vunpack.c.h.b16 %v2221
  %v2332 = vunpack.c.l.b16 %v2222
  %v2333 = vunpack.c.h.b16 %v2222
  %v2334 = vunpack.c.l.b16 %v2223
  %v2335 = vunpack.c.h.b16 %v2223
  %v2336 = vunpack.c.l.b16 %v2224
  %v2337 = vunpack.c.h.b16 %v2224
  %v2338 = vunpack.c.l.b16 %v2225
  %v2339 = vunpack.c.h.b16 %v2225
  %v2340 = vunpack.c.l.b16 %v2226
  %v2341 = vunpack.c.h.b16 %v2226
  %v2342 = vunpack.c.l.b16 %v2227
  %v2343 = vunpack.c.h.b16 %v2227
  %v2344 = vunpack.c.l.b16 %v2228
  %v2345 = vunpack.c.h.b16 %v2228
  %v2346 = vunpack.c.l.b16 %v2229
  %v2347 = vunpack.c.h.b16 %v2229
  %v2348 = vunpack.c.l.b16 %v2230
  %v2349 = vunpack.c.h.b16 %v2230
  %v2350 = vunpack.c.l.b16 %v2231
  %v2351 = vunpack.c.h.b16 %v2231
  %v2352 = vunpack.c.l.b16 %v2232
  %v2353 = vunpack.c.h.b16 %v2232
  %v2354 = vunpack.c.l.b16 %v2233
  %v2355 = vunpack.c.h.b16 %v2233
  %v2356 = vunpack.c.l.b16 %v2234
  %v2357 = vunpack.c.h.b16 %v2234
  %v2358 = vunpack.c.l.b16 %v2235
  %v2359 = vunpack.c.h.b16 %v2235
  %v2360 = vunpack.c.l.b16 %v2236
  %v2361 = vunpack.c.h.b16 %v2236
  %v2362 = vunpack.c.l.b16 %v2237
  %v2363 = vunpack.c.h.b16 %v2237
  %v2364 = vunpack.c.l.b16 %v2238
  %v2365 = vunpack.c.h.b16 %v2238
  %v2366 = vunpack.c.l.b16 %v2239
  %v2367 = vunpack.c.h.b16 %v2239
  %v2368 = vunpack.c.l.b16 %v2240
  %v2369 = vunpack.c.h.b16 %v2240
  %v2370 = vunpack.c.l.b16 %v2241
  %v2371 = vunpack.c.h.b16 %v2241
  %v2372 = vunpack.c.l.b16 %v2242
  %v2373 = vunpack.c.h.b16 %v2242
  %v2374 = vunpack.c.l.b16 %v2243
  %v2375 = vunpack.c.h.b16 %v2243
  %v2376 = vunpack.c.l.b16 %v2244
  %v2377 = vunpack.c.h.b16 %v2244
  %v2378 = vunpack.c.l.b16 %v2245
  %v2379 = vunpack.c.h.b16 %v2245
  %v2380 = vunpack.c.l.b16 %v2246
  %v2381 = vunpack.c.h.b16 %v2246
  %v2382 = vunpack.c.l.b16 %v2247
  %v2383 = vunpack.c.h.b16 %v2247
  %v2384 = vunpack.c.l.b16 %v2248
  %v2385 = vunpack.c.h.b16 %v2248
  %v2386 = vunpack.c.l.b16 %v2249
  %v2387 = vunpack.c.h.b16 %v2249
  %v2388 = vunpack.c.l.b16 %v2250
  %v2389 = vunpack.c.h.b16 %v2250
  %v2390 = vunpack.c.l.b16 %v2251
  %v2391 = vunpack.c.h.b16 %v2251
  %v2392 = vunpack.c.l.b16 %v2252
  %v2393 = vunpack.c.h.b16 %v2252
  %v2394 = vunpack.c.l.b16 %v2253
  %v2395 = vunpack.c.h.b16 %v2253
  %v2396 = vunpack.c.l.b16 %v2254
  %v2397 = vunpack.c.h.b16 %v2254
  %v2398 = vunpack.c.l.b16 %v2255
  %v2399 = vunpack.c.h.b16 %v2255
  %v2400 = vunpack.c.l.b16 %v2256
  %v2401 = vunpack.c.h.b16 %v2256
  %v2402 = vunpack.c.l.b16 %v2257
  %v2403 = vunpack.c.h.b16 %v2257
  %v2404 = vunpack.c.l.b16 %v2258
  %v2405 = vunpack.c.h.b16 %v2258
  %v2406 = vunpack.c.l.b16 %v2259
  %v2407 = vunpack.c.h.b16 %v2259
  %v2408 = vunpack.c.l.b16 %v2260
  %v2409 = vunpack.c.h.b16 %v2260
  %v2410 = vunpack.c.l.b16 %v2261
  %v2411 = vunpack.c.h.b16 %v2261
  %v2412 = vunpack.c.l.b16 %v2262
  %v2413 = vunpack.c.h.b16 %v2262
  %v2414 = vunpack.c.l.b16 %v2263
  %v2415 = vunpack.c.h.b16 %v2263
  %v2416 = vunpack.c.l.b16 %v2264
  %v2417 = vunpack.c.h.b16 %v2264
  %v2418 = vunpack.c.l.b16 %v2265
  %v2419 = vunpack.c.h.b16 %v2265
  %v2420 = vunpack.c.l.b16 %v2266
  %v2421 = vunpack.c.h.b16 %v2266
  %v2422 = vunpack.c.l.b16 %v2267
  %v2423 = vunpack.c.h.b16 %v2267
  %v2424 = vunpack.c.l.b16 %v2268
  %v2425 = vunpack.c.h.b16 %v2268
  %v2426 = vunpack.c.l.b16 %v2269
  %v2427 = vunpack.c.h.b16 %v2269
  %v2428 = vunpack.c.l.b16 %v2270
  %v2429 = vunpack.c.h.b16 %v2270
  %v2430 = vpack.c.b16 %v2326, %v2324
  %v2431 = vpack.c.b16 %v2327, %v2325
  %v2432 = vpack.c.b16 %v2330, %v2328
  %v2433 = vpack.c.b16 %v2331, %v2329
  %v2434 = vpack.c.b16 %v2334, %v2332
  %v2435 = vpack.c.b16 %v2335, %v2333
  %v2436 = vpack.c.b16 %v2338, %v2336
  %v2437 = vpack.c.b16 %v2339, %v2337
  %v2438 = vpack.c.b16 %v2342, %v2340
  %v2439 = vpack.c.b16 %v2343, %v2341
  %v2440 = vpack.c.b16 %v2346, %v2344
  %v2441 = vpack.c.b16 %v2347, %v2345
  %v2442 = vpack.c.b16 %v2350, %v2348
  %v2443 = vpack.c.b16 %v2351, %v2349
  %v2444 = vpack.c.b16 %v2354, %v2352
  %v2445 = vpack.c.b16 %v2355, %v2353
  %v2446 = vpack.c.b16 %v2358, %v2356
  %v2447 = vpack.c.b16 %v2359, %v2357
  %v2448 = vpack.c.b16 %v2362, %v2360
  %v2449 = vpack.c.b16 %v2363, %v2361
  %v2450 = vpack.c.b16 %v2366, %v2364
  %v2451 = vpack.c.b16 %v2367, %v2365
  %v2452 = vpack.c.b16 %v2370, %v2368
  %v2453 = vpack.c.b16 %v2371, %v2369
  %v2454 = vpack.c.b16 %v2374, %v2372
  %v2455 = vpack.c.b16 %v2375, %v2373
  %v2456 = vpack.c.b16 %v2378, %v2376
  %v2457 = vpack.c.b16 %v2379, %v2377
  %v2458 = vpack.c.b16 %v2382, %v2380
  %v2459 = vpack.c.b16 %v2383, %v2381
  %v2460 = vpack.c.b16 %v2386, %v2384
  %v2461 = vpack.c.b16 %v2387, %v2385
  %v2462 = vpack.c.b16 %v2390, %v2388
  %v2463 = vpack.c.b16 %v2391, %v2389
  %v2464 = vpack.c.b16 %v2394, %v2392
  %v2465 = vpack.c.b16 %v2395, %v2393
  %v2466 = vpack.c.b16 %v2398, %v2396
  %v2467 = vpack.c.b16 %v2399, %v2397
  %v2468 = vpack.c.b16 %v2402, %v2400
  %v2469 = vpack.c.b16 %v2403, %v2401
  %v2470 = vpack.c.b16 %v2406, %v2404
  %v2471 = vpack.c.b16 %v2407, %v2405
  %v2472 = vpack.c.b16 %v2410, %v2408
  %v2473 = vpack.c.b16 %v2411, %v2409
  %v2474 = vpack.c.b16 %v2414, %v2412
  %v2475 = vpack.c.b16 %v2415, %v2413
  %v2476 = vpack.c.b16 %v2418, %v2416
  %v2477 = vpack.c.b16 %v2419, %v2417
  %v2478 = vpack.c.b16 %v2422, %v2420
  %v2479 = vpack.c.b16 %v2423, %v2421
  %v2480 = vpack.c.b16 %v2426, %v2424
  %v2481 = vpack.c.b16 %v2427, %v2425
  %v2482 = vpack.c.b16 %v2428, %v2428
  %v2483 = vpack.c.b16 %v2429, %v2429
  %vm2536 = vcmask 293888
  %v2537 = vsel %vm2536, %v1991, 0
  %v2539 = vsel %vm2536, %v1993, 0
  %v2541 = vsel %vm2536, %v1995, 0
  %v2543 = vsel %vm2536, %v1997, 0
  %v2545 = vsel %vm2536, %v1999, 0
  %v2547 = vsel %vm2536, %v2001, 0
  %v2549 = vsel %vm2536, %v2003, 0
  %v2551 = vsel %vm2536, %v2005, 0
  %v2553 = vsel %vm2536, %v2007, 0
  %v2555 = vsel %vm2536, %v2009, 0
  %v2557 = vsel %vm2536, %v2011, 0
  %v2559 = vsel %vm2536, %v2013, 0
  %v2561 = vsel %vm2536, %v2015, 0
  %v2563 = vsel %vm2536, %v2017, 0
  %v2565 = vsel %vm2536, %v2019, 0
  %v2567 = vsel %vm2536, %v2021, 0
  %vm2569 = vcmask 1041408
  %v2571 = vsel %vm2569, %v2482, 0
  %v2574 = vsel %vm2569, %v2483, 0
  %2576 = vmatprep.subr.bf16.mxu0 %v2431
  %2577 = vmatpush1.bf16.msra.mxu0 %v2430
  %2578 = vmatprep.subr.bf16.mxu0 %v2433
  %2579 = vmatpush1.bf16.msra.mxu0 %v2432
  %2580 = vmatprep.subr.bf16.mxu0 %v2435
  %2581 = vmatpush1.bf16.msra.mxu0 %v2434
  %2582 = vmatprep.subr.bf16.mxu0 %v2437
  %2583 = vmatpush1.bf16.msra.mxu0 %v2436
  %2584 = vmatprep.subr.bf16.mxu0 %v2439
  %2585 = vmatpush1.bf16.msra.mxu0 %v2438
  %2586 = vmatprep.subr.bf16.mxu0 %v2441
  %2587 = vmatpush1.bf16.msra.mxu0 %v2440
  %2588 = vmatprep.subr.bf16.mxu0 %v2443
  %2589 = vmatpush1.bf16.msra.mxu0 %v2442
  %2590 = vmatprep.subr.bf16.mxu0 %v2445
  %2591 = vmatpush1.bf16.msra.mxu0 %v2444
  %2592 = vmatprep.subr.bf16.mxu0 %v2447
  %2593 = vmatpush1.bf16.msra.mxu0 %v2446
  %2594 = vmatprep.subr.bf16.mxu0 %v2449
  %2595 = vmatpush1.bf16.msra.mxu0 %v2448
  %2596 = vmatprep.subr.bf16.mxu0 %v2451
  %2597 = vmatpush1.bf16.msra.mxu0 %v2450
  %2598 = vmatprep.subr.bf16.mxu0 %v2453
  %2599 = vmatpush1.bf16.msra.mxu0 %v2452
  %2600 = vmatprep.subr.bf16.mxu0 %v2455
  %2601 = vmatpush1.bf16.msra.mxu0 %v2454
  %2602 = vmatprep.subr.bf16.mxu0 %v2457
  %2603 = vmatpush1.bf16.msra.mxu0 %v2456
  %2604 = vmatprep.subr.bf16.mxu0 %v2459
  %2605 = vmatpush1.bf16.msra.mxu0 %v2458
  %2606 = vmatprep.subr.bf16.mxu0 %v2461
  %2607 = vmatpush1.bf16.msra.mxu0 %v2460
  %2608 = vmatprep.mubr.bf16.mxu0 %v2122
  %2609 = vmatmul.mubr.bf16.gmra.mrb[0].mxu0 %v2025
  %v2610 = vpop.f32.mrb[0].mxu0
  %v2611 = vadd.f32 0.0, %v2610
  %v2612 = vpop.f32.mrb[0].mxu0
  %v2613 = vadd.f32 0.0, %v2612
  %v2614 = vpop.f32.mrb[0].mxu0
  %v2615 = vadd.f32 0.0, %v2614
  %v2616 = vpop.f32.mrb[0].mxu0
  %v2617 = vadd.f32 0.0, %v2616
  %2618 = vmatprep.mubr.bf16.mxu0 %v2125
  %2619 = vmatmul.mubr.bf16.gmra.mrb[0].mxu0 %v2029
  %v2620 = vpop.f32.mrb[0].mxu0
  %v2621 = vadd.f32 0.0, %v2620
  %v2622 = vpop.f32.mrb[0].mxu0
  %v2623 = vadd.f32 0.0, %v2622
  %v2624 = vpop.f32.mrb[0].mxu0
  %v2625 = vadd.f32 0.0, %v2624
  %v2626 = vpop.f32.mrb[0].mxu0
  %v2627 = vadd.f32 0.0, %v2626
  %2628 = vmatprep.mubr.bf16.mxu0 %v2128
  %2629 = vmatmul.mubr.bf16.gmra.mrb[0].mxu0 %v2033
  %v2630 = vpop.f32.mrb[0].mxu0
  %v2631 = vadd.f32 0.0, %v2630
  %v2632 = vpop.f32.mrb[0].mxu0
  %v2633 = vadd.f32 0.0, %v2632
  %v2634 = vpop.f32.mrb[0].mxu0
  %v2635 = vadd.f32 0.0, %v2634
  %v2636 = vpop.f32.mrb[0].mxu0
  %v2637 = vadd.f32 0.0, %v2636
  %2638 = vmatprep.mubr.bf16.mxu0 %v2131
  %2639 = vmatmul.mubr.bf16.gmra.mrb[0].mxu0 %v2037
  %v2640 = vpop.f32.mrb[0].mxu0
  %v2641 = vadd.f32 0.0, %v2640
  %v2642 = vpop.f32.mrb[0].mxu0
  %v2643 = vadd.f32 0.0, %v2642
  %v2644 = vpop.f32.mrb[0].mxu0
  %v2645 = vadd.f32 0.0, %v2644
  %v2646 = vpop.f32.mrb[0].mxu0
  %v2647 = vadd.f32 0.0, %v2646
  %2648 = vmatprep.mubr.bf16.mxu0 %v2134
  %2649 = vmatmul.mubr.bf16.gmra.mrb[0].mxu0 %v2041
  %v2650 = vpop.f32.mrb[0].mxu0
  %v2651 = vadd.f32 0.0, %v2650
  %v2652 = vpop.f32.mrb[0].mxu0
  %v2653 = vadd.f32 0.0, %v2652
  %v2654 = vpop.f32.mrb[0].mxu0
  %v2655 = vadd.f32 0.0, %v2654
  %v2656 = vpop.f32.mrb[0].mxu0
  %v2657 = vadd.f32 0.0, %v2656
  %2658 = vmatprep.mubr.bf16.mxu0 %v2137
  %2659 = vmatmul.mubr.bf16.gmra.mrb[0].mxu0 %v2045
  %v2660 = vpop.f32.mrb[0].mxu0
  %v2661 = vadd.f32 0.0, %v2660
  %v2662 = vpop.f32.mrb[0].mxu0
  %v2663 = vadd.f32 0.0, %v2662
  %v2664 = vpop.f32.mrb[0].mxu0
  %v2665 = vadd.f32 0.0, %v2664
  %v2666 = vpop.f32.mrb[0].mxu0
  %v2667 = vadd.f32 0.0, %v2666
  %2668 = vmatprep.mubr.bf16.mxu0 %v2140
  %2669 = vmatmul.mubr.bf16.gmra.mrb[0].mxu0 %v2049
  %v2670 = vpop.f32.mrb[0].mxu0
  %v2671 = vadd.f32 0.0, %v2670
  %v2672 = vpop.f32.mrb[0].mxu0
  %v2673 = vadd.f32 0.0, %v2672
  %v2674 = vpop.f32.mrb[0].mxu0
  %v2675 = vadd.f32 0.0, %v2674
  %v2676 = vpop.f32.mrb[0].mxu0
  %v2677 = vadd.f32 0.0, %v2676
  %2678 = vmatprep.mubr.bf16.mxu0 %v2143
  %2679 = vmatmul.mubr.bf16.gmra.mrb[0].mxu0 %v2053
  %v2680 = vpop.f32.mrb[0].mxu0
  %v2681 = vadd.f32 0.0, %v2680
  %v2682 = vpop.f32.mrb[0].mxu0
  %v2683 = vadd.f32 0.0, %v2682
  %v2684 = vpop.f32.mrb[0].mxu0
  %v2685 = vadd.f32 0.0, %v2684
  %v2686 = vpop.f32.mrb[0].mxu0
  %v2687 = vadd.f32 0.0, %v2686
  %2688 = vmatprep.mubr.bf16.mxu0 %v2146
  %2689 = vmatmul.mubr.bf16.gmra.mrb[0].mxu0 %v2057
  %v2690 = vpop.f32.mrb[0].mxu0
  %v2691 = vadd.f32 0.0, %v2690
  %v2692 = vpop.f32.mrb[0].mxu0
  %v2693 = vadd.f32 0.0, %v2692
  %v2694 = vpop.f32.mrb[0].mxu0
  %v2695 = vadd.f32 0.0, %v2694
  %v2696 = vpop.f32.mrb[0].mxu0
  %v2697 = vadd.f32 0.0, %v2696
  %2698 = vmatprep.mubr.bf16.mxu0 %v2149
  %2699 = vmatmul.mubr.bf16.gmra.mrb[0].mxu0 %v2061
  %v2700 = vpop.f32.mrb[0].mxu0
  %v2701 = vadd.f32 0.0, %v2700
  %v2702 = vpop.f32.mrb[0].mxu0
  %v2703 = vadd.f32 0.0, %v2702
  %v2704 = vpop.f32.mrb[0].mxu0
  %v2705 = vadd.f32 0.0, %v2704
  %v2706 = vpop.f32.mrb[0].mxu0
  %v2707 = vadd.f32 0.0, %v2706
  %2708 = vmatprep.mubr.bf16.mxu0 %v2152
  %2709 = vmatmul.mubr.bf16.gmra.mrb[0].mxu0 %v2065
  %v2710 = vpop.f32.mrb[0].mxu0
  %v2711 = vadd.f32 0.0, %v2710
  %v2712 = vpop.f32.mrb[0].mxu0
  %v2713 = vadd.f32 0.0, %v2712
  %v2714 = vpop.f32.mrb[0].mxu0
  %v2715 = vadd.f32 0.0, %v2714
  %v2716 = vpop.f32.mrb[0].mxu0
  %v2717 = vadd.f32 0.0, %v2716
  %2718 = vmatprep.mubr.bf16.mxu0 %v2155
  %2719 = vmatmul.mubr.bf16.gmra.mrb[0].mxu0 %v2069
  %v2720 = vpop.f32.mrb[0].mxu0
  %v2721 = vadd.f32 0.0, %v2720
  %v2722 = vpop.f32.mrb[0].mxu0
  %v2723 = vadd.f32 0.0, %v2722
  %v2724 = vpop.f32.mrb[0].mxu0
  %v2725 = vadd.f32 0.0, %v2724
  %v2726 = vpop.f32.mrb[0].mxu0
  %v2727 = vadd.f32 0.0, %v2726
  %2728 = vmatprep.mubr.bf16.mxu0 %v2158
  %2729 = vmatmul.mubr.bf16.gmra.mrb[0].mxu0 %v2073
  %v2730 = vpop.f32.mrb[0].mxu0
  %v2731 = vadd.f32 0.0, %v2730
  %v2732 = vpop.f32.mrb[0].mxu0
  %v2733 = vadd.f32 0.0, %v2732
  %v2734 = vpop.f32.mrb[0].mxu0
  %v2735 = vadd.f32 0.0, %v2734
  %v2736 = vpop.f32.mrb[0].mxu0
  %v2737 = vadd.f32 0.0, %v2736
  %2738 = vmatprep.mubr.bf16.mxu0 %v2161
  %2739 = vmatmul.mubr.bf16.gmra.mrb[0].mxu0 %v2077
  %v2740 = vpop.f32.mrb[0].mxu0
  %v2741 = vadd.f32 0.0, %v2740
  %v2742 = vpop.f32.mrb[0].mxu0
  %v2743 = vadd.f32 0.0, %v2742
  %v2744 = vpop.f32.mrb[0].mxu0
  %v2745 = vadd.f32 0.0, %v2744
  %v2746 = vpop.f32.mrb[0].mxu0
  %v2747 = vadd.f32 0.0, %v2746
  %2748 = vmatprep.mubr.bf16.mxu0 %v2164
  %2749 = vmatmul.mubr.bf16.gmra.mrb[0].mxu0 %v2081
  %v2750 = vpop.f32.mrb[0].mxu0
  %v2751 = vadd.f32 0.0, %v2750
  %v2752 = vpop.f32.mrb[0].mxu0
  %v2753 = vadd.f32 0.0, %v2752
  %v2754 = vpop.f32.mrb[0].mxu0
  %v2755 = vadd.f32 0.0, %v2754
  %v2756 = vpop.f32.mrb[0].mxu0
  %v2757 = vadd.f32 0.0, %v2756
  %2758 = vmatprep.mubr.bf16.mxu0 %v2167
  %2759 = vmatmul.mubr.bf16.gmra.mrb[0].mxu0 %v2085
  %v2760 = vpop.f32.mrb[0].mxu0
  %v2761 = vadd.f32 0.0, %v2760
  %v2762 = vpop.f32.mrb[0].mxu0
  %v2763 = vadd.f32 0.0, %v2762
  %v2764 = vpop.f32.mrb[0].mxu0
  %v2765 = vadd.f32 0.0, %v2764
  %v2766 = vpop.f32.mrb[0].mxu0
  %v2767 = vadd.f32 0.0, %v2766
  %2768 = vdwg.mxu0
  %2769 = vmatprep.subr.bf16.mxu0 %v2463
  %2770 = vmatpush1.bf16.msra.mxu0 %v2462
  %2771 = vmatprep.subr.bf16.mxu0 %v2465
  %2772 = vmatpush1.bf16.msra.mxu0 %v2464
  %2773 = vmatprep.subr.bf16.mxu0 %v2467
  %2774 = vmatpush1.bf16.msra.mxu0 %v2466
  %2775 = vmatprep.subr.bf16.mxu0 %v2469
  %2776 = vmatpush1.bf16.msra.mxu0 %v2468
  %2777 = vmatprep.subr.bf16.mxu0 %v2471
  %2778 = vmatpush1.bf16.msra.mxu0 %v2470
  %2779 = vmatprep.subr.bf16.mxu0 %v2473
  %2780 = vmatpush1.bf16.msra.mxu0 %v2472
  %2781 = vmatprep.subr.bf16.mxu0 %v2475
  %2782 = vmatpush1.bf16.msra.mxu0 %v2474
  %2783 = vmatprep.subr.bf16.mxu0 %v2477
  %2784 = vmatpush1.bf16.msra.mxu0 %v2476
  %2785 = vmatprep.subr.bf16.mxu0 %v2479
  %2786 = vmatpush1.bf16.msra.mxu0 %v2478
  %2787 = vmatprep.subr.bf16.mxu0 %v2481
  %2788 = vmatpush1.bf16.msra.mxu0 %v2480
  %2789 = vmatprep.subr.bf16.mxu0 %v2574
  %2790 = vmatpush1.bf16.msra.mxu0 %v2571
  %2791 = vmatprep.subr.bf16.mxu0 0
  %2792 = vmatpush1.bf16.msra.mxu0 0
  %2793 = vmatprep.subr.bf16.mxu0 0
  %2794 = vmatpush1.bf16.msra.mxu0 0
  %2795 = vmatprep.subr.bf16.mxu0 0
  %2796 = vmatpush1.bf16.msra.mxu0 0
  %2797 = vmatprep.subr.bf16.mxu0 0
  %2798 = vmatpush1.bf16.msra.mxu0 0
  %2799 = vmatprep.subr.bf16.mxu0 0
  %2800 = vmatpush1.bf16.msra.mxu0 0
  %2801 = vmatprep.mubr.bf16.mxu0 %v2537
  %2802 = vmatmul.mubr.bf16.gmra.mrb[0].mxu0 %v2171
  %v2803 = vpop.f32.mrb[0].mxu0
  %v2804 = vadd.f32 %v2611, %v2803
  %v2805 = vpop.f32.mrb[0].mxu0
  %v2806 = vadd.f32 %v2613, %v2805
  %v2807 = vpop.f32.mrb[0].mxu0
  %v2808 = vadd.f32 %v2615, %v2807
  %v2809 = vpop.f32.mrb[0].mxu0
  %v2810 = vadd.f32 %v2617, %v2809
  %2811 = vmatprep.mubr.bf16.mxu0 %v2539
  %2812 = vmatmul.mubr.bf16.gmra.mrb[0].mxu0 %v2174
  %v2813 = vpop.f32.mrb[0].mxu0
  %v2814 = vadd.f32 %v2621, %v2813
  %v2815 = vpop.f32.mrb[0].mxu0
  %v2816 = vadd.f32 %v2623, %v2815
  %v2817 = vpop.f32.mrb[0].mxu0
  %v2818 = vadd.f32 %v2625, %v2817
  %v2819 = vpop.f32.mrb[0].mxu0
  %v2820 = vadd.f32 %v2627, %v2819
  %2821 = vmatprep.mubr.bf16.mxu0 %v2541
  %2822 = vmatmul.mubr.bf16.gmra.mrb[0].mxu0 %v2177
  %v2823 = vpop.f32.mrb[0].mxu0
  %v2824 = vadd.f32 %v2631, %v2823
  %v2825 = vpop.f32.mrb[0].mxu0
  %v2826 = vadd.f32 %v2633, %v2825
  %v2827 = vpop.f32.mrb[0].mxu0
  %v2828 = vadd.f32 %v2635, %v2827
  %v2829 = vpop.f32.mrb[0].mxu0
  %v2830 = vadd.f32 %v2637, %v2829
  %2831 = vmatprep.mubr.bf16.mxu0 %v2543
  %2832 = vmatmul.mubr.bf16.gmra.mrb[0].mxu0 %v2180
  %v2833 = vpop.f32.mrb[0].mxu0
  %v2834 = vadd.f32 %v2641, %v2833
  %v2835 = vpop.f32.mrb[0].mxu0
  %v2836 = vadd.f32 %v2643, %v2835
  %v2837 = vpop.f32.mrb[0].mxu0
  %v2838 = vadd.f32 %v2645, %v2837
  %v2839 = vpop.f32.mrb[0].mxu0
  %v2840 = vadd.f32 %v2647, %v2839
  %2841 = vmatprep.mubr.bf16.mxu0 %v2545
  %2842 = vmatmul.mubr.bf16.gmra.mrb[0].mxu0 %v2183
  %v2843 = vpop.f32.mrb[0].mxu0
  %v2844 = vadd.f32 %v2651, %v2843
  %v2845 = vpop.f32.mrb[0].mxu0
  %v2846 = vadd.f32 %v2653, %v2845
  %v2847 = vpop.f32.mrb[0].mxu0
  %v2848 = vadd.f32 %v2655, %v2847
  %v2849 = vpop.f32.mrb[0].mxu0
  %v2850 = vadd.f32 %v2657, %v2849
  %2851 = vmatprep.mubr.bf16.mxu0 %v2547
  %2852 = vmatmul.mubr.bf16.gmra.mrb[0].mxu0 %v2186
  %v2853 = vpop.f32.mrb[0].mxu0
  %v2854 = vadd.f32 %v2661, %v2853
  %v2855 = vpop.f32.mrb[0].mxu0
  %v2856 = vadd.f32 %v2663, %v2855
  %v2857 = vpop.f32.mrb[0].mxu0
  %v2858 = vadd.f32 %v2665, %v2857
  %v2859 = vpop.f32.mrb[0].mxu0
  %v2860 = vadd.f32 %v2667, %v2859
  %2861 = vmatprep.mubr.bf16.mxu0 %v2549
  %2862 = vmatmul.mubr.bf16.gmra.mrb[0].mxu0 %v2189
  %v2863 = vpop.f32.mrb[0].mxu0
  %v2864 = vadd.f32 %v2671, %v2863
  %v2865 = vpop.f32.mrb[0].mxu0
  %v2866 = vadd.f32 %v2673, %v2865
  %v2867 = vpop.f32.mrb[0].mxu0
  %v2868 = vadd.f32 %v2675, %v2867
  %v2869 = vpop.f32.mrb[0].mxu0
  %v2870 = vadd.f32 %v2677, %v2869
  %2871 = vmatprep.mubr.bf16.mxu0 %v2551
  %2872 = vmatmul.mubr.bf16.gmra.mrb[0].mxu0 %v2192
  %v2873 = vpop.f32.mrb[0].mxu0
  %v2874 = vadd.f32 %v2681, %v2873
  %v2875 = vpop.f32.mrb[0].mxu0
  %v2876 = vadd.f32 %v2683, %v2875
  %v2877 = vpop.f32.mrb[0].mxu0
  %v2878 = vadd.f32 %v2685, %v2877
  %v2879 = vpop.f32.mrb[0].mxu0
  %v2880 = vadd.f32 %v2687, %v2879
  %2881 = vmatprep.mubr.bf16.mxu0 %v2553
  %2882 = vmatmul.mubr.bf16.gmra.mrb[0].mxu0 %v2195
  %v2883 = vpop.f32.mrb[0].mxu0
  %v2884 = vadd.f32 %v2691, %v2883
  %v2885 = vpop.f32.mrb[0].mxu0
  %v2886 = vadd.f32 %v2693, %v2885
  %v2887 = vpop.f32.mrb[0].mxu0
  %v2888 = vadd.f32 %v2695, %v2887
  %v2889 = vpop.f32.mrb[0].mxu0
  %v2890 = vadd.f32 %v2697, %v2889
  %2891 = vmatprep.mubr.bf16.mxu0 %v2555
  %2892 = vmatmul.mubr.bf16.gmra.mrb[0].mxu0 %v2198
  %v2893 = vpop.f32.mrb[0].mxu0
  %v2894 = vadd.f32 %v2701, %v2893
  %v2895 = vpop.f32.mrb[0].mxu0
  %v2896 = vadd.f32 %v2703, %v2895
  %v2897 = vpop.f32.mrb[0].mxu0
  %v2898 = vadd.f32 %v2705, %v2897
  %v2899 = vpop.f32.mrb[0].mxu0
  %v2900 = vadd.f32 %v2707, %v2899
  %2901 = vmatprep.mubr.bf16.mxu0 %v2557
  %2902 = vmatmul.mubr.bf16.gmra.mrb[0].mxu0 %v2201
  %v2903 = vpop.f32.mrb[0].mxu0
  %v2904 = vadd.f32 %v2711, %v2903
  %v2905 = vpop.f32.mrb[0].mxu0
  %v2906 = vadd.f32 %v2713, %v2905
  %v2907 = vpop.f32.mrb[0].mxu0
  %v2908 = vadd.f32 %v2715, %v2907
  %v2909 = vpop.f32.mrb[0].mxu0
  %v2910 = vadd.f32 %v2717, %v2909
  %2911 = vmatprep.mubr.bf16.mxu0 %v2559
  %2912 = vmatmul.mubr.bf16.gmra.mrb[0].mxu0 %v2204
  %v2913 = vpop.f32.mrb[0].mxu0
  %v2914 = vadd.f32 %v2721, %v2913
  %v2915 = vpop.f32.mrb[0].mxu0
  %v2916 = vadd.f32 %v2723, %v2915
  %v2917 = vpop.f32.mrb[0].mxu0
  %v2918 = vadd.f32 %v2725, %v2917
  %v2919 = vpop.f32.mrb[0].mxu0
  %v2920 = vadd.f32 %v2727, %v2919
  %2921 = vmatprep.mubr.bf16.mxu0 %v2561
  %2922 = vmatmul.mubr.bf16.gmra.mrb[0].mxu0 %v2207
  %v2923 = vpop.f32.mrb[0].mxu0
  %v2924 = vadd.f32 %v2731, %v2923
  %v2925 = vpop.f32.mrb[0].mxu0
  %v2926 = vadd.f32 %v2733, %v2925
  %v2927 = vpop.f32.mrb[0].mxu0
  %v2928 = vadd.f32 %v2735, %v2927
  %v2929 = vpop.f32.mrb[0].mxu0
  %v2930 = vadd.f32 %v2737, %v2929
  %2931 = vmatprep.mubr.bf16.mxu0 %v2563
  %2932 = vmatmul.mubr.bf16.gmra.mrb[0].mxu0 %v2210
  %v2933 = vpop.f32.mrb[0].mxu0
  %v2934 = vadd.f32 %v2741, %v2933
  %v2935 = vpop.f32.mrb[0].mxu0
  %v2936 = vadd.f32 %v2743, %v2935
  %v2937 = vpop.f32.mrb[0].mxu0
  %v2938 = vadd.f32 %v2745, %v2937
  %v2939 = vpop.f32.mrb[0].mxu0
  %v2940 = vadd.f32 %v2747, %v2939
  %2941 = vmatprep.mubr.bf16.mxu0 %v2565
  %2942 = vmatmul.mubr.bf16.gmra.mrb[0].mxu0 %v2213
  %v2943 = vpop.f32.mrb[0].mxu0
  %v2944 = vadd.f32 %v2751, %v2943
  %v2945 = vpop.f32.mrb[0].mxu0
  %v2946 = vadd.f32 %v2753, %v2945
  %v2947 = vpop.f32.mrb[0].mxu0
  %v2948 = vadd.f32 %v2755, %v2947
  %v2949 = vpop.f32.mrb[0].mxu0
  %v2950 = vadd.f32 %v2757, %v2949
  %2951 = vmatprep.mubr.bf16.mxu0 %v2567
  %2952 = vmatmul.mubr.bf16.gmra.mrb[0].mxu0 %v2216
  %v2953 = vpop.f32.mrb[0].mxu0
  %v2954 = vadd.f32 %v2761, %v2953
  %v2955 = vpop.f32.mrb[0].mxu0
  %v2956 = vadd.f32 %v2763, %v2955
  %v2957 = vpop.f32.mrb[0].mxu0
  %v2958 = vadd.f32 %v2765, %v2957
  %v2959 = vpop.f32.mrb[0].mxu0
  %v2960 = vadd.f32 %v2767, %v2959
  %2961 = vdwg.mxu0
  %3026 = vrot.lane.b32.xlu0 %v2804, 48
  %v3027 = vpop.permute.xlu0 %3026
  %3028 = vrot.lane.b32.xlu0 %v2806, 48
  %v3029 = vpop.permute.xlu0 %3028
  %3030 = vrot.lane.b32.xlu0 %v2808, 48
  %v3031 = vpop.permute.xlu0 %3030
  %3032 = vrot.lane.b32.xlu0 %v2810, 48
  %v3033 = vpop.permute.xlu0 %3032
  %3034 = vrot.lane.b32.xlu0 %v2814, 48
  %v3035 = vpop.permute.xlu0 %3034
  %3036 = vrot.lane.b32.xlu0 %v2816, 48
  %v3037 = vpop.permute.xlu0 %3036
  %3038 = vrot.lane.b32.xlu0 %v2818, 48
  %v3039 = vpop.permute.xlu0 %3038
  %3040 = vrot.lane.b32.xlu0 %v2820, 48
  %v3041 = vpop.permute.xlu0 %3040
  %3042 = vrot.lane.b32.xlu0 %v2824, 48
  %v3043 = vpop.permute.xlu0 %3042
  %3044 = vrot.lane.b32.xlu0 %v2826, 48
  %v3045 = vpop.permute.xlu0 %3044
  %3046 = vrot.lane.b32.xlu0 %v2828, 48
  %v3047 = vpop.permute.xlu0 %3046
  %3048 = vrot.lane.b32.xlu0 %v2830, 48
  %v3049 = vpop.permute.xlu0 %3048
  %3050 = vrot.lane.b32.xlu0 %v2834, 48
  %v3051 = vpop.permute.xlu0 %3050
  %3052 = vrot.lane.b32.xlu0 %v2836, 48
  %v3053 = vpop.permute.xlu0 %3052
  %3054 = vrot.lane.b32.xlu0 %v2838, 48
  %v3055 = vpop.permute.xlu0 %3054
  %3056 = vrot.lane.b32.xlu0 %v2840, 48
  %v3057 = vpop.permute.xlu0 %3056
  %3058 = vrot.lane.b32.xlu0 %v2844, 48
  %v3059 = vpop.permute.xlu0 %3058
  %3060 = vrot.lane.b32.xlu0 %v2846, 48
  %v3061 = vpop.permute.xlu0 %3060
  %3062 = vrot.lane.b32.xlu0 %v2848, 48
  %v3063 = vpop.permute.xlu0 %3062
  %3064 = vrot.lane.b32.xlu0 %v2850, 48
  %v3065 = vpop.permute.xlu0 %3064
  %3066 = vrot.lane.b32.xlu0 %v2854, 48
  %v3067 = vpop.permute.xlu0 %3066
  %3068 = vrot.lane.b32.xlu0 %v2856, 48
  %v3069 = vpop.permute.xlu0 %3068
  %3070 = vrot.lane.b32.xlu0 %v2858, 48
  %v3071 = vpop.permute.xlu0 %3070
  %3072 = vrot.lane.b32.xlu0 %v2860, 48
  %v3073 = vpop.permute.xlu0 %3072
  %3074 = vrot.lane.b32.xlu0 %v2864, 48
  %v3075 = vpop.permute.xlu0 %3074
  %3076 = vrot.lane.b32.xlu0 %v2866, 48
  %v3077 = vpop.permute.xlu0 %3076
  %3078 = vrot.lane.b32.xlu0 %v2868, 48
  %v3079 = vpop.permute.xlu0 %3078
  %3080 = vrot.lane.b32.xlu0 %v2870, 48
  %v3081 = vpop.permute.xlu0 %3080
  %3082 = vrot.lane.b32.xlu0 %v2874, 48
  %v3083 = vpop.permute.xlu0 %3082
  %3084 = vrot.lane.b32.xlu0 %v2876, 48
  %v3085 = vpop.permute.xlu0 %3084
  %3086 = vrot.lane.b32.xlu0 %v2878, 48
  %v3087 = vpop.permute.xlu0 %3086
  %3088 = vrot.lane.b32.xlu0 %v2880, 48
  %v3089 = vpop.permute.xlu0 %3088
  %3090 = vrot.lane.b32.xlu0 %v2884, 48
  %v3091 = vpop.permute.xlu0 %3090
  %3092 = vrot.lane.b32.xlu0 %v2886, 48
  %v3093 = vpop.permute.xlu0 %3092
  %3094 = vrot.lane.b32.xlu0 %v2888, 48
  %v3095 = vpop.permute.xlu0 %3094
  %3096 = vrot.lane.b32.xlu0 %v2890, 48
  %v3097 = vpop.permute.xlu0 %3096
  %3098 = vrot.lane.b32.xlu0 %v2894, 48
  %v3099 = vpop.permute.xlu0 %3098
  %3100 = vrot.lane.b32.xlu0 %v2896, 48
  %v3101 = vpop.permute.xlu0 %3100
  %3102 = vrot.lane.b32.xlu0 %v2898, 48
  %v3103 = vpop.permute.xlu0 %3102
  %3104 = vrot.lane.b32.xlu0 %v2900, 48
  %v3105 = vpop.permute.xlu0 %3104
  %3106 = vrot.lane.b32.xlu0 %v2904, 48
  %v3107 = vpop.permute.xlu0 %3106
  %3108 = vrot.lane.b32.xlu0 %v2906, 48
  %v3109 = vpop.permute.xlu0 %3108
  %3110 = vrot.lane.b32.xlu0 %v2908, 48
  %v3111 = vpop.permute.xlu0 %3110
  %3112 = vrot.lane.b32.xlu0 %v2910, 48
  %v3113 = vpop.permute.xlu0 %3112
  %3114 = vrot.lane.b32.xlu0 %v2914, 48
  %v3115 = vpop.permute.xlu0 %3114
  %3116 = vrot.lane.b32.xlu0 %v2916, 48
  %v3117 = vpop.permute.xlu0 %3116
  %3118 = vrot.lane.b32.xlu0 %v2918, 48
  %v3119 = vpop.permute.xlu0 %3118
  %3120 = vrot.lane.b32.xlu0 %v2920, 48
  %v3121 = vpop.permute.xlu0 %3120
  %3122 = vrot.lane.b32.xlu0 %v2924, 48
  %v3123 = vpop.permute.xlu0 %3122
  %3124 = vrot.lane.b32.xlu0 %v2926, 48
  %v3125 = vpop.permute.xlu0 %3124
  %3126 = vrot.lane.b32.xlu0 %v2928, 48
  %v3127 = vpop.permute.xlu0 %3126
  %3128 = vrot.lane.b32.xlu0 %v2930, 48
  %v3129 = vpop.permute.xlu0 %3128
  %3130 = vrot.lane.b32.xlu0 %v2934, 48
  %v3131 = vpop.permute.xlu0 %3130
  %3132 = vrot.lane.b32.xlu0 %v2936, 48
  %v3133 = vpop.permute.xlu0 %3132
  %3134 = vrot.lane.b32.xlu0 %v2938, 48
  %v3135 = vpop.permute.xlu0 %3134
  %3136 = vrot.lane.b32.xlu0 %v2940, 48
  %v3137 = vpop.permute.xlu0 %3136
  %3138 = vrot.lane.b32.xlu0 %v2944, 48
  %v3139 = vpop.permute.xlu0 %3138
  %3140 = vrot.lane.b32.xlu0 %v2946, 48
  %v3141 = vpop.permute.xlu0 %3140
  %3142 = vrot.lane.b32.xlu0 %v2948, 48
  %v3143 = vpop.permute.xlu0 %3142
  %3144 = vrot.lane.b32.xlu0 %v2950, 48
  %v3145 = vpop.permute.xlu0 %3144
  %3146 = vrot.lane.b32.xlu0 %v2954, 48
  %v3147 = vpop.permute.xlu0 %3146
  %3148 = vrot.lane.b32.xlu0 %v2956, 48
  %v3149 = vpop.permute.xlu0 %3148
  %3150 = vrot.lane.b32.xlu0 %v2958, 48
  %v3151 = vpop.permute.xlu0 %3150
  %3152 = vrot.lane.b32.xlu0 %v2960, 48
  %v3153 = vpop.permute.xlu0 %3152
  %vm3154 = vcmask 392192
  %v3155 = vsel %vm3154, %v3027, %v3029
  %v3156 = vsel %vm3154, %v3031, %v3033
  %v3157 = vsel %vm3154, %v3035, %v3037
  %v3158 = vsel %vm3154, %v3039, %v3041
  %v3159 = vsel %vm3154, %v3043, %v3045
  %v3160 = vsel %vm3154, %v3047, %v3049
  %v3161 = vsel %vm3154, %v3051, %v3053
  %v3162 = vsel %vm3154, %v3055, %v3057
  %v3163 = vsel %vm3154, %v3059, %v3061
  %v3164 = vsel %vm3154, %v3063, %v3065
  %v3165 = vsel %vm3154, %v3067, %v3069
  %v3166 = vsel %vm3154, %v3071, %v3073
  %v3167 = vsel %vm3154, %v3075, %v3077
  %v3168 = vsel %vm3154, %v3079, %v3081
  %v3169 = vsel %vm3154, %v3083, %v3085
  %v3170 = vsel %vm3154, %v3087, %v3089
  %v3171 = vsel %vm3154, %v3091, %v3093
  %v3172 = vsel %vm3154, %v3095, %v3097
  %v3173 = vsel %vm3154, %v3099, %v3101
  %v3174 = vsel %vm3154, %v3103, %v3105
  %v3175 = vsel %vm3154, %v3107, %v3109
  %v3176 = vsel %vm3154, %v3111, %v3113
  %v3177 = vsel %vm3154, %v3115, %v3117
  %v3178 = vsel %vm3154, %v3119, %v3121
  %v3179 = vsel %vm3154, %v3123, %v3125
  %v3180 = vsel %vm3154, %v3127, %v3129
  %v3181 = vsel %vm3154, %v3131, %v3133
  %v3182 = vsel %vm3154, %v3135, %v3137
  %v3183 = vsel %vm3154, %v3139, %v3141
  %v3184 = vsel %vm3154, %v3143, %v3145
  %v3185 = vsel %vm3154, %v3147, %v3149
  %v3186 = vsel %vm3154, %v3151, %v3153
  %v3219 = vmax.f32 %v2804, %v3155
  %v3220 = vmax.f32 %v2808, %v3156
  %v3221 = vmax.f32 %v2814, %v3157
  %v3222 = vmax.f32 %v2818, %v3158
  %v3223 = vmax.f32 %v2824, %v3159
  %v3224 = vmax.f32 %v2828, %v3160
  %v3225 = vmax.f32 %v2834, %v3161
  %v3226 = vmax.f32 %v2838, %v3162
  %v3227 = vmax.f32 %v2844, %v3163
  %v3228 = vmax.f32 %v2848, %v3164
  %v3229 = vmax.f32 %v2854, %v3165
  %v3230 = vmax.f32 %v2858, %v3166
  %v3231 = vmax.f32 %v2864, %v3167
  %v3232 = vmax.f32 %v2868, %v3168
  %v3233 = vmax.f32 %v2874, %v3169
  %v3234 = vmax.f32 %v2878, %v3170
  %v3235 = vmax.f32 %v2884, %v3171
  %v3236 = vmax.f32 %v2888, %v3172
  %v3237 = vmax.f32 %v2894, %v3173
  %v3238 = vmax.f32 %v2898, %v3174
  %v3239 = vmax.f32 %v2904, %v3175
  %v3240 = vmax.f32 %v2908, %v3176
  %v3241 = vmax.f32 %v2914, %v3177
  %v3242 = vmax.f32 %v2918, %v3178
  %v3243 = vmax.f32 %v2924, %v3179
  %v3244 = vmax.f32 %v2928, %v3180
  %v3245 = vmax.f32 %v2934, %v3181
  %v3246 = vmax.f32 %v2938, %v3182
  %v3247 = vmax.f32 %v2944, %v3183
  %v3248 = vmax.f32 %v2948, %v3184
  %v3249 = vmax.f32 %v2954, %v3185
  %v3250 = vmax.f32 %v2958, %v3186
  %vm3283 = vcmask 1045504
  %v3284 = vrot.slane %v3219, 2
  %v3285 = vrot.slane %v3220, 2
  %v3286 = vsel %vm3283, %v3284, %v3285
  %v3287 = vrot.slane %v3221, 2
  %v3288 = vsel %vm3283, %v3285, %v3287
  %v3289 = vrot.slane %v3222, 2
  %v3290 = vsel %vm3283, %v3287, %v3289
  %v3291 = vrot.slane %v3223, 2
  %v3292 = vsel %vm3283, %v3289, %v3291
  %v3293 = vrot.slane %v3224, 2
  %v3294 = vsel %vm3283, %v3291, %v3293
  %v3295 = vrot.slane %v3225, 2
  %v3296 = vsel %vm3283, %v3293, %v3295
  %v3297 = vrot.slane %v3226, 2
  %v3298 = vsel %vm3283, %v3295, %v3297
  %v3299 = vrot.slane %v3227, 2
  %v3300 = vsel %vm3283, %v3297, %v3299
  %v3301 = vrot.slane %v3228, 2
  %v3302 = vsel %vm3283, %v3299, %v3301
  %v3303 = vrot.slane %v3229, 2
  %v3304 = vsel %vm3283, %v3301, %v3303
  %v3305 = vrot.slane %v3230, 2
  %v3306 = vsel %vm3283, %v3303, %v3305
  %v3307 = vrot.slane %v3231, 2
  %v3308 = vsel %vm3283, %v3305, %v3307
  %v3309 = vrot.slane %v3232, 2
  %v3310 = vsel %vm3283, %v3307, %v3309
  %v3311 = vrot.slane %v3233, 2
  %v3312 = vsel %vm3283, %v3309, %v3311
  %v3313 = vrot.slane %v3234, 2
  %v3314 = vsel %vm3283, %v3311, %v3313
  %v3315 = vrot.slane %v3235, 2
  %v3316 = vsel %vm3283, %v3313, %v3315
  %v3317 = vrot.slane %v3236, 2
  %v3318 = vsel %vm3283, %v3315, %v3317
  %v3319 = vrot.slane %v3237, 2
  %v3320 = vsel %vm3283, %v3317, %v3319
  %v3321 = vrot.slane %v3238, 2
  %v3322 = vsel %vm3283, %v3319, %v3321
  %v3323 = vrot.slane %v3239, 2
  %v3324 = vsel %vm3283, %v3321, %v3323
  %v3325 = vrot.slane %v3240, 2
  %v3326 = vsel %vm3283, %v3323, %v3325
  %v3327 = vrot.slane %v3241, 2
  %v3328 = vsel %vm3283, %v3325, %v3327
  %v3329 = vrot.slane %v3242, 2
  %v3330 = vsel %vm3283, %v3327, %v3329
  %v3331 = vrot.slane %v3243, 2
  %v3332 = vsel %vm3283, %v3329, %v3331
  %v3333 = vrot.slane %v3244, 2
  %v3334 = vsel %vm3283, %v3331, %v3333
  %v3335 = vrot.slane %v3245, 2
  %v3336 = vsel %vm3283, %v3333, %v3335
  %v3337 = vrot.slane %v3246, 2
  %v3338 = vsel %vm3283, %v3335, %v3337
  %v3339 = vrot.slane %v3247, 2
  %v3340 = vsel %vm3283, %v3337, %v3339
  %v3341 = vrot.slane %v3248, 2
  %v3342 = vsel %vm3283, %v3339, %v3341
  %v3343 = vrot.slane %v3249, 2
  %v3344 = vsel %vm3283, %v3341, %v3343
  %v3345 = vrot.slane %v3250, 2
  %v3346 = vsel %vm3283, %v3343, %v3345
  %v3347 = vrot.slane 0.0, 2
  %v3348 = vsel %vm3283, %v3345, %v3347
  %v3381 = vmax.f32 %v3219, %v3286
  %v3382 = vmax.f32 %v3220, %v3288
  %v3383 = vmax.f32 %v3221, %v3290
  %v3384 = vmax.f32 %v3222, %v3292
  %v3385 = vmax.f32 %v3223, %v3294
  %v3386 = vmax.f32 %v3224, %v3296
  %v3387 = vmax.f32 %v3225, %v3298
  %v3388 = vmax.f32 %v3226, %v3300
  %v3389 = vmax.f32 %v3227, %v3302
  %v3390 = vmax.f32 %v3228, %v3304
  %v3391 = vmax.f32 %v3229, %v3306
  %v3392 = vmax.f32 %v3230, %v3308
  %v3393 = vmax.f32 %v3231, %v3310
  %v3394 = vmax.f32 %v3232, %v3312
  %v3395 = vmax.f32 %v3233, %v3314
  %v3396 = vmax.f32 %v3234, %v3316
  %v3397 = vmax.f32 %v3235, %v3318
  %v3398 = vmax.f32 %v3236, %v3320
  %v3399 = vmax.f32 %v3237, %v3322
  %v3400 = vmax.f32 %v3238, %v3324
  %v3401 = vmax.f32 %v3239, %v3326
  %v3402 = vmax.f32 %v3240, %v3328
  %v3403 = vmax.f32 %v3241, %v3330
  %v3404 = vmax.f32 %v3242, %v3332
  %v3405 = vmax.f32 %v3243, %v3334
  %v3406 = vmax.f32 %v3244, %v3336
  %v3407 = vmax.f32 %v3245, %v3338
  %v3408 = vmax.f32 %v3246, %v3340
  %v3409 = vmax.f32 %v3247, %v3342
  %v3410 = vmax.f32 %v3248, %v3344
  %v3411 = vmax.f32 %v3249, %v3346
  %v3412 = vmax.f32 %v3250, %v3348
  %v3413 = vld [vmem:[%s4] sm:$0x1]
  %v3415 = vlaneseq
  %v3416 = vshrl.u32 %v3415, 7
  %v3417 = vsub.s32 0, %v3416
  %v3418 = vrot.slane %v3413, %v3417
  %v3420 = vadd.f32 %v3381, %v3418
  %v3421 = vadd.f32 %v3382, %v3418
  %v3422 = vadd.f32 %v3383, %v3418
  %v3423 = vadd.f32 %v3384, %v3418
  %v3424 = vadd.f32 %v3385, %v3418
  %v3425 = vadd.f32 %v3386, %v3418
  %v3426 = vadd.f32 %v3387, %v3418
  %v3427 = vadd.f32 %v3388, %v3418
  %v3428 = vadd.f32 %v3389, %v3418
  %v3429 = vadd.f32 %v3390, %v3418
  %v3430 = vadd.f32 %v3391, %v3418
  %v3431 = vadd.f32 %v3392, %v3418
  %v3432 = vadd.f32 %v3393, %v3418
  %v3433 = vadd.f32 %v3394, %v3418
  %v3434 = vadd.f32 %v3395, %v3418
  %v3435 = vadd.f32 %v3396, %v3418
  %v3436 = vadd.f32 %v3397, %v3418
  %v3437 = vadd.f32 %v3398, %v3418
  %v3438 = vadd.f32 %v3399, %v3418
  %v3439 = vadd.f32 %v3400, %v3418
  %v3440 = vadd.f32 %v3401, %v3418
  %v3441 = vadd.f32 %v3402, %v3418
  %v3442 = vadd.f32 %v3403, %v3418
  %v3443 = vadd.f32 %v3404, %v3418
  %v3444 = vadd.f32 %v3405, %v3418
  %v3445 = vadd.f32 %v3406, %v3418
  %v3446 = vadd.f32 %v3407, %v3418
  %v3447 = vadd.f32 %v3408, %v3418
  %v3448 = vadd.f32 %v3409, %v3418
  %v3449 = vadd.f32 %v3410, %v3418
  %v3450 = vadd.f32 %v3411, %v3418
  %v3451 = vadd.f32 %v3412, %v3418
  %v3452 = vmax.f32 %v3420, 0.0
  %v3453 = vmax.f32 %v3421, 0.0
  %v3454 = vmax.f32 %v3422, 0.0
  %v3455 = vmax.f32 %v3423, 0.0
  %v3456 = vmax.f32 %v3424, 0.0
  %v3457 = vmax.f32 %v3425, 0.0
  %v3458 = vmax.f32 %v3426, 0.0
  %v3459 = vmax.f32 %v3427, 0.0
  %v3460 = vmax.f32 %v3428, 0.0
  %v3461 = vmax.f32 %v3429, 0.0
  %v3462 = vmax.f32 %v3430, 0.0
  %v3463 = vmax.f32 %v3431, 0.0
  %v3464 = vmax.f32 %v3432, 0.0
  %v3465 = vmax.f32 %v3433, 0.0
  %v3466 = vmax.f32 %v3434, 0.0
  %v3467 = vmax.f32 %v3435, 0.0
  %v3468 = vmax.f32 %v3436, 0.0
  %v3469 = vmax.f32 %v3437, 0.0
  %v3470 = vmax.f32 %v3438, 0.0
  %v3471 = vmax.f32 %v3439, 0.0
  %v3472 = vmax.f32 %v3440, 0.0
  %v3473 = vmax.f32 %v3441, 0.0
  %v3474 = vmax.f32 %v3442, 0.0
  %v3475 = vmax.f32 %v3443, 0.0
  %v3476 = vmax.f32 %v3444, 0.0
  %v3477 = vmax.f32 %v3445, 0.0
  %v3478 = vmax.f32 %v3446, 0.0
  %v3479 = vmax.f32 %v3447, 0.0
  %v3480 = vmax.f32 %v3448, 0.0
  %v3481 = vmax.f32 %v3449, 0.0
  %v3482 = vmax.f32 %v3450, 0.0
  %v3483 = vmax.f32 %v3451, 0.0
  %v3484 = vpack.c.bf16 %v3453, %v3452
  %v3485 = vpack.c.bf16 %v3455, %v3454
  %v3486 = vpack.c.bf16 %v3457, %v3456
  %v3487 = vpack.c.bf16 %v3459, %v3458
  %v3488 = vpack.c.bf16 %v3461, %v3460
  %v3489 = vpack.c.bf16 %v3463, %v3462
  %v3490 = vpack.c.bf16 %v3465, %v3464
  %v3491 = vpack.c.bf16 %v3467, %v3466
  %v3492 = vpack.c.bf16 %v3469, %v3468
  %v3493 = vpack.c.bf16 %v3471, %v3470
  %v3494 = vpack.c.bf16 %v3473, %v3472
  %v3495 = vpack.c.bf16 %v3475, %v3474
  %v3496 = vpack.c.bf16 %v3477, %v3476
  %v3497 = vpack.c.bf16 %v3479, %v3478
  %v3498 = vpack.c.bf16 %v3481, %v3480
  %v3499 = vpack.c.bf16 %v3483, %v3482
  %v3500 = vlaneseq
  %v3501 = vshrl.u32 %v3500, 7
  %v3502 = vlaneseq
  %v3503 = vand.u32 %v3502, 127
  %v3504 = vadd.s32 %v3503, 128
  %v3505 = vld [vmem:[%s6] sm:$0x1]
  %v3506 = vmul.u32 %v3501, 32
  %vm3507 = vcmp.eq.s32.totalorder %v3503, %v3506
  %vm3508 = vcmp.eq.s32.totalorder %v3504, %v3506
  %v3509 = vsel %vm3507, 1, 0
  %v3510 = vsel %vm3508, 1, 0
  %v3511 = vcvt.s32.f32 %v3509
  %v3512 = vcvt.s32.f32 %v3510
  %v3513 = vpack.c.bf16 %v3511, %v3511
  %v3514 = vpack.c.bf16 %v3512, %v3512
  %3515 = vmatprep.subr.bf16.mxu0 0
  %3516 = vmatpush1.bf16.msra.mxu0 %v3484
  %3517 = vmatprep.subr.bf16.mxu0 0
  %3518 = vmatpush1.bf16.msra.mxu0 %v3485
  %3519 = vmatprep.subr.bf16.mxu0 0
  %3520 = vmatpush1.bf16.msra.mxu0 %v3486
  %3521 = vmatprep.subr.bf16.mxu0 0
  %3522 = vmatpush1.bf16.msra.mxu0 %v3487
  %3523 = vmatprep.subr.bf16.mxu0 0
  %3524 = vmatpush1.bf16.msra.mxu0 %v3488
  %3525 = vmatprep.subr.bf16.mxu0 0
  %3526 = vmatpush1.bf16.msra.mxu0 %v3489
  %3527 = vmatprep.subr.bf16.mxu0 0
  %3528 = vmatpush1.bf16.msra.mxu0 %v3490
  %3529 = vmatprep.subr.bf16.mxu0 0
  %3530 = vmatpush1.bf16.msra.mxu0 %v3491
  %3531 = vmatprep.subr.bf16.mxu0 0
  %3532 = vmatpush1.bf16.msra.mxu0 %v3492
  %3533 = vmatprep.subr.bf16.mxu0 0
  %3534 = vmatpush1.bf16.msra.mxu0 %v3493
  %3535 = vmatprep.subr.bf16.mxu0 0
  %3536 = vmatpush1.bf16.msra.mxu0 %v3494
  %3537 = vmatprep.subr.bf16.mxu0 0
  %3538 = vmatpush1.bf16.msra.mxu0 %v3495
  %3539 = vmatprep.subr.bf16.mxu0 0
  %3540 = vmatpush1.bf16.msra.mxu0 %v3496
  %3541 = vmatprep.subr.bf16.mxu0 0
  %3542 = vmatpush1.bf16.msra.mxu0 %v3497
  %3543 = vmatprep.subr.bf16.mxu0 0
  %3544 = vmatpush1.bf16.msra.mxu0 %v3498
  %3545 = vmatprep.subr.bf16.mxu0 0
  %3546 = vmatpush1.bf16.msra.mxu0 %v3499
  %3547 = vmatprep.mubr.bf16.mxu0 %v3514
  %3548 = vmatmul.mubr.bf16.gmra.mrb[0].mxu0 %v3513
  %v3549 = vpop.f32.mrb[0].mxu0
  %v3550 = vadd.f32 0.0, %v3549
  %v3551 = vpop.f32.mrb[0].mxu0
  %v3552 = vpop.f32.mrb[0].mxu0
  %v3553 = vpop.f32.mrb[0].mxu0
  %3554 = vdwg.mxu0
  %v3555 = vpack.c.bf16 %v3550, %v3550
  %v3556 = vld [vmem:[%s5] sm:$0xf]
  %v3557 = vld [vmem:[%s5 + $0x4] sm:$0xf]
  %v3558 = vld [vmem:[%s5 + $0x8] sm:$0xf]
  %v3559 = vld [vmem:[%s5 + $0xc] sm:$0xf]
  %v3560 = vld [vmem:[%s5 + $0x10] sm:$0xf]
  %v3561 = vld [vmem:[%s5 + $0x14] sm:$0xf]
  %v3562 = vld [vmem:[%s5 + $0x18] sm:$0xf]
  %v3563 = vld [vmem:[%s5 + $0x1c] sm:$0xf]
  %v3564 = vld [vmem:[%s5 + $0x20] sm:$0xf]
  %v3565 = vld [vmem:[%s5 + $0x24] sm:$0xf]
  %v3576 = vunpack.c.l.b16 %v3556
  %v3577 = vunpack.c.l.b16 %v3557
  %v3578 = vunpack.c.l.b16 %v3558
  %v3579 = vunpack.c.l.b16 %v3559
  %v3580 = vunpack.c.l.b16 %v3560
  %v3581 = vunpack.c.l.b16 %v3561
  %v3582 = vunpack.c.l.b16 %v3562
  %v3583 = vunpack.c.l.b16 %v3563
  %v3584 = vunpack.c.l.b16 %v3564
  %v3585 = vunpack.c.l.b16 %v3565
  %v3586 = vpack.c.b16 %v3577, %v3576
  %v3587 = vpack.c.b16 %v3579, %v3578
  %v3588 = vpack.c.b16 %v3581, %v3580
  %v3589 = vpack.c.b16 %v3583, %v3582
  %v3590 = vpack.c.b16 %v3585, %v3584
  %v3597 = vsel %vm2169, %v3555, 0
  %3599 = vmatprep.subr.bf16.mxu0 0
  %3600 = vmatpush1.bf16.msra.mxu0 %v3586
  %3601 = vmatprep.subr.bf16.mxu0 0
  %3602 = vmatpush1.bf16.msra.mxu0 %v3587
  %3603 = vmatprep.subr.bf16.mxu0 0
  %3604 = vmatpush1.bf16.msra.mxu0 %v3588
  %3605 = vmatprep.subr.bf16.mxu0 0
  %3606 = vmatpush1.bf16.msra.mxu0 %v3589
  %3607 = vmatprep.subr.bf16.mxu0 0
  %3608 = vmatpush1.bf16.msra.mxu0 %v3590
  %3609 = vmatprep.subr.bf16.mxu0 0
  %3610 = vmatpush1.bf16.msra.mxu0 0
  %3611 = vmatprep.subr.bf16.mxu0 0
  %3612 = vmatpush1.bf16.msra.mxu0 0
  %3613 = vmatprep.subr.bf16.mxu0 0
  %3614 = vmatpush1.bf16.msra.mxu0 0
  %3615 = vmatprep.subr.bf16.mxu0 0
  %3616 = vmatpush1.bf16.msra.mxu0 0
  %3617 = vmatprep.subr.bf16.mxu0 0
  %3618 = vmatpush1.bf16.msra.mxu0 0
  %3619 = vmatprep.subr.bf16.mxu0 0
  %3620 = vmatpush1.bf16.msra.mxu0 0
  %3621 = vmatprep.subr.bf16.mxu0 0
  %3622 = vmatpush1.bf16.msra.mxu0 0
  %3623 = vmatprep.subr.bf16.mxu0 0
  %3624 = vmatpush1.bf16.msra.mxu0 0
  %3625 = vmatprep.subr.bf16.mxu0 0
  %3626 = vmatpush1.bf16.msra.mxu0 0
  %3627 = vmatprep.subr.bf16.mxu0 0
  %3628 = vmatpush1.bf16.msra.mxu0 0
  %3629 = vmatprep.subr.bf16.mxu0 0
  %3630 = vmatpush1.bf16.msra.mxu0 0
  %3631 = vmatprep.mubr.bf16.mxu0 0
  %3632 = vmatmul.mubr.bf16.gmra.mrb[0].mxu0 %v3597
  %v3633 = vpop.f32.mrb[0].mxu0
  %v3634 = vadd.f32 0.0, %v3633
  %v3635 = vpop.f32.mrb[0].mxu0
  %v3636 = vpop.f32.mrb[0].mxu0
  %v3637 = vpop.f32.mrb[0].mxu0
  %3638 = vdwg.mxu0
  %v3640 = vlaneseq
  %v3641 = vshrl.u32 %v3640, 7
  %v3642 = vsub.s32 0, %v3641
  %v3643 = vrot.slane %v3505, %v3642
  %v3645 = vadd.f32 %v3643, %v3634
  %v3646 = vadd.s32 %v3506, 4
  %vm3647 = vcmp.eq.s32.totalorder %v3503, %v3646
  %vm3648 = vcmp.eq.s32.totalorder %v3504, %v3646
  %v3649 = vsel %vm3647, 1, 0
  %v3650 = vsel %vm3648, 1, 0
  %v3651 = vcvt.s32.f32 %v3649
  %v3652 = vcvt.s32.f32 %v3650
  %v3653 = vpack.c.bf16 %v3651, %v3651
  %v3654 = vpack.c.bf16 %v3652, %v3652
  %3655 = vmatprep.subr.bf16.mxu0 0
  %3656 = vmatpush1.bf16.msra.mxu0 %v3484
  %3657 = vmatprep.subr.bf16.mxu0 0
  %3658 = vmatpush1.bf16.msra.mxu0 %v3485
  %3659 = vmatprep.subr.bf16.mxu0 0
  %3660 = vmatpush1.bf16.msra.mxu0 %v3486
  %3661 = vmatprep.subr.bf16.mxu0 0
  %3662 = vmatpush1.bf16.msra.mxu0 %v3487
  %3663 = vmatprep.subr.bf16.mxu0 0
  %3664 = vmatpush1.bf16.msra.mxu0 %v3488
  %3665 = vmatprep.subr.bf16.mxu0 0
  %3666 = vmatpush1.bf16.msra.mxu0 %v3489
  %3667 = vmatprep.subr.bf16.mxu0 0
  %3668 = vmatpush1.bf16.msra.mxu0 %v3490
  %3669 = vmatprep.subr.bf16.mxu0 0
  %3670 = vmatpush1.bf16.msra.mxu0 %v3491
  %3671 = vmatprep.subr.bf16.mxu0 0
  %3672 = vmatpush1.bf16.msra.mxu0 %v3492
  %3673 = vmatprep.subr.bf16.mxu0 0
  %3674 = vmatpush1.bf16.msra.mxu0 %v3493
  %3675 = vmatprep.subr.bf16.mxu0 0
  %3676 = vmatpush1.bf16.msra.mxu0 %v3494
  %3677 = vmatprep.subr.bf16.mxu0 0
  %3678 = vmatpush1.bf16.msra.mxu0 %v3495
  %3679 = vmatprep.subr.bf16.mxu0 0
  %3680 = vmatpush1.bf16.msra.mxu0 %v3496
  %3681 = vmatprep.subr.bf16.mxu0 0
  %3682 = vmatpush1.bf16.msra.mxu0 %v3497
  %3683 = vmatprep.subr.bf16.mxu0 0
  %3684 = vmatpush1.bf16.msra.mxu0 %v3498
  %3685 = vmatprep.subr.bf16.mxu0 0
  %3686 = vmatpush1.bf16.msra.mxu0 %v3499
  %3687 = vmatprep.mubr.bf16.mxu0 %v3654
  %3688 = vmatmul.mubr.bf16.gmra.mrb[0].mxu0 %v3653
  %v3689 = vpop.f32.mrb[0].mxu0
  %v3690 = vadd.f32 0.0, %v3689
  %v3691 = vpop.f32.mrb[0].mxu0
  %v3692 = vpop.f32.mrb[0].mxu0
  %v3693 = vpop.f32.mrb[0].mxu0
  %3694 = vdwg.mxu0
  %v3695 = vpack.c.bf16 %v3690, %v3690
  %v3696 = vld [vmem:[%s5 + $0x28] sm:$0xf]
  %v3697 = vld [vmem:[%s5 + $0x2c] sm:$0xf]
  %v3698 = vld [vmem:[%s5 + $0x30] sm:$0xf]
  %v3699 = vld [vmem:[%s5 + $0x34] sm:$0xf]
  %v3700 = vld [vmem:[%s5 + $0x38] sm:$0xf]
  %v3701 = vld [vmem:[%s5 + $0x3c] sm:$0xf]
  %v3702 = vld [vmem:[%s5 + $0x40] sm:$0xf]
  %v3703 = vld [vmem:[%s5 + $0x44] sm:$0xf]
  %v3704 = vld [vmem:[%s5 + $0x48] sm:$0xf]
  %v3705 = vld [vmem:[%s5 + $0x4c] sm:$0xf]
  %v3716 = vunpack.c.l.b16 %v3696
  %v3717 = vunpack.c.l.b16 %v3697
  %v3718 = vunpack.c.l.b16 %v3698
  %v3719 = vunpack.c.l.b16 %v3699
  %v3720 = vunpack.c.l.b16 %v3700
  %v3721 = vunpack.c.l.b16 %v3701
  %v3722 = vunpack.c.l.b16 %v3702
  %v3723 = vunpack.c.l.b16 %v3703
  %v3724 = vunpack.c.l.b16 %v3704
  %v3725 = vunpack.c.l.b16 %v3705
  %v3726 = vpack.c.b16 %v3717, %v3716
  %v3727 = vpack.c.b16 %v3719, %v3718
  %v3728 = vpack.c.b16 %v3721, %v3720
  %v3729 = vpack.c.b16 %v3723, %v3722
  %v3730 = vpack.c.b16 %v3725, %v3724
  %v3737 = vsel %vm2169, %v3695, 0
  %3739 = vmatprep.subr.bf16.mxu0 0
  %3740 = vmatpush1.bf16.msra.mxu0 %v3726
  %3741 = vmatprep.subr.bf16.mxu0 0
  %3742 = vmatpush1.bf16.msra.mxu0 %v3727
  %3743 = vmatprep.subr.bf16.mxu0 0
  %3744 = vmatpush1.bf16.msra.mxu0 %v3728
  %3745 = vmatprep.subr.bf16.mxu0 0
  %3746 = vmatpush1.bf16.msra.mxu0 %v3729
  %3747 = vmatprep.subr.bf16.mxu0 0
  %3748 = vmatpush1.bf16.msra.mxu0 %v3730
  %3749 = vmatprep.subr.bf16.mxu0 0
  %3750 = vmatpush1.bf16.msra.mxu0 0
  %3751 = vmatprep.subr.bf16.mxu0 0
  %3752 = vmatpush1.bf16.msra.mxu0 0
  %3753 = vmatprep.subr.bf16.mxu0 0
  %3754 = vmatpush1.bf16.msra.mxu0 0
  %3755 = vmatprep.subr.bf16.mxu0 0
  %3756 = vmatpush1.bf16.msra.mxu0 0
  %3757 = vmatprep.subr.bf16.mxu0 0
  %3758 = vmatpush1.bf16.msra.mxu0 0
  %3759 = vmatprep.subr.bf16.mxu0 0
  %3760 = vmatpush1.bf16.msra.mxu0 0
  %3761 = vmatprep.subr.bf16.mxu0 0
  %3762 = vmatpush1.bf16.msra.mxu0 0
  %3763 = vmatprep.subr.bf16.mxu0 0
  %3764 = vmatpush1.bf16.msra.mxu0 0
  %3765 = vmatprep.subr.bf16.mxu0 0
  %3766 = vmatpush1.bf16.msra.mxu0 0
  %3767 = vmatprep.subr.bf16.mxu0 0
  %3768 = vmatpush1.bf16.msra.mxu0 0
  %3769 = vmatprep.subr.bf16.mxu0 0
  %3770 = vmatpush1.bf16.msra.mxu0 0
  %3771 = vmatprep.mubr.bf16.mxu0 0
  %3772 = vmatmul.mubr.bf16.gmra.mrb[0].mxu0 %v3737
  %v3773 = vpop.f32.mrb[0].mxu0
  %v3774 = vadd.f32 0.0, %v3773
  %v3775 = vpop.f32.mrb[0].mxu0
  %v3776 = vpop.f32.mrb[0].mxu0
  %v3777 = vpop.f32.mrb[0].mxu0
  %3778 = vdwg.mxu0
  %v3779 = vadd.f32 %v3645, %v3774
  %v3780 = vadd.s32 %v3506, 8
  %vm3781 = vcmp.eq.s32.totalorder %v3503, %v3780
  %vm3782 = vcmp.eq.s32.totalorder %v3504, %v3780
  %v3783 = vsel %vm3781, 1, 0
  %v3784 = vsel %vm3782, 1, 0
  %v3785 = vcvt.s32.f32 %v3783
  %v3786 = vcvt.s32.f32 %v3784
  %v3787 = vpack.c.bf16 %v3785, %v3785
  %v3788 = vpack.c.bf16 %v3786, %v3786
  %3789 = vmatprep.subr.bf16.mxu0 0
  %3790 = vmatpush1.bf16.msra.mxu0 %v3484
  %3791 = vmatprep.subr.bf16.mxu0 0
  %3792 = vmatpush1.bf16.msra.mxu0 %v3485
  %3793 = vmatprep.subr.bf16.mxu0 0
  %3794 = vmatpush1.bf16.msra.mxu0 %v3486
  %3795 = vmatprep.subr.bf16.mxu0 0
  %3796 = vmatpush1.bf16.msra.mxu0 %v3487
  %3797 = vmatprep.subr.bf16.mxu0 0
  %3798 = vmatpush1.bf16.msra.mxu0 %v3488
  %3799 = vmatprep.subr.bf16.mxu0 0
  %3800 = vmatpush1.bf16.msra.mxu0 %v3489
  %3801 = vmatprep.subr.bf16.mxu0 0
  %3802 = vmatpush1.bf16.msra.mxu0 %v3490
  %3803 = vmatprep.subr.bf16.mxu0 0
  %3804 = vmatpush1.bf16.msra.mxu0 %v3491
  %3805 = vmatprep.subr.bf16.mxu0 0
  %3806 = vmatpush1.bf16.msra.mxu0 %v3492
  %3807 = vmatprep.subr.bf16.mxu0 0
  %3808 = vmatpush1.bf16.msra.mxu0 %v3493
  %3809 = vmatprep.subr.bf16.mxu0 0
  %3810 = vmatpush1.bf16.msra.mxu0 %v3494
  %3811 = vmatprep.subr.bf16.mxu0 0
  %3812 = vmatpush1.bf16.msra.mxu0 %v3495
  %3813 = vmatprep.subr.bf16.mxu0 0
  %3814 = vmatpush1.bf16.msra.mxu0 %v3496
  %3815 = vmatprep.subr.bf16.mxu0 0
  %3816 = vmatpush1.bf16.msra.mxu0 %v3497
  %3817 = vmatprep.subr.bf16.mxu0 0
  %3818 = vmatpush1.bf16.msra.mxu0 %v3498
  %3819 = vmatprep.subr.bf16.mxu0 0
  %3820 = vmatpush1.bf16.msra.mxu0 %v3499
  %3821 = vmatprep.mubr.bf16.mxu0 %v3788
  %3822 = vmatmul.mubr.bf16.gmra.mrb[0].mxu0 %v3787
  %v3823 = vpop.f32.mrb[0].mxu0
  %v3824 = vadd.f32 0.0, %v3823
  %v3825 = vpop.f32.mrb[0].mxu0
  %v3826 = vpop.f32.mrb[0].mxu0
  %v3827 = vpop.f32.mrb[0].mxu0
  %3828 = vdwg.mxu0
  %v3829 = vpack.c.bf16 %v3824, %v3824
  %v3830 = vld [vmem:[%s5 + $0x50] sm:$0xf]
  %v3831 = vld [vmem:[%s5 + $0x54] sm:$0xf]
  %v3832 = vld [vmem:[%s5 + $0x58] sm:$0xf]
  %v3833 = vld [vmem:[%s5 + $0x5c] sm:$0xf]
  %v3834 = vld [vmem:[%s5 + $0x60] sm:$0xf]
  %v3835 = vld [vmem:[%s5 + $0x64] sm:$0xf]
  %v3836 = vld [vmem:[%s5 + $0x68] sm:$0xf]
  %v3837 = vld [vmem:[%s5 + $0x6c] sm:$0xf]
  %v3838 = vld [vmem:[%s5 + $0x70] sm:$0xf]
  %v3839 = vld [vmem:[%s5 + $0x74] sm:$0xf]
  %v3850 = vunpack.c.l.b16 %v3830
  %v3851 = vunpack.c.l.b16 %v3831
  %v3852 = vunpack.c.l.b16 %v3832
  %v3853 = vunpack.c.l.b16 %v3833
  %v3854 = vunpack.c.l.b16 %v3834
  %v3855 = vunpack.c.l.b16 %v3835
  %v3856 = vunpack.c.l.b16 %v3836
  %v3857 = vunpack.c.l.b16 %v3837
  %v3858 = vunpack.c.l.b16 %v3838
  %v3859 = vunpack.c.l.b16 %v3839
  %v3860 = vpack.c.b16 %v3851, %v3850
  %v3861 = vpack.c.b16 %v3853, %v3852
  %v3862 = vpack.c.b16 %v3855, %v3854
  %v3863 = vpack.c.b16 %v3857, %v3856
  %v3864 = vpack.c.b16 %v3859, %v3858
  %v3871 = vsel %vm2169, %v3829, 0
  %3873 = vmatprep.subr.bf16.mxu0 0
  %3874 = vmatpush1.bf16.msra.mxu0 %v3860
  %3875 = vmatprep.subr.bf16.mxu0 0
  %3876 = vmatpush1.bf16.msra.mxu0 %v3861
  %3877 = vmatprep.subr.bf16.mxu0 0
  %3878 = vmatpush1.bf16.msra.mxu0 %v3862
  %3879 = vmatprep.subr.bf16.mxu0 0
  %3880 = vmatpush1.bf16.msra.mxu0 %v3863
  %3881 = vmatprep.subr.bf16.mxu0 0
  %3882 = vmatpush1.bf16.msra.mxu0 %v3864
  %3883 = vmatprep.subr.bf16.mxu0 0
  %3884 = vmatpush1.bf16.msra.mxu0 0
  %3885 = vmatprep.subr.bf16.mxu0 0
  %3886 = vmatpush1.bf16.msra.mxu0 0
  %3887 = vmatprep.subr.bf16.mxu0 0
  %3888 = vmatpush1.bf16.msra.mxu0 0
  %3889 = vmatprep.subr.bf16.mxu0 0
  %3890 = vmatpush1.bf16.msra.mxu0 0
  %3891 = vmatprep.subr.bf16.mxu0 0
  %3892 = vmatpush1.bf16.msra.mxu0 0
  %3893 = vmatprep.subr.bf16.mxu0 0
  %3894 = vmatpush1.bf16.msra.mxu0 0
  %3895 = vmatprep.subr.bf16.mxu0 0
  %3896 = vmatpush1.bf16.msra.mxu0 0
  %3897 = vmatprep.subr.bf16.mxu0 0
  %3898 = vmatpush1.bf16.msra.mxu0 0
  %3899 = vmatprep.subr.bf16.mxu0 0
  %3900 = vmatpush1.bf16.msra.mxu0 0
  %3901 = vmatprep.subr.bf16.mxu0 0
  %3902 = vmatpush1.bf16.msra.mxu0 0
  %3903 = vmatprep.subr.bf16.mxu0 0
  %3904 = vmatpush1.bf16.msra.mxu0 0
  %3905 = vmatprep.mubr.bf16.mxu0 0
  %3906 = vmatmul.mubr.bf16.gmra.mrb[0].mxu0 %v3871
  %v3907 = vpop.f32.mrb[0].mxu0
  %v3908 = vadd.f32 0.0, %v3907
  %v3909 = vpop.f32.mrb[0].mxu0
  %v3910 = vpop.f32.mrb[0].mxu0
  %v3911 = vpop.f32.mrb[0].mxu0
  %3912 = vdwg.mxu0
  %v3913 = vadd.f32 %v3779, %v3908
  %v3914 = vadd.s32 %v3506, 12
  %vm3915 = vcmp.eq.s32.totalorder %v3503, %v3914
  %vm3916 = vcmp.eq.s32.totalorder %v3504, %v3914
  %v3917 = vsel %vm3915, 1, 0
  %v3918 = vsel %vm3916, 1, 0
  %v3919 = vcvt.s32.f32 %v3917
  %v3920 = vcvt.s32.f32 %v3918
  %v3921 = vpack.c.bf16 %v3919, %v3919
  %v3922 = vpack.c.bf16 %v3920, %v3920
  %3923 = vmatprep.subr.bf16.mxu0 0
  %3924 = vmatpush1.bf16.msra.mxu0 %v3484
  %3925 = vmatprep.subr.bf16.mxu0 0
  %3926 = vmatpush1.bf16.msra.mxu0 %v3485
  %3927 = vmatprep.subr.bf16.mxu0 0
  %3928 = vmatpush1.bf16.msra.mxu0 %v3486
  %3929 = vmatprep.subr.bf16.mxu0 0
  %3930 = vmatpush1.bf16.msra.mxu0 %v3487
  %3931 = vmatprep.subr.bf16.mxu0 0
  %3932 = vmatpush1.bf16.msra.mxu0 %v3488
  %3933 = vmatprep.subr.bf16.mxu0 0
  %3934 = vmatpush1.bf16.msra.mxu0 %v3489
  %3935 = vmatprep.subr.bf16.mxu0 0
  %3936 = vmatpush1.bf16.msra.mxu0 %v3490
  %3937 = vmatprep.subr.bf16.mxu0 0
  %3938 = vmatpush1.bf16.msra.mxu0 %v3491
  %3939 = vmatprep.subr.bf16.mxu0 0
  %3940 = vmatpush1.bf16.msra.mxu0 %v3492
  %3941 = vmatprep.subr.bf16.mxu0 0
  %3942 = vmatpush1.bf16.msra.mxu0 %v3493
  %3943 = vmatprep.subr.bf16.mxu0 0
  %3944 = vmatpush1.bf16.msra.mxu0 %v3494
  %3945 = vmatprep.subr.bf16.mxu0 0
  %3946 = vmatpush1.bf16.msra.mxu0 %v3495
  %3947 = vmatprep.subr.bf16.mxu0 0
  %3948 = vmatpush1.bf16.msra.mxu0 %v3496
  %3949 = vmatprep.subr.bf16.mxu0 0
  %3950 = vmatpush1.bf16.msra.mxu0 %v3497
  %3951 = vmatprep.subr.bf16.mxu0 0
  %3952 = vmatpush1.bf16.msra.mxu0 %v3498
  %3953 = vmatprep.subr.bf16.mxu0 0
  %3954 = vmatpush1.bf16.msra.mxu0 %v3499
  %3955 = vmatprep.mubr.bf16.mxu0 %v3922
  %3956 = vmatmul.mubr.bf16.gmra.mrb[0].mxu0 %v3921
  %v3957 = vpop.f32.mrb[0].mxu0
  %v3958 = vadd.f32 0.0, %v3957
  %v3959 = vpop.f32.mrb[0].mxu0
  %v3960 = vpop.f32.mrb[0].mxu0
  %v3961 = vpop.f32.mrb[0].mxu0
  %3962 = vdwg.mxu0
  %v3963 = vpack.c.bf16 %v3958, %v3958
  %v3964 = vld [vmem:[%s5 + $0x78] sm:$0xf]
  %v3965 = vld [vmem:[%s5 + $0x7c] sm:$0xf]
  %v3966 = vld [vmem:[%s5 + $0x80] sm:$0xf]
  %v3967 = vld [vmem:[%s5 + $0x84] sm:$0xf]
  %v3968 = vld [vmem:[%s5 + $0x88] sm:$0xf]
  %v3969 = vld [vmem:[%s5 + $0x8c] sm:$0xf]
  %v3970 = vld [vmem:[%s5 + $0x90] sm:$0xf]
  %v3971 = vld [vmem:[%s5 + $0x94] sm:$0xf]
  %v3972 = vld [vmem:[%s5 + $0x98] sm:$0xf]
  %v3973 = vld [vmem:[%s5 + $0x9c] sm:$0xf]
  %v3984 = vunpack.c.l.b16 %v3964
  %v3985 = vunpack.c.l.b16 %v3965
  %v3986 = vunpack.c.l.b16 %v3966
  %v3987 = vunpack.c.l.b16 %v3967
  %v3988 = vunpack.c.l.b16 %v3968
  %v3989 = vunpack.c.l.b16 %v3969
  %v3990 = vunpack.c.l.b16 %v3970
  %v3991 = vunpack.c.l.b16 %v3971
  %v3992 = vunpack.c.l.b16 %v3972
  %v3993 = vunpack.c.l.b16 %v3973
  %v3994 = vpack.c.b16 %v3985, %v3984
  %v3995 = vpack.c.b16 %v3987, %v3986
  %v3996 = vpack.c.b16 %v3989, %v3988
  %v3997 = vpack.c.b16 %v3991, %v3990
  %v3998 = vpack.c.b16 %v3993, %v3992
  %v4005 = vsel %vm2169, %v3963, 0
  %4007 = vmatprep.subr.bf16.mxu0 0
  %4008 = vmatpush1.bf16.msra.mxu0 %v3994
  %4009 = vmatprep.subr.bf16.mxu0 0
  %4010 = vmatpush1.bf16.msra.mxu0 %v3995
  %4011 = vmatprep.subr.bf16.mxu0 0
  %4012 = vmatpush1.bf16.msra.mxu0 %v3996
  %4013 = vmatprep.subr.bf16.mxu0 0
  %4014 = vmatpush1.bf16.msra.mxu0 %v3997
  %4015 = vmatprep.subr.bf16.mxu0 0
  %4016 = vmatpush1.bf16.msra.mxu0 %v3998
  %4017 = vmatprep.subr.bf16.mxu0 0
  %4018 = vmatpush1.bf16.msra.mxu0 0
  %4019 = vmatprep.subr.bf16.mxu0 0
  %4020 = vmatpush1.bf16.msra.mxu0 0
  %4021 = vmatprep.subr.bf16.mxu0 0
  %4022 = vmatpush1.bf16.msra.mxu0 0
  %4023 = vmatprep.subr.bf16.mxu0 0
  %4024 = vmatpush1.bf16.msra.mxu0 0
  %4025 = vmatprep.subr.bf16.mxu0 0
  %4026 = vmatpush1.bf16.msra.mxu0 0
  %4027 = vmatprep.subr.bf16.mxu0 0
  %4028 = vmatpush1.bf16.msra.mxu0 0
  %4029 = vmatprep.subr.bf16.mxu0 0
  %4030 = vmatpush1.bf16.msra.mxu0 0
  %4031 = vmatprep.subr.bf16.mxu0 0
  %4032 = vmatpush1.bf16.msra.mxu0 0
  %4033 = vmatprep.subr.bf16.mxu0 0
  %4034 = vmatpush1.bf16.msra.mxu0 0
  %4035 = vmatprep.subr.bf16.mxu0 0
  %4036 = vmatpush1.bf16.msra.mxu0 0
  %4037 = vmatprep.subr.bf16.mxu0 0
  %4038 = vmatpush1.bf16.msra.mxu0 0
  %4039 = vmatprep.mubr.bf16.mxu0 0
  %4040 = vmatmul.mubr.bf16.gmra.mrb[0].mxu0 %v4005
  %v4041 = vpop.f32.mrb[0].mxu0
  %v4042 = vadd.f32 0.0, %v4041
  %v4043 = vpop.f32.mrb[0].mxu0
  %v4044 = vpop.f32.mrb[0].mxu0
  %v4045 = vpop.f32.mrb[0].mxu0
  %4046 = vdwg.mxu0
  %v4047 = vadd.f32 %v3913, %v4042
  %v4048 = vadd.s32 %v3506, 16
  %vm4049 = vcmp.eq.s32.totalorder %v3503, %v4048
  %vm4050 = vcmp.eq.s32.totalorder %v3504, %v4048
  %v4051 = vsel %vm4049, 1, 0
  %v4052 = vsel %vm4050, 1, 0
  %v4053 = vcvt.s32.f32 %v4051
  %v4054 = vcvt.s32.f32 %v4052
  %v4055 = vpack.c.bf16 %v4053, %v4053
  %v4056 = vpack.c.bf16 %v4054, %v4054
  %4057 = vmatprep.subr.bf16.mxu0 0
  %4058 = vmatpush1.bf16.msra.mxu0 %v3484
  %4059 = vmatprep.subr.bf16.mxu0 0
  %4060 = vmatpush1.bf16.msra.mxu0 %v3485
  %4061 = vmatprep.subr.bf16.mxu0 0
  %4062 = vmatpush1.bf16.msra.mxu0 %v3486
  %4063 = vmatprep.subr.bf16.mxu0 0
  %4064 = vmatpush1.bf16.msra.mxu0 %v3487
  %4065 = vmatprep.subr.bf16.mxu0 0
  %4066 = vmatpush1.bf16.msra.mxu0 %v3488
  %4067 = vmatprep.subr.bf16.mxu0 0
  %4068 = vmatpush1.bf16.msra.mxu0 %v3489
  %4069 = vmatprep.subr.bf16.mxu0 0
  %4070 = vmatpush1.bf16.msra.mxu0 %v3490
  %4071 = vmatprep.subr.bf16.mxu0 0
  %4072 = vmatpush1.bf16.msra.mxu0 %v3491
  %4073 = vmatprep.subr.bf16.mxu0 0
  %4074 = vmatpush1.bf16.msra.mxu0 %v3492
  %4075 = vmatprep.subr.bf16.mxu0 0
  %4076 = vmatpush1.bf16.msra.mxu0 %v3493
  %4077 = vmatprep.subr.bf16.mxu0 0
  %4078 = vmatpush1.bf16.msra.mxu0 %v3494
  %4079 = vmatprep.subr.bf16.mxu0 0
  %4080 = vmatpush1.bf16.msra.mxu0 %v3495
  %4081 = vmatprep.subr.bf16.mxu0 0
  %4082 = vmatpush1.bf16.msra.mxu0 %v3496
  %4083 = vmatprep.subr.bf16.mxu0 0
  %4084 = vmatpush1.bf16.msra.mxu0 %v3497
  %4085 = vmatprep.subr.bf16.mxu0 0
  %4086 = vmatpush1.bf16.msra.mxu0 %v3498
  %4087 = vmatprep.subr.bf16.mxu0 0
  %4088 = vmatpush1.bf16.msra.mxu0 %v3499
  %4089 = vmatprep.mubr.bf16.mxu0 %v4056
  %4090 = vmatmul.mubr.bf16.gmra.mrb[0].mxu0 %v4055
  %v4091 = vpop.f32.mrb[0].mxu0
  %v4092 = vadd.f32 0.0, %v4091
  %v4093 = vpop.f32.mrb[0].mxu0
  %v4094 = vpop.f32.mrb[0].mxu0
  %v4095 = vpop.f32.mrb[0].mxu0
  %4096 = vdwg.mxu0
  %v4097 = vpack.c.bf16 %v4092, %v4092
  %v4098 = vld [vmem:[%s5 + $0xa0] sm:$0xf]
  %v4099 = vld [vmem:[%s5 + $0xa4] sm:$0xf]
  %v4100 = vld [vmem:[%s5 + $0xa8] sm:$0xf]
  %v4101 = vld [vmem:[%s5 + $0xac] sm:$0xf]
  %v4102 = vld [vmem:[%s5 + $0xb0] sm:$0xf]
  %v4103 = vld [vmem:[%s5 + $0xb4] sm:$0xf]
  %v4104 = vld [vmem:[%s5 + $0xb8] sm:$0xf]
  %v4105 = vld [vmem:[%s5 + $0xbc] sm:$0xf]
  %v4106 = vld [vmem:[%s5 + $0xc0] sm:$0xf]
  %v4107 = vld [vmem:[%s5 + $0xc4] sm:$0xf]
  %v4118 = vunpack.c.l.b16 %v4098
  %v4119 = vunpack.c.l.b16 %v4099
  %v4120 = vunpack.c.l.b16 %v4100
  %v4121 = vunpack.c.l.b16 %v4101
  %v4122 = vunpack.c.l.b16 %v4102
  %v4123 = vunpack.c.l.b16 %v4103
  %v4124 = vunpack.c.l.b16 %v4104
  %v4125 = vunpack.c.l.b16 %v4105
  %v4126 = vunpack.c.l.b16 %v4106
  %v4127 = vunpack.c.l.b16 %v4107
  %v4128 = vpack.c.b16 %v4119, %v4118
  %v4129 = vpack.c.b16 %v4121, %v4120
  %v4130 = vpack.c.b16 %v4123, %v4122
  %v4131 = vpack.c.b16 %v4125, %v4124
  %v4132 = vpack.c.b16 %v4127, %v4126
  %v4139 = vsel %vm2169, %v4097, 0
  %4141 = vmatprep.subr.bf16.mxu0 0
  %4142 = vmatpush1.bf16.msra.mxu0 %v4128
  %4143 = vmatprep.subr.bf16.mxu0 0
  %4144 = vmatpush1.bf16.msra.mxu0 %v4129
  %4145 = vmatprep.subr.bf16.mxu0 0
  %4146 = vmatpush1.bf16.msra.mxu0 %v4130
  %4147 = vmatprep.subr.bf16.mxu0 0
  %4148 = vmatpush1.bf16.msra.mxu0 %v4131
  %4149 = vmatprep.subr.bf16.mxu0 0
  %4150 = vmatpush1.bf16.msra.mxu0 %v4132
  %4151 = vmatprep.subr.bf16.mxu0 0
  %4152 = vmatpush1.bf16.msra.mxu0 0
  %4153 = vmatprep.subr.bf16.mxu0 0
  %4154 = vmatpush1.bf16.msra.mxu0 0
  %4155 = vmatprep.subr.bf16.mxu0 0
  %4156 = vmatpush1.bf16.msra.mxu0 0
  %4157 = vmatprep.subr.bf16.mxu0 0
  %4158 = vmatpush1.bf16.msra.mxu0 0
  %4159 = vmatprep.subr.bf16.mxu0 0
  %4160 = vmatpush1.bf16.msra.mxu0 0
  %4161 = vmatprep.subr.bf16.mxu0 0
  %4162 = vmatpush1.bf16.msra.mxu0 0
  %4163 = vmatprep.subr.bf16.mxu0 0
  %4164 = vmatpush1.bf16.msra.mxu0 0
  %4165 = vmatprep.subr.bf16.mxu0 0
  %4166 = vmatpush1.bf16.msra.mxu0 0
  %4167 = vmatprep.subr.bf16.mxu0 0
  %4168 = vmatpush1.bf16.msra.mxu0 0
  %4169 = vmatprep.subr.bf16.mxu0 0
  %4170 = vmatpush1.bf16.msra.mxu0 0
  %4171 = vmatprep.subr.bf16.mxu0 0
  %4172 = vmatpush1.bf16.msra.mxu0 0
  %4173 = vmatprep.mubr.bf16.mxu0 0
  %4174 = vmatmul.mubr.bf16.gmra.mrb[0].mxu0 %v4139
  %v4175 = vpop.f32.mrb[0].mxu0
  %v4176 = vadd.f32 0.0, %v4175
  %v4177 = vpop.f32.mrb[0].mxu0
  %v4178 = vpop.f32.mrb[0].mxu0
  %v4179 = vpop.f32.mrb[0].mxu0
  %4180 = vdwg.mxu0
  %v4181 = vadd.f32 %v4047, %v4176
  %v4182 = vmax.f32 %v4181, 0.0
  %v4183 = vpack.c.bf16 %v4182, %v4182
  %v4184 = vld [vmem:[%s7] sm:$0xf]
  %v4185 = vld [vmem:[%s7 + $0x4] sm:$0xf]
  %v4186 = vld [vmem:[%s7 + $0x8] sm:$0xf]
  %v4187 = vld [vmem:[%s7 + $0xc] sm:$0xf]
  %v4188 = vld [vmem:[%s7 + $0x10] sm:$0xf]
  %v4189 = vld [vmem:[%s7 + $0x14] sm:$0xf]
  %v4190 = vld [vmem:[%s7 + $0x18] sm:$0xf]
  %v4191 = vld [vmem:[%s7 + $0x1c] sm:$0xf]
  %v4192 = vld [vmem:[%s7 + $0x20] sm:$0xf]
  %v4193 = vld [vmem:[%s7 + $0x24] sm:$0xf]
  %v4194 = vld [vmem:[%s7 + $0x28] sm:$0xf]
  %v4195 = vld [vmem:[%s7 + $0x2c] sm:$0xf]
  %v4196 = vld [vmem:[%s7 + $0x30] sm:$0xf]
  %v4197 = vld [vmem:[%s7 + $0x34] sm:$0xf]
  %v4198 = vld [vmem:[%s7 + $0x38] sm:$0xf]
  %v4199 = vld [vmem:[%s8] sm:$0x1]
  %v4201 = vlaneseq
  %v4202 = vshrl.u32 %v4201, 7
  %v4203 = vsub.s32 0, %v4202
  %v4204 = vrot.slane %v4199, %v4203
  %v4221 = vunpack.c.l.b16 %v4184
  %v4222 = vunpack.c.l.b16 %v4185
  %v4223 = vunpack.c.l.b16 %v4186
  %v4224 = vunpack.c.l.b16 %v4187
  %v4225 = vunpack.c.l.b16 %v4188
  %v4226 = vunpack.c.l.b16 %v4189
  %v4227 = vunpack.c.l.b16 %v4190
  %v4228 = vunpack.c.l.b16 %v4191
  %v4229 = vunpack.c.l.b16 %v4192
  %v4230 = vunpack.c.l.b16 %v4193
  %v4231 = vunpack.c.l.b16 %v4194
  %v4232 = vunpack.c.l.b16 %v4195
  %v4233 = vunpack.c.l.b16 %v4196
  %v4234 = vunpack.c.l.b16 %v4197
  %v4235 = vunpack.c.l.b16 %v4198
  %v4236 = vpack.c.b16 %v4222, %v4221
  %v4237 = vpack.c.b16 %v4224, %v4223
  %v4238 = vpack.c.b16 %v4226, %v4225
  %v4239 = vpack.c.b16 %v4228, %v4227
  %v4240 = vpack.c.b16 %v4230, %v4229
  %v4241 = vpack.c.b16 %v4232, %v4231
  %v4242 = vpack.c.b16 %v4234, %v4233
  %v4243 = vpack.c.b16 %v4235, %v4235
  %vm4251 = vcmask 982016
  %v4253 = vsel %vm4251, %v4183, 0
  %vm4255 = vcmask 1043456
  %v4257 = vsel %vm4255, %v4243, 0
  %4259 = vmatprep.subr.bf16.mxu0 0
  %4260 = vmatpush1.bf16.msra.mxu0 %v4236
  %4261 = vmatprep.subr.bf16.mxu0 0
  %4262 = vmatpush1.bf16.msra.mxu0 %v4237
  %4263 = vmatprep.subr.bf16.mxu0 0
  %4264 = vmatpush1.bf16.msra.mxu0 %v4238
  %4265 = vmatprep.subr.bf16.mxu0 0
  %4266 = vmatpush1.bf16.msra.mxu0 %v4239
  %4267 = vmatprep.subr.bf16.mxu0 0
  %4268 = vmatpush1.bf16.msra.mxu0 %v4240
  %4269 = vmatprep.subr.bf16.mxu0 0
  %4270 = vmatpush1.bf16.msra.mxu0 %v4241
  %4271 = vmatprep.subr.bf16.mxu0 0
  %4272 = vmatpush1.bf16.msra.mxu0 %v4242
  %4273 = vmatprep.subr.bf16.mxu0 0
  %4274 = vmatpush1.bf16.msra.mxu0 %v4257
  %4275 = vmatprep.subr.bf16.mxu0 0
  %4276 = vmatpush1.bf16.msra.mxu0 0
  %4277 = vmatprep.subr.bf16.mxu0 0
  %4278 = vmatpush1.bf16.msra.mxu0 0
  %4279 = vmatprep.subr.bf16.mxu0 0
  %4280 = vmatpush1.bf16.msra.mxu0 0
  %4281 = vmatprep.subr.bf16.mxu0 0
  %4282 = vmatpush1.bf16.msra.mxu0 0
  %4283 = vmatprep.subr.bf16.mxu0 0
  %4284 = vmatpush1.bf16.msra.mxu0 0
  %4285 = vmatprep.subr.bf16.mxu0 0
  %4286 = vmatpush1.bf16.msra.mxu0 0
  %4287 = vmatprep.subr.bf16.mxu0 0
  %4288 = vmatpush1.bf16.msra.mxu0 0
  %4289 = vmatprep.subr.bf16.mxu0 0
  %4290 = vmatpush1.bf16.msra.mxu0 0
  %4291 = vmatprep.mubr.bf16.mxu0 0
  %4292 = vmatmul.mubr.bf16.gmra.mrb[0].mxu0 %v4253
  %v4293 = vpop.f32.mrb[0].mxu0
  %v4294 = vadd.f32 %v4204, %v4293
  %v4295 = vpop.f32.mrb[0].mxu0
  %v4296 = vpop.f32.mrb[0].mxu0
  %v4297 = vpop.f32.mrb[0].mxu0
  %4298 = vdwg.mxu0
  %v4299 = vmax.f32 %v4294, 0.0
  %v4300 = vpack.c.bf16 %v4299, %v4299
  %v4301 = vld [vmem:[%s9] sm:$0xf]
  %v4302 = vld [vmem:[%s9 + $0x4] sm:$0xf]
  %v4303 = vld [vmem:[%s9 + $0x8] sm:$0xf]
  %v4304 = vld [vmem:[%s9 + $0xc] sm:$0xf]
  %v4305 = vld [vmem:[%s9 + $0x10] sm:$0xf]
  %v4306 = vld [vmem:[%s9 + $0x14] sm:$0xf]
  %v4307 = vld [vmem:[%s9 + $0x18] sm:$0xf]
  %v4308 = vld [vmem:[%s9 + $0x1c] sm:$0xf]
  %v4309 = vld [vmem:[%s9 + $0x20] sm:$0xf]
  %v4310 = vld [vmem:[%s9 + $0x24] sm:$0xf]
  %v4311 = vld [vmem:[%s9 + $0x28] sm:$0x3]
  %v4312 = vld [vmem:[%s10] sm:$0x1]
  %v4314 = vlaneseq
  %v4315 = vshrl.u32 %v4314, 7
  %v4316 = vsub.s32 0, %v4315
  %v4317 = vrot.slane %v4312, %v4316
  %v4330 = vunpack.c.l.b16 %v4301
  %v4331 = vunpack.c.l.b16 %v4302
  %v4332 = vunpack.c.l.b16 %v4303
  %v4333 = vunpack.c.l.b16 %v4304
  %v4334 = vunpack.c.l.b16 %v4305
  %v4335 = vunpack.c.l.b16 %v4306
  %v4336 = vunpack.c.l.b16 %v4307
  %v4337 = vunpack.c.l.b16 %v4308
  %v4338 = vunpack.c.l.b16 %v4309
  %v4339 = vunpack.c.l.b16 %v4310
  %v4340 = vunpack.c.l.b16 %v4311
  %v4341 = vpack.c.b16 %v4331, %v4330
  %v4342 = vpack.c.b16 %v4333, %v4332
  %v4343 = vpack.c.b16 %v4335, %v4334
  %v4344 = vpack.c.b16 %v4337, %v4336
  %v4345 = vpack.c.b16 %v4339, %v4338
  %v4346 = vpack.c.b16 %v4340, %v4340
  %v4353 = vsel %vm2022, %v4300, 0
  %v4356 = vsel %vm2569, %v4346, 0
  %4358 = vmatprep.subr.bf16.mxu0 0
  %4359 = vmatpush1.bf16.msra.mxu0 %v4341
  %4360 = vmatprep.subr.bf16.mxu0 0
  %4361 = vmatpush1.bf16.msra.mxu0 %v4342
  %4362 = vmatprep.subr.bf16.mxu0 0
  %4363 = vmatpush1.bf16.msra.mxu0 %v4343
  %4364 = vmatprep.subr.bf16.mxu0 0
  %4365 = vmatpush1.bf16.msra.mxu0 %v4344
  %4366 = vmatprep.subr.bf16.mxu0 0
  %4367 = vmatpush1.bf16.msra.mxu0 %v4345
  %4368 = vmatprep.subr.bf16.mxu0 0
  %4369 = vmatpush1.bf16.msra.mxu0 %v4356
  %4370 = vmatprep.subr.bf16.mxu0 0
  %4371 = vmatpush1.bf16.msra.mxu0 0
  %4372 = vmatprep.subr.bf16.mxu0 0
  %4373 = vmatpush1.bf16.msra.mxu0 0
  %4374 = vmatprep.subr.bf16.mxu0 0
  %4375 = vmatpush1.bf16.msra.mxu0 0
  %4376 = vmatprep.subr.bf16.mxu0 0
  %4377 = vmatpush1.bf16.msra.mxu0 0
  %4378 = vmatprep.subr.bf16.mxu0 0
  %4379 = vmatpush1.bf16.msra.mxu0 0
  %4380 = vmatprep.subr.bf16.mxu0 0
  %4381 = vmatpush1.bf16.msra.mxu0 0
  %4382 = vmatprep.subr.bf16.mxu0 0
  %4383 = vmatpush1.bf16.msra.mxu0 0
  %4384 = vmatprep.subr.bf16.mxu0 0
  %4385 = vmatpush1.bf16.msra.mxu0 0
  %4386 = vmatprep.subr.bf16.mxu0 0
  %4387 = vmatpush1.bf16.msra.mxu0 0
  %4388 = vmatprep.subr.bf16.mxu0 0
  %4389 = vmatpush1.bf16.msra.mxu0 0
  %4390 = vmatprep.mubr.bf16.mxu0 0
  %4391 = vmatmul.mubr.bf16.gmra.mrb[0].mxu0 %v4353
  %v4392 = vpop.f32.mrb[0].mxu0
  %v4393 = vadd.f32 %v4317, %v4392
  %v4394 = vpop.f32.mrb[0].mxu0
  %v4395 = vpop.f32.mrb[0].mxu0
  %v4396 = vpop.f32.mrb[0].mxu0
  %4397 = vdwg.mxu0
  %4398 = vst [vmem:[%s11] sm:$0xff] %v4393
  // Predicated region
  $region46: #{_forward_impl.1} parent=0 // pred_check
    _
  $region47: #{_forward_impl.1} parent=0 // pred_check_branch
    %4400 = sbr.rel (0) target = $region49
  $region48: #{_forward_impl.1} parent=0 // pred_region
    _
  $region49: #{_forward_impl.1} parent=0 // pred_fallthru
    _
  // Predicated region
  $region50: #{_forward_impl.1} parent=0 // pred_check
    _
  $region51: #{_forward_impl.1} parent=0 // pred_check_branch
    %4402 = sbr.rel (0) target = $region53
  $region52: #{_forward_impl.1} parent=0 // pred_region
    _
  $region53: #{_forward_impl.1} parent=0 // pred_fallthru
    _

</llo_original>
